<compile_context>
chip_gen: v5e
topology: v5e:2x2
jax: 0.10.0
libtpu: 0.0.40
codegen_flags: <defaults>
</compile_context>

<pallas_src>
import functools

import numpy as np

import jax
import jax.numpy as jnp
from jax import lax
from jax.experimental import pallas as pl
from jax.experimental.pallas import tpu as pltpu

_LANES = 128
_SUB = 8
_OUT_ROWS = 8            # (8,128) lane-aligned per-core output block
_MAX_BLOCK_ROWS = 2048   # 1 MiB per f32 (rows,128) tile; ~85% of HBM roofline
_UNROLL_TILES = 8        # python-unroll chunks with <= this many full tiles
_BIG_LOGIT = 30000.0     # softplus(-x) == 0 exactly in f32; also fits f16/bf16


def _round_up(a, b):
    return (a + b - 1) // b * b


def _row_granularity(dtype):
    # sublane packing granularity: f32 -> 8 rows, bf16/f16 -> 16, int8/bool -> 32
    return max(_SUB, 32 // jnp.dtype(dtype).itemsize)


def _prep(a, rows, pad_value):
    """Flatten `a`, pad (with pad_value) to rows*128 elements, view as (rows,128)."""
    n = int(np.prod(a.shape))
    total = rows * _LANES
    flat = a.reshape(-1)
    if total != n:
        flat = jnp.pad(flat, (0, total - n), constant_values=pad_value)
    return flat.reshape(rows, _LANES)


def _make_kernel(chunks_per_core, n_tensors):
    """chunks_per_core: per core, tuple of (tensor_idx, row_start, chunk_rows, tile_rows)."""
    nc = len(chunks_per_core)

    def kernel(*refs):
        x_refs = refs[:n_tensors]
        t_refs = refs[n_tensors:2 * n_tensors]
        out_ref = refs[2 * n_tensors]
        xbuf = refs[2 * n_tensors + 1]
        tbuf = refs[2 * n_tensors + 2]
        sems = refs[2 * n_tensors + 3]

        def start_copy(x_hbm, t_hbm, slot, roff, nrows):
            pltpu.make_async_copy(x_hbm.at[pl.ds(roff, nrows), :],
                                  xbuf.at[slot, pl.ds(0, nrows), :],
                                  sems.at[0, slot]).start()
            pltpu.make_async_copy(t_hbm.at[pl.ds(roff, nrows), :],
                                  tbuf.at[slot, pl.ds(0, nrows), :],
                                  sems.at[1, slot]).start()

        def wait_copy(x_hbm, t_hbm, slot, nrows):
            # Only shapes/sem matter for the wait; src offset 0 keeps it static.
            pltpu.make_async_copy(x_hbm.at[pl.ds(0, nrows), :],
                                  xbuf.at[slot, pl.ds(0, nrows), :],
                                  sems.at[0, slot]).wait()
            pltpu.make_async_copy(t_hbm.at[pl.ds(0, nrows), :],
                                  tbuf.at[slot, pl.ds(0, nrows), :],
                                  sems.at[1, slot]).wait()

        def tile_sums(slot, nrows):
            x = xbuf[slot, pl.ds(0, nrows), :].astype(jnp.float32)
            t = tbuf[slot, pl.ds(0, nrows), :].astype(jnp.float32)
            # softplus(-x) = log(1 + exp(-|x|)) + max(-x, 0): 1 exp + 1 log / elem.
            # (log(1+v) with v in [0,1]; log1p would only change the result by
            #  <1e-7 abs per element.)
            sp = jnp.log(1.0 + jnp.exp(-jnp.abs(x))) + jnp.maximum(-x, 0.0)
            s_t = jnp.sum(t)
            s_a = jnp.sum((1.0 - t) * x + sp)
            s_b = jnp.sum(t * sp)
            return s_t, s_a, s_b

        def process_chunk(x_hbm, t_hbm, row_start, chunk_rows, tr):
            num_full = chunk_rows // tr
            rem = chunk_rows - num_full * tr
            zero = jnp.zeros((), jnp.float32)
            acc = (zero, zero, zero)

            start_copy(x_hbm, t_hbm, 0, row_start, tr)

            if num_full <= _UNROLL_TILES:
                for j in range(num_full):
                    slot = j % 2
                    if j + 1 < num_full:
                        start_copy(x_hbm, t_hbm, 1 - slot,
                                   row_start + (j + 1) * tr, tr)
                    elif rem:
                        start_copy(x_hbm, t_hbm, 1 - slot,
                                   row_start + num_full * tr, rem)
                    wait_copy(x_hbm, t_hbm, slot, tr)
                    d = tile_sums(slot, tr)
                    acc = tuple(a + b for a, b in zip(acc, d))
            else:
                def body(j, carry):
                    slot = j & 1
                    nxt = 1 - slot

                    @pl.when(j + 1 < num_full)
                    def _():
                        roff = pl.multiple_of(row_start + (j + 1) * tr, _SUB)
                        start_copy(x_hbm, t_hbm, nxt, roff, tr)

                    if rem:
                        @pl.when(j + 1 == num_full)
                        def _():
                            start_copy(x_hbm, t_hbm, nxt,
                                       row_start + num_full * tr, rem)

                    wait_copy(x_hbm, t_hbm, slot, tr)
                    d = tile_sums(slot, tr)
                    return tuple(a + b for a, b in zip(carry, d))

                acc = lax.fori_loop(0, num_full, body, acc)

            if rem:
                slot = num_full % 2
                wait_copy(x_hbm, t_hbm, slot, rem)
                d = tile_sums(slot, rem)
                acc = tuple(a + b for a, b in zip(acc, d))
            return acc

        def core_body(core_chunks):
            rows = lax.broadcasted_iota(jnp.int32, (_OUT_ROWS, _LANES), 0)
            cols = lax.broadcasted_iota(jnp.int32, (_OUT_ROWS, _LANES), 1)
            blk = jnp.zeros((_OUT_ROWS, _LANES), jnp.float32)
            for (ti, row_start, chunk_rows, tr) in core_chunks:
                s_t, s_a, s_b = process_chunk(x_refs[ti], t_refs[ti],
                                              row_start, chunk_rows, tr)
                blk = (blk
                       + jnp.where((rows == ti) & (cols == 0), s_t, 0.0)
                       + jnp.where((rows == ti) & (cols == 1), s_a, 0.0)
                       + jnp.where((rows == ti) & (cols == 2), s_b, 0.0))
            out_ref[...] = blk   # single lane-dense full-block store

        for c in range(nc):
            pl.when(pl.program_id(0) == c)(
                functools.partial(core_body, chunks_per_core[c]))

    return kernel


@functools.partial(jax.jit, static_argnames=("weights", "num_cores"))
def _aux_weight_loss5_fused(out, gt, aux, aux_gt, *, weights, num_cores=2):
    xs = (out,) + tuple(aux)
    ts = (gt,) + tuple(aux_gt)
    n_tensors = len(xs)
    assert len(ts) == n_tensors == len(weights)
    assert 1 <= n_tensors <= _OUT_ROWS, "accumulator holds at most 8 tensors"
    assert num_cores >= 1

    # Keep narrow dtypes (no forced f32 host cast); unify across the 5 pairs.
    x_dtype = jnp.result_type(*[x.dtype for x in xs])
    t_dtype = jnp.result_type(*[t.dtype for t in ts])
    gran = max(_row_granularity(x_dtype), _row_granularity(t_dtype))

    if jnp.issubdtype(x_dtype, jnp.floating):
        x_pad_val = _BIG_LOGIT
    elif jnp.issubdtype(x_dtype, jnp.integer):
        x_pad_val = int(np.iinfo(np.dtype(x_dtype)).max)
    else:
        x_pad_val = 1

    n_reals, rows_list, pad_counts = [], [], []
    x_ops, t_ops = [], []
    for x, t in zip(xs, ts):
        assert x.shape == t.shape
        n = int(np.prod(x.shape))
        rows = _round_up(max(1, -(-n // _LANES)), gran)
        n_reals.append(n)
        rows_list.append(rows)
        pad_counts.append(rows * _LANES - n)
        # pad logits = +BIG, pad targets = 1  ->  contribute 0 to S_a and S_b,
        # and exactly +pad_count to S_t (subtracted below).  No in-kernel mask.
        x_ops.append(_prep(x.astype(x_dtype), rows, x_pad_val))
        t_ops.append(_prep(t.astype(t_dtype), rows, 1))

    # Static per-core schedule: each core owns a contiguous row range of every
    # tensor (multiple of the sublane-packing granularity).
    chunks_per_core = [[] for _ in range(num_cores)]
    for ti, rows in enumerate(rows_list):
        per_core = _round_up(-(-rows // num_cores), gran)
        for c in range(num_cores):
            r0 = min(c * per_core, rows)
            r1 = min(r0 + per_core, rows)
            if r1 > r0:
                crows = r1 - r0
                tr = min(_MAX_BLOCK_ROWS, crows)
                chunks_per_core[c].append((ti, r0, crows, tr))
    chunks_per_core = tuple(tuple(cks) for cks in chunks_per_core)
    buf_rows = max(tr for cks in chunks_per_core for (_, _, _, tr) in cks)

    kernel = _make_kernel(chunks_per_core, n_tensors)

    out_sums = pl.pallas_call(
        kernel,
        out_shape=jax.ShapeDtypeStruct((num_cores * _OUT_ROWS, _LANES),
                                       jnp.float32),
        grid_spec=pltpu.PrefetchScalarGridSpec(
            num_scalar_prefetch=0,
            grid=(num_cores,),
            in_specs=[pl.BlockSpec(memory_space=pl.ANY)] * (2 * n_tensors),
            out_specs=pl.BlockSpec((_OUT_ROWS, _LANES), lambda c: (c, 0)),
            scratch_shapes=[
                pltpu.VMEM((2, buf_rows, _LANES), x_dtype),   # logits dbl-buf
                pltpu.VMEM((2, buf_rows, _LANES), t_dtype),   # targets dbl-buf
                pltpu.SemaphoreType.DMA((2, 2)),              # [input, slot]
            ],
        ),
        compiler_params=pltpu.CompilerParams(
            dimension_semantics=("parallel",)),
    )(*x_ops, *t_ops)

    # Tiny finalize in the wrapper (scalar XLA ops on 5 tensors).
    sums = out_sums.reshape(num_cores, _OUT_ROWS, _LANES)[:, :n_tensors, :3]
    sums = jnp.sum(sums, axis=0)                               # (n_tensors, 3)
    n_vec = jnp.asarray(n_reals, jnp.float32)
    s_t = sums[:, 0] - jnp.asarray(pad_counts, jnp.float32)    # undo t==1 pad
    s_a = sums[:, 1]
    s_b = sums[:, 2]
    # loss_type == 0: pos_weight = n_n / n_p.  (Matches PyTorch; inf/nan if a
    # tensor has zero positive targets, same as the reference.)
    pos_w = (n_vec - s_t) / s_t
    losses = (s_a + (pos_w - 1.0) * s_b) / n_vec
    wlosses = losses * jnp.asarray(weights, jnp.float32)
    total = jnp.sum(wlosses)
    return total, wlosses


def aux_weight_loss5(out, gt, aux, aux_gt, weight=(1.0, 1.0, 1.0, 1.0),
                     num_cores=2):
    """Forward of Aux_weight_loss5 (loss_type=0).

    NOTE: the PyTorch module's default weight=[1,1,1] would crash on
    self.weight[3]; a 4-element all-ones weight is used here.
    Returns (total_loss, record) where record is a length-5 device array
    [main, w0*aux1, w1*aux2, w2*aux3, w3*aux4]; transfer it to the host once
    at the end if needed (instead of five blocking .item() calls).
    `num_cores=2` splits the streaming across both v7x TensorCores; on
    v5e/v6e it just adds one cheap sequential grid step.
    """
    weights = (1.0,) + tuple(float(w) for w in weight[:4])
    return _aux_weight_loss5_fused(out, gt, tuple(aux), tuple(aux_gt),
                                   weights=weights, num_cores=int(num_cores))


# ----------------------------- pure-JAX reference -----------------------------
def _wbce_ref(logits, targets):
    logits = logits.astype(jnp.float32).reshape(-1)
    targets = targets.astype(jnp.float32).reshape(-1)
    n_p = targets.sum()
    n_n = (1.0 - targets).sum()
    pos_weight = n_n / n_p
    max_val = jnp.maximum(-logits, 0.0)
    log_weight = 1.0 + (pos_weight - 1.0) * targets
    loss = (1.0 - targets) * logits + log_weight * (
        jnp.log(jnp.exp(-max_val) + jnp.exp(-logits - max_val)) + max_val)
    return loss.mean()


if __name__ == "__main__":
    key = jax.random.PRNGKey(0)
    ks = jax.random.split(key, 12)

    def make_pair(k_logit, k_tgt, shape):
        logits = jax.random.normal(k_logit, shape, dtype=jnp.float32)
        targets = (jax.random.uniform(k_tgt, shape) < 0.5).astype(jnp.float32)
        return logits, targets

    # main output / gt  (NCHW convention from the PyTorch side)
    out, gt = make_pair(ks[0], ks[1], (2, 4, 16, 16))
    # four auxiliary outputs / gts at various resolutions
    aux_shapes = [(2, 4, 16, 16), (2, 2, 16, 16), (2, 1, 16, 16), (2, 4, 8, 8)]
    aux, aux_gt = [], []
    for i, s in enumerate(aux_shapes):
        a, ag = make_pair(ks[2 + 2 * i], ks[3 + 2 * i], s)
        aux.append(a)
        aux_gt.append(ag)

    total_loss, record = aux_weight_loss5(out, gt, aux, aux_gt)
    total_loss = jax.block_until_ready(total_loss)
    record_host = jax.device_get(record)   # single host transfer for the record

    # correctness check against pure-JAX reference
    ref_losses = [_wbce_ref(out, gt)]
    for a, g in zip(aux, aux_gt):
        ref_losses.append(_wbce_ref(a, g))
    ref_losses = jnp.stack(ref_losses)
    ref_total = jnp.sum(ref_losses)
    ref_total = jax.block_until_ready(ref_total)

    if not jnp.allclose(jnp.asarray(record_host), ref_losses,
                        rtol=1e-4, atol=1e-5):
        raise AssertionError(
            f"record mismatch: pallas={list(record_host)} "
            f"ref={list(jax.device_get(ref_losses))}")
    if not jnp.allclose(total_loss, ref_total, rtol=1e-4, atol=1e-5):
        raise AssertionError(
            f"total mismatch: pallas={float(total_loss)} ref={float(ref_total)}")

    print("KERNEL_OK")
</pallas_src>

<mosaic_0001>
module attributes {stable_mosaic.version = 11 : i64} {
  func.func @kernel(%arg0: i32, %arg1: memref<16x128xf32, #tpu.memory_space<any>>, %arg2: memref<16x128xf32, #tpu.memory_space<any>>, %arg3: memref<8x128xf32, #tpu.memory_space<any>>, %arg4: memref<8x128xf32, #tpu.memory_space<any>>, %arg5: memref<8x128xf32, #tpu.memory_space<any>>, %arg6: memref<16x128xf32, #tpu.memory_space<any>>, %arg7: memref<16x128xf32, #tpu.memory_space<any>>, %arg8: memref<8x128xf32, #tpu.memory_space<any>>, %arg9: memref<8x128xf32, #tpu.memory_space<any>>, %arg10: memref<8x128xf32, #tpu.memory_space<any>>, %arg11: memref<8x128xf32, #tpu.memory_space<vmem>>, %arg12: memref<2x8x128xf32, #tpu.memory_space<vmem>>, %arg13: memref<2x8x128xf32, #tpu.memory_space<vmem>>, %arg14: memref<2x2x!tpu.dma_semaphore, #tpu.memory_space<semaphore_mem>>) attributes {dimension_semantics = [#tpu.dimension_semantics<parallel>], iteration_bounds = array<i64: 2>, scalar_prefetch = 0 : i64, scratch_operands = 3 : i64, tpu.core_type = #tpu.core_type<tc>, window_params = [{}, {}, {}, {}, {}, {}, {}, {}, {}, {}, {transform_indices = @transform_10, window_bounds = array<i64: 8, 128>}]} {
    %c0_i32 = arith.constant 0 : i32
    %0 = arith.cmpi eq, %arg0, %c0_i32 : i32
    %1 = arith.extui %0 : i1 to i32
    %c0_i32_0 = arith.constant 0 : i32
    %2 = arith.cmpi ne, %1, %c0_i32_0 : i32
    scf.if %2 {
      %6 = tpu.iota {dimensions = array<i32: 0>} : vector<8x128xi32>
      %7 = tpu.iota {dimensions = array<i32: 1>} : vector<8x128xi32>
      %cst = arith.constant 0.000000e+00 : f32
      %8 = vector.broadcast %cst : f32 to vector<8x128xf32>
      %c0_i32_2 = arith.constant 0 : i32
      %c0_i32_3 = arith.constant 0 : i32
      %c0_i32_4 = arith.constant 0 : i32
      %c0_i32_5 = arith.constant 0 : i32
      %c0_i32_6 = arith.constant 0 : i32
      %9 = tpu.memref_slice %arg1[%c0_i32_5, %c0_i32_6] : memref<16x128xf32, #tpu.memory_space<any>> -> memref<8x128xf32, #tpu.memory_space<any>>
      %c0_i32_7 = arith.constant 0 : i32
      %c0_i32_8 = arith.constant 0 : i32
      %10 = tpu.memref_slice %arg12[%c0_i32_2, %c0_i32_7, %c0_i32_8] : memref<2x8x128xf32, #tpu.memory_space<vmem>> -> memref<1x8x128xf32, #tpu.memory_space<vmem>>
      %11 = tpu.memref_squeeze %10 : memref<1x8x128xf32, #tpu.memory_space<vmem>> -> memref<8x128xf32, #tpu.memory_space<vmem>>
      %12 = tpu.memref_slice %arg14[%c0_i32_3, %c0_i32_4] : memref<2x2x!tpu.dma_semaphore, #tpu.memory_space<semaphore_mem>> -> memref<1x1x!tpu.dma_semaphore, #tpu.memory_space<semaphore_mem>>
      %13 = tpu.memref_squeeze %12 : memref<1x1x!tpu.dma_semaphore, #tpu.memory_space<semaphore_mem>> -> memref<!tpu.dma_semaphore, #tpu.memory_space<semaphore_mem>>
      tpu.enqueue_dma source(%9 : memref<8x128xf32, #tpu.memory_space<any>>) target(%11 : memref<8x128xf32, #tpu.memory_space<vmem>>) target_semaphore(%13 : memref<!tpu.dma_semaphore, #tpu.memory_space<semaphore_mem>>)
      %c0_i32_9 = arith.constant 0 : i32
      %c1_i32_10 = arith.constant 1 : i32
      %c0_i32_11 = arith.constant 0 : i32
      %c0_i32_12 = arith.constant 0 : i32
      %c0_i32_13 = arith.constant 0 : i32
      %14 = tpu.memref_slice %arg6[%c0_i32_12, %c0_i32_13] : memref<16x128xf32, #tpu.memory_space<any>> -> memref<8x128xf32, #tpu.memory_space<any>>
      %c0_i32_14 = arith.constant 0 : i32
      %c0_i32_15 = arith.constant 0 : i32
      %15 = tpu.memref_slice %arg13[%c0_i32_9, %c0_i32_14, %c0_i32_15] : memref<2x8x128xf32, #tpu.memory_space<vmem>> -> memref<1x8x128xf32, #tpu.memory_space<vmem>>
      %16 = tpu.memref_squeeze %15 : memref<1x8x128xf32, #tpu.memory_space<vmem>> -> memref<8x128xf32, #tpu.memory_space<vmem>>
      %17 = tpu.memref_slice %arg14[%c1_i32_10, %c0_i32_11] : memref<2x2x!tpu.dma_semaphore, #tpu.memory_space<semaphore_mem>> -> memref<1x1x!tpu.dma_semaphore, #tpu.memory_space<semaphore_mem>>
      %18 = tpu.memref_squeeze %17 : memref<1x1x!tpu.dma_semaphore, #tpu.memory_space<semaphore_mem>> -> memref<!tpu.dma_semaphore, #tpu.memory_space<semaphore_mem>>
      tpu.enqueue_dma source(%14 : memref<8x128xf32, #tpu.memory_space<any>>) target(%16 : memref<8x128xf32, #tpu.memory_space<vmem>>) target_semaphore(%18 : memref<!tpu.dma_semaphore, #tpu.memory_space<semaphore_mem>>)
      %c0_i32_16 = arith.constant 0 : i32
      %c0_i32_17 = arith.constant 0 : i32
      %c0_i32_18 = arith.constant 0 : i32
      %c0_i32_19 = arith.constant 0 : i32
      %c0_i32_20 = arith.constant 0 : i32
      %19 = tpu.memref_slice %arg1[%c0_i32_19, %c0_i32_20] : memref<16x128xf32, #tpu.memory_space<any>> -> memref<8x128xf32, #tpu.memory_space<any>>
      %c0_i32_21 = arith.constant 0 : i32
      %c0_i32_22 = arith.constant 0 : i32
      %20 = tpu.memref_slice %arg12[%c0_i32_16, %c0_i32_21, %c0_i32_22] : memref<2x8x128xf32, #tpu.memory_space<vmem>> -> memref<1x8x128xf32, #tpu.memory_space<vmem>>
      %21 = tpu.memref_squeeze %20 : memref<1x8x128xf32, #tpu.memory_space<vmem>> -> memref<8x128xf32, #tpu.memory_space<vmem>>
      %22 = tpu.memref_slice %arg14[%c0_i32_17, %c0_i32_18] : memref<2x2x!tpu.dma_semaphore, #tpu.memory_space<semaphore_mem>> -> memref<1x1x!tpu.dma_semaphore, #tpu.memory_space<semaphore_mem>>
      %23 = tpu.memref_squeeze %22 : memref<1x1x!tpu.dma_semaphore, #tpu.memory_space<semaphore_mem>> -> memref<!tpu.dma_semaphore, #tpu.memory_space<semaphore_mem>>
      tpu.wait_dma2 semaphore(%23 : memref<!tpu.dma_semaphore, #tpu.memory_space<semaphore_mem>>) src(%19 : memref<8x128xf32, #tpu.memory_space<any>>) dst(%21 : memref<8x128xf32, #tpu.memory_space<vmem>>)
      %c0_i32_23 = arith.constant 0 : i32
      %c1_i32_24 = arith.constant 1 : i32
      %c0_i32_25 = arith.constant 0 : i32
      %c0_i32_26 = arith.constant 0 : i32
      %c0_i32_27 = arith.constant 0 : i32
      %24 = tpu.memref_slice %arg6[%c0_i32_26, %c0_i32_27] : memref<16x128xf32, #tpu.memory_space<any>> -> memref<8x128xf32, #tpu.memory_space<any>>
      %c0_i32_28 = arith.constant 0 : i32
      %c0_i32_29 = arith.constant 0 : i32
      %25 = tpu.memref_slice %arg13[%c0_i32_23, %c0_i32_28, %c0_i32_29] : memref<2x8x128xf32, #tpu.memory_space<vmem>> -> memref<1x8x128xf32, #tpu.memory_space<vmem>>
      %26 = tpu.memref_squeeze %25 : memref<1x8x128xf32, #tpu.memory_space<vmem>> -> memref<8x128xf32, #tpu.memory_space<vmem>>
      %27 = tpu.memref_slice %arg14[%c1_i32_24, %c0_i32_25] : memref<2x2x!tpu.dma_semaphore, #tpu.memory_space<semaphore_mem>> -> memref<1x1x!tpu.dma_semaphore, #tpu.memory_space<semaphore_mem>>
      %28 = tpu.memref_squeeze %27 : memref<1x1x!tpu.dma_semaphore, #tpu.memory_space<semaphore_mem>> -> memref<!tpu.dma_semaphore, #tpu.memory_space<semaphore_mem>>
      tpu.wait_dma2 semaphore(%28 : memref<!tpu.dma_semaphore, #tpu.memory_space<semaphore_mem>>) src(%24 : memref<8x128xf32, #tpu.memory_space<any>>) dst(%26 : memref<8x128xf32, #tpu.memory_space<vmem>>)
      %c0 = arith.constant 0 : index
      %c0_30 = arith.constant 0 : index
      %c0_31 = arith.constant 0 : index
      %29 = vector.load %arg12[%c0, %c0_30, %c0_31] : memref<2x8x128xf32, #tpu.memory_space<vmem>>, vector<1x8x128xf32>
      %30 = vector.shape_cast %29 : vector<1x8x128xf32> to vector<8x128xf32>
      %c0_32 = arith.constant 0 : index
      %c0_33 = arith.constant 0 : index
      %c0_34 = arith.constant 0 : index
      %31 = vector.load %arg13[%c0_32, %c0_33, %c0_34] : memref<2x8x128xf32, #tpu.memory_space<vmem>>, vector<1x8x128xf32>
      %32 = vector.shape_cast %31 : vector<1x8x128xf32> to vector<8x128xf32>
      %33 = math.absf %30 : vector<8x128xf32>
      %cst_35 = arith.constant 0.000000e+00 : f32
      %34 = vector.broadcast %cst_35 : f32 to vector<8x128xf32>
      %35 = arith.subf %34, %33 : vector<8x128xf32>
      %36 = math.exp %35 : vector<8x128xf32>
      %cst_36 = arith.constant 1.000000e+00 : f32
      %37 = vector.broadcast %cst_36 : f32 to vector<8x128xf32>
      %38 = arith.addf %37, %36 : vector<8x128xf32>
      %39 = math.log %38 : vector<8x128xf32>
      %cst_37 = arith.constant 0.000000e+00 : f32
      %40 = vector.broadcast %cst_37 : f32 to vector<8x128xf32>
      %41 = arith.subf %40, %30 : vector<8x128xf32>
      %cst_38 = arith.constant 0.000000e+00 : f32
      %42 = vector.broadcast %cst_38 : f32 to vector<8x128xf32>
      %43 = arith.maximumf %41, %42 : vector<8x128xf32>
      %44 = arith.addf %39, %43 : vector<8x128xf32>
      %45 = vector.shape_cast %32 : vector<8x128xf32> to vector<1x8x128xf32>
      %cst_39 = arith.constant dense<0.000000e+00> : vector<1xf32>
      %46 = vector.multi_reduction <add>, %45, %cst_39 [1, 2] : vector<1x8x128xf32> to vector<1xf32>
      %47 = vector.shape_cast %46 : vector<1xf32> to vector<1x1x1xf32>
      %48 = vector.extract %47[0, 0, 0] : f32 from vector<1x1x1xf32>
      %cst_40 = arith.constant 1.000000e+00 : f32
      %49 = vector.broadcast %cst_40 : f32 to vector<8x128xf32>
      %50 = arith.subf %49, %32 : vector<8x128xf32>
      %51 = arith.mulf %50, %30 : vector<8x128xf32>
      %52 = arith.addf %51, %44 : vector<8x128xf32>
      %53 = vector.shape_cast %52 : vector<8x128xf32> to vector<1x8x128xf32>
      %cst_41 = arith.constant dense<0.000000e+00> : vector<1xf32>
      %54 = vector.multi_reduction <add>, %53, %cst_41 [1, 2] : vector<1x8x128xf32> to vector<1xf32>
      %55 = vector.shape_cast %54 : vector<1xf32> to vector<1x1x1xf32>
      %56 = vector.extract %55[0, 0, 0] : f32 from vector<1x1x1xf32>
      %57 = arith.mulf %32, %44 : vector<8x128xf32>
      %58 = vector.shape_cast %57 : vector<8x128xf32> to vector<1x8x128xf32>
      %cst_42 = arith.constant dense<0.000000e+00> : vector<1xf32>
      %59 = vector.multi_reduction <add>, %58, %cst_42 [1, 2] : vector<1x8x128xf32> to vector<1xf32>
      %60 = vector.shape_cast %59 : vector<1xf32> to vector<1x1x1xf32>
      %61 = vector.extract %60[0, 0, 0] : f32 from vector<1x1x1xf32>
      %cst_43 = arith.constant 0.000000e+00 : f32
      %62 = arith.addf %cst_43, %48 : f32
      %cst_44 = arith.constant 0.000000e+00 : f32
      %63 = arith.addf %cst_44, %56 : f32
      %cst_45 = arith.constant 0.000000e+00 : f32
      %64 = arith.addf %cst_45, %61 : f32
      %c0_i32_46 = arith.constant 0 : i32
      %65 = vector.broadcast %c0_i32_46 : i32 to vector<8x128xi32>
      %66 = arith.cmpi eq, %6, %65 : vector<8x128xi32>
      %c0_i32_47 = arith.constant 0 : i32
      %67 = vector.broadcast %c0_i32_47 : i32 to vector<8x128xi32>
      %68 = arith.cmpi eq, %7, %67 : vector<8x128xi32>
      %69 = arith.andi %66, %68 : vector<8x128xi1>
      %cst_48 = arith.constant 0.000000e+00 : f32
      %70 = vector.broadcast %62 : f32 to vector<8x128xf32>
      %71 = vector.broadcast %cst_48 : f32 to vector<8x128xf32>
      %72 = arith.select %69, %70, %71 : vector<8x128xi1>, vector<8x128xf32>
      %73 = arith.addf %8, %72 : vector<8x128xf32>
      %c0_i32_49 = arith.constant 0 : i32
      %74 = vector.broadcast %c0_i32_49 : i32 to vector<8x128xi32>
      %75 = arith.cmpi eq, %6, %74 : vector<8x128xi32>
      %c1_i32_50 = arith.constant 1 : i32
      %76 = vector.broadcast %c1_i32_50 : i32 to vector<8x128xi32>
      %77 = arith.cmpi eq, %7, %76 : vector<8x128xi32>
      %78 = arith.andi %75, %77 : vector<8x128xi1>
      %cst_51 = arith.constant 0.000000e+00 : f32
      %79 = vector.broadcast %63 : f32 to vector<8x128xf32>
      %80 = vector.broadcast %cst_51 : f32 to vector<8x128xf32>
      %81 = arith.select %78, %79, %80 : vector<8x128xi1>, vector<8x128xf32>
      %82 = arith.addf %73, %81 : vector<8x128xf32>
      %c0_i32_52 = arith.constant 0 : i32
      %83 = vector.broadcast %c0_i32_52 : i32 to vector<8x128xi32>
      %84 = arith.cmpi eq, %6, %83 : vector<8x128xi32>
      %c2_i32 = arith.constant 2 : i32
      %85 = vector.broadcast %c2_i32 : i32 to vector<8x128xi32>
      %86 = arith.cmpi eq, %7, %85 : vector<8x128xi32>
      %87 = arith.andi %84, %86 : vector<8x128xi1>
      %cst_53 = arith.constant 0.000000e+00 : f32
      %88 = vector.broadcast %64 : f32 to vector<8x128xf32>
      %89 = vector.broadcast %cst_53 : f32 to vector<8x128xf32>
      %90 = arith.select %87, %88, %89 : vector<8x128xi1>, vector<8x128xf32>
      %91 = arith.addf %82, %90 : vector<8x128xf32>
      %c0_i32_54 = arith.constant 0 : i32
      %c0_i32_55 = arith.constant 0 : i32
      %c0_i32_56 = arith.constant 0 : i32
      %c0_i32_57 = arith.constant 0 : i32
      %c0_i32_58 = arith.constant 0 : i32
      %92 = tpu.memref_slice %arg2[%c0_i32_57, %c0_i32_58] : memref<16x128xf32, #tpu.memory_space<any>> -> memref<8x128xf32, #tpu.memory_space<any>>
      %c0_i32_59 = arith.constant 0 : i32
      %c0_i32_60 = arith.constant 0 : i32
      %93 = tpu.memref_slice %arg12[%c0_i32_54, %c0_i32_59, %c0_i32_60] : memref<2x8x128xf32, #tpu.memory_space<vmem>> -> memref<1x8x128xf32, #tpu.memory_space<vmem>>
      %94 = tpu.memref_squeeze %93 : memref<1x8x128xf32, #tpu.memory_space<vmem>> -> memref<8x128xf32, #tpu.memory_space<vmem>>
      %95 = tpu.memref_slice %arg14[%c0_i32_55, %c0_i32_56] : memref<2x2x!tpu.dma_semaphore, #tpu.memory_space<semaphore_mem>> -> memref<1x1x!tpu.dma_semaphore, #tpu.memory_space<semaphore_mem>>
      %96 = tpu.memref_squeeze %95 : memref<1x1x!tpu.dma_semaphore, #tpu.memory_space<semaphore_mem>> -> memref<!tpu.dma_semaphore, #tpu.memory_space<semaphore_mem>>
      tpu.enqueue_dma source(%92 : memref<8x128xf32, #tpu.memory_space<any>>) target(%94 : memref<8x128xf32, #tpu.memory_space<vmem>>) target_semaphore(%96 : memref<!tpu.dma_semaphore, #tpu.memory_space<semaphore_mem>>)
      %c0_i32_61 = arith.constant 0 : i32
      %c1_i32_62 = arith.constant 1 : i32
      %c0_i32_63 = arith.constant 0 : i32
      %c0_i32_64 = arith.constant 0 : i32
      %c0_i32_65 = arith.constant 0 : i32
      %97 = tpu.memref_slice %arg7[%c0_i32_64, %c0_i32_65] : memref<16x128xf32, #tpu.memory_space<any>> -> memref<8x128xf32, #tpu.memory_space<any>>
      %c0_i32_66 = arith.constant 0 : i32
      %c0_i32_67 = arith.constant 0 : i32
      %98 = tpu.memref_slice %arg13[%c0_i32_61, %c0_i32_66, %c0_i32_67] : memref<2x8x128xf32, #tpu.memory_space<vmem>> -> memref<1x8x128xf32, #tpu.memory_space<vmem>>
      %99 = tpu.memref_squeeze %98 : memref<1x8x128xf32, #tpu.memory_space<vmem>> -> memref<8x128xf32, #tpu.memory_space<vmem>>
      %100 = tpu.memref_slice %arg14[%c1_i32_62, %c0_i32_63] : memref<2x2x!tpu.dma_semaphore, #tpu.memory_space<semaphore_mem>> -> memref<1x1x!tpu.dma_semaphore, #tpu.memory_space<semaphore_mem>>
      %101 = tpu.memref_squeeze %100 : memref<1x1x!tpu.dma_semaphore, #tpu.memory_space<semaphore_mem>> -> memref<!tpu.dma_semaphore, #tpu.memory_space<semaphore_mem>>
      tpu.enqueue_dma source(%97 : memref<8x128xf32, #tpu.memory_space<any>>) target(%99 : memref<8x128xf32, #tpu.memory_space<vmem>>) target_semaphore(%101 : memref<!tpu.dma_semaphore, #tpu.memory_space<semaphore_mem>>)
      %c0_i32_68 = arith.constant 0 : i32
      %c0_i32_69 = arith.constant 0 : i32
      %c0_i32_70 = arith.constant 0 : i32
      %c0_i32_71 = arith.constant 0 : i32
      %c0_i32_72 = arith.constant 0 : i32
      %102 = tpu.memref_slice %arg2[%c0_i32_71, %c0_i32_72] : memref<16x128xf32, #tpu.memory_space<any>> -> memref<8x128xf32, #tpu.memory_space<any>>
      %c0_i32_73 = arith.constant 0 : i32
      %c0_i32_74 = arith.constant 0 : i32
      %103 = tpu.memref_slice %arg12[%c0_i32_68, %c0_i32_73, %c0_i32_74] : memref<2x8x128xf32, #tpu.memory_space<vmem>> -> memref<1x8x128xf32, #tpu.memory_space<vmem>>
      %104 = tpu.memref_squeeze %103 : memref<1x8x128xf32, #tpu.memory_space<vmem>> -> memref<8x128xf32, #tpu.memory_space<vmem>>
      %105 = tpu.memref_slice %arg14[%c0_i32_69, %c0_i32_70] : memref<2x2x!tpu.dma_semaphore, #tpu.memory_space<semaphore_mem>> -> memref<1x1x!tpu.dma_semaphore, #tpu.memory_space<semaphore_mem>>
      %106 = tpu.memref_squeeze %105 : memref<1x1x!tpu.dma_semaphore, #tpu.memory_space<semaphore_mem>> -> memref<!tpu.dma_semaphore, #tpu.memory_space<semaphore_mem>>
      tpu.wait_dma2 semaphore(%106 : memref<!tpu.dma_semaphore, #tpu.memory_space<semaphore_mem>>) src(%102 : memref<8x128xf32, #tpu.memory_space<any>>) dst(%104 : memref<8x128xf32, #tpu.memory_space<vmem>>)
      %c0_i32_75 = arith.constant 0 : i32
      %c1_i32_76 = arith.constant 1 : i32
      %c0_i32_77 = arith.constant 0 : i32
      %c0_i32_78 = arith.constant 0 : i32
      %c0_i32_79 = arith.constant 0 : i32
      %107 = tpu.memref_slice %arg7[%c0_i32_78, %c0_i32_79] : memref<16x128xf32, #tpu.memory_space<any>> -> memref<8x128xf32, #tpu.memory_space<any>>
      %c0_i32_80 = arith.constant 0 : i32
      %c0_i32_81 = arith.constant 0 : i32
      %108 = tpu.memref_slice %arg13[%c0_i32_75, %c0_i32_80, %c0_i32_81] : memref<2x8x128xf32, #tpu.memory_space<vmem>> -> memref<1x8x128xf32, #tpu.memory_space<vmem>>
      %109 = tpu.memref_squeeze %108 : memref<1x8x128xf32, #tpu.memory_space<vmem>> -> memref<8x128xf32, #tpu.memory_space<vmem>>
      %110 = tpu.memref_slice %arg14[%c1_i32_76, %c0_i32_77] : memref<2x2x!tpu.dma_semaphore, #tpu.memory_space<semaphore_mem>> -> memref<1x1x!tpu.dma_semaphore, #tpu.memory_space<semaphore_mem>>
      %111 = tpu.memref_squeeze %110 : memref<1x1x!tpu.dma_semaphore, #tpu.memory_space<semaphore_mem>> -> memref<!tpu.dma_semaphore, #tpu.memory_space<semaphore_mem>>
      tpu.wait_dma2 semaphore(%111 : memref<!tpu.dma_semaphore, #tpu.memory_space<semaphore_mem>>) src(%107 : memref<8x128xf32, #tpu.memory_space<any>>) dst(%109 : memref<8x128xf32, #tpu.memory_space<vmem>>)
      %c0_82 = arith.constant 0 : index
      %c0_83 = arith.constant 0 : index
      %c0_84 = arith.constant 0 : index
      %112 = vector.load %arg12[%c0_82, %c0_83, %c0_84] : memref<2x8x128xf32, #tpu.memory_space<vmem>>, vector<1x8x128xf32>
      %113 = vector.shape_cast %112 : vector<1x8x128xf32> to vector<8x128xf32>
      %c0_85 = arith.constant 0 : index
      %c0_86 = arith.constant 0 : index
      %c0_87 = arith.constant 0 : index
      %114 = vector.load %arg13[%c0_85, %c0_86, %c0_87] : memref<2x8x128xf32, #tpu.memory_space<vmem>>, vector<1x8x128xf32>
      %115 = vector.shape_cast %114 : vector<1x8x128xf32> to vector<8x128xf32>
      %116 = math.absf %113 : vector<8x128xf32>
      %cst_88 = arith.constant 0.000000e+00 : f32
      %117 = vector.broadcast %cst_88 : f32 to vector<8x128xf32>
      %118 = arith.subf %117, %116 : vector<8x128xf32>
      %119 = math.exp %118 : vector<8x128xf32>
      %cst_89 = arith.constant 1.000000e+00 : f32
      %120 = vector.broadcast %cst_89 : f32 to vector<8x128xf32>
      %121 = arith.addf %120, %119 : vector<8x128xf32>
      %122 = math.log %121 : vector<8x128xf32>
      %cst_90 = arith.constant 0.000000e+00 : f32
      %123 = vector.broadcast %cst_90 : f32 to vector<8x128xf32>
      %124 = arith.subf %123, %113 : vector<8x128xf32>
      %cst_91 = arith.constant 0.000000e+00 : f32
      %125 = vector.broadcast %cst_91 : f32 to vector<8x128xf32>
      %126 = arith.maximumf %124, %125 : vector<8x128xf32>
      %127 = arith.addf %122, %126 : vector<8x128xf32>
      %128 = vector.shape_cast %115 : vector<8x128xf32> to vector<1x8x128xf32>
      %cst_92 = arith.constant dense<0.000000e+00> : vector<1xf32>
      %129 = vector.multi_reduction <add>, %128, %cst_92 [1, 2] : vector<1x8x128xf32> to vector<1xf32>
      %130 = vector.shape_cast %129 : vector<1xf32> to vector<1x1x1xf32>
      %131 = vector.extract %130[0, 0, 0] : f32 from vector<1x1x1xf32>
      %cst_93 = arith.constant 1.000000e+00 : f32
      %132 = vector.broadcast %cst_93 : f32 to vector<8x128xf32>
      %133 = arith.subf %132, %115 : vector<8x128xf32>
      %134 = arith.mulf %133, %113 : vector<8x128xf32>
      %135 = arith.addf %134, %127 : vector<8x128xf32>
      %136 = vector.shape_cast %135 : vector<8x128xf32> to vector<1x8x128xf32>
      %cst_94 = arith.constant dense<0.000000e+00> : vector<1xf32>
      %137 = vector.multi_reduction <add>, %136, %cst_94 [1, 2] : vector<1x8x128xf32> to vector<1xf32>
      %138 = vector.shape_cast %137 : vector<1xf32> to vector<1x1x1xf32>
      %139 = vector.extract %138[0, 0, 0] : f32 from vector<1x1x1xf32>
      %140 = arith.mulf %115, %127 : vector<8x128xf32>
      %141 = vector.shape_cast %140 : vector<8x128xf32> to vector<1x8x128xf32>
      %cst_95 = arith.constant dense<0.000000e+00> : vector<1xf32>
      %142 = vector.multi_reduction <add>, %141, %cst_95 [1, 2] : vector<1x8x128xf32> to vector<1xf32>
      %143 = vector.shape_cast %142 : vector<1xf32> to vector<1x1x1xf32>
      %144 = vector.extract %143[0, 0, 0] : f32 from vector<1x1x1xf32>
      %cst_96 = arith.constant 0.000000e+00 : f32
      %145 = arith.addf %cst_96, %131 : f32
      %cst_97 = arith.constant 0.000000e+00 : f32
      %146 = arith.addf %cst_97, %139 : f32
      %cst_98 = arith.constant 0.000000e+00 : f32
      %147 = arith.addf %cst_98, %144 : f32
      %c1_i32_99 = arith.constant 1 : i32
      %148 = vector.broadcast %c1_i32_99 : i32 to vector<8x128xi32>
      %149 = arith.cmpi eq, %6, %148 : vector<8x128xi32>
      %c0_i32_100 = arith.constant 0 : i32
      %150 = vector.broadcast %c0_i32_100 : i32 to vector<8x128xi32>
      %151 = arith.cmpi eq, %7, %150 : vector<8x128xi32>
      %152 = arith.andi %149, %151 : vector<8x128xi1>
      %cst_101 = arith.constant 0.000000e+00 : f32
      %153 = vector.broadcast %145 : f32 to vector<8x128xf32>
      %154 = vector.broadcast %cst_101 : f32 to vector<8x128xf32>
      %155 = arith.select %152, %153, %154 : vector<8x128xi1>, vector<8x128xf32>
      %156 = arith.addf %91, %155 : vector<8x128xf32>
      %c1_i32_102 = arith.constant 1 : i32
      %157 = vector.broadcast %c1_i32_102 : i32 to vector<8x128xi32>
      %158 = arith.cmpi eq, %6, %157 : vector<8x128xi32>
      %c1_i32_103 = arith.constant 1 : i32
      %159 = vector.broadcast %c1_i32_103 : i32 to vector<8x128xi32>
      %160 = arith.cmpi eq, %7, %159 : vector<8x128xi32>
      %161 = arith.andi %158, %160 : vector<8x128xi1>
      %cst_104 = arith.constant 0.000000e+00 : f32
      %162 = vector.broadcast %146 : f32 to vector<8x128xf32>
      %163 = vector.broadcast %cst_104 : f32 to vector<8x128xf32>
      %164 = arith.select %161, %162, %163 : vector<8x128xi1>, vector<8x128xf32>
      %165 = arith.addf %156, %164 : vector<8x128xf32>
      %c1_i32_105 = arith.constant 1 : i32
      %166 = vector.broadcast %c1_i32_105 : i32 to vector<8x128xi32>
      %167 = arith.cmpi eq, %6, %166 : vector<8x128xi32>
      %c2_i32_106 = arith.constant 2 : i32
      %168 = vector.broadcast %c2_i32_106 : i32 to vector<8x128xi32>
      %169 = arith.cmpi eq, %7, %168 : vector<8x128xi32>
      %170 = arith.andi %167, %169 : vector<8x128xi1>
      %cst_107 = arith.constant 0.000000e+00 : f32
      %171 = vector.broadcast %147 : f32 to vector<8x128xf32>
      %172 = vector.broadcast %cst_107 : f32 to vector<8x128xf32>
      %173 = arith.select %170, %171, %172 : vector<8x128xi1>, vector<8x128xf32>
      %174 = arith.addf %165, %173 : vector<8x128xf32>
      %c0_i32_108 = arith.constant 0 : i32
      %c0_i32_109 = arith.constant 0 : i32
      %c0_i32_110 = arith.constant 0 : i32
      %c0_i32_111 = arith.constant 0 : i32
      %c0_i32_112 = arith.constant 0 : i32
      %175 = tpu.memref_slice %arg3[%c0_i32_111, %c0_i32_112] : memref<8x128xf32, #tpu.memory_space<any>> -> memref<8x128xf32, #tpu.memory_space<any>>
      %c0_i32_113 = arith.constant 0 : i32
      %c0_i32_114 = arith.constant 0 : i32
      %176 = tpu.memref_slice %arg12[%c0_i32_108, %c0_i32_113, %c0_i32_114] : memref<2x8x128xf32, #tpu.memory_space<vmem>> -> memref<1x8x128xf32, #tpu.memory_space<vmem>>
      %177 = tpu.memref_squeeze %176 : memref<1x8x128xf32, #tpu.memory_space<vmem>> -> memref<8x128xf32, #tpu.memory_space<vmem>>
      %178 = tpu.memref_slice %arg14[%c0_i32_109, %c0_i32_110] : memref<2x2x!tpu.dma_semaphore, #tpu.memory_space<semaphore_mem>> -> memref<1x1x!tpu.dma_semaphore, #tpu.memory_space<semaphore_mem>>
      %179 = tpu.memref_squeeze %178 : memref<1x1x!tpu.dma_semaphore, #tpu.memory_space<semaphore_mem>> -> memref<!tpu.dma_semaphore, #tpu.memory_space<semaphore_mem>>
      tpu.enqueue_dma source(%175 : memref<8x128xf32, #tpu.memory_space<any>>) target(%177 : memref<8x128xf32, #tpu.memory_space<vmem>>) target_semaphore(%179 : memref<!tpu.dma_semaphore, #tpu.memory_space<semaphore_mem>>)
      %c0_i32_115 = arith.constant 0 : i32
      %c1_i32_116 = arith.constant 1 : i32
      %c0_i32_117 = arith.constant 0 : i32
      %c0_i32_118 = arith.constant 0 : i32
      %c0_i32_119 = arith.constant 0 : i32
      %180 = tpu.memref_slice %arg8[%c0_i32_118, %c0_i32_119] : memref<8x128xf32, #tpu.memory_space<any>> -> memref<8x128xf32, #tpu.memory_space<any>>
      %c0_i32_120 = arith.constant 0 : i32
      %c0_i32_121 = arith.constant 0 : i32
      %181 = tpu.memref_slice %arg13[%c0_i32_115, %c0_i32_120, %c0_i32_121] : memref<2x8x128xf32, #tpu.memory_space<vmem>> -> memref<1x8x128xf32, #tpu.memory_space<vmem>>
      %182 = tpu.memref_squeeze %181 : memref<1x8x128xf32, #tpu.memory_space<vmem>> -> memref<8x128xf32, #tpu.memory_space<vmem>>
      %183 = tpu.memref_slice %arg14[%c1_i32_116, %c0_i32_117] : memref<2x2x!tpu.dma_semaphore, #tpu.memory_space<semaphore_mem>> -> memref<1x1x!tpu.dma_semaphore, #tpu.memory_space<semaphore_mem>>
      %184 = tpu.memref_squeeze %183 : memref<1x1x!tpu.dma_semaphore, #tpu.memory_space<semaphore_mem>> -> memref<!tpu.dma_semaphore, #tpu.memory_space<semaphore_mem>>
      tpu.enqueue_dma source(%180 : memref<8x128xf32, #tpu.memory_space<any>>) target(%182 : memref<8x128xf32, #tpu.memory_space<vmem>>) target_semaphore(%184 : memref<!tpu.dma_semaphore, #tpu.memory_space<semaphore_mem>>)
      %c0_i32_122 = arith.constant 0 : i32
      %c0_i32_123 = arith.constant 0 : i32
      %c0_i32_124 = arith.constant 0 : i32
      %c0_i32_125 = arith.constant 0 : i32
      %c0_i32_126 = arith.constant 0 : i32
      %185 = tpu.memref_slice %arg3[%c0_i32_125, %c0_i32_126] : memref<8x128xf32, #tpu.memory_space<any>> -> memref<8x128xf32, #tpu.memory_space<any>>
      %c0_i32_127 = arith.constant 0 : i32
      %c0_i32_128 = arith.constant 0 : i32
      %186 = tpu.memref_slice %arg12[%c0_i32_122, %c0_i32_127, %c0_i32_128] : memref<2x8x128xf32, #tpu.memory_space<vmem>> -> memref<1x8x128xf32, #tpu.memory_space<vmem>>
      %187 = tpu.memref_squeeze %186 : memref<1x8x128xf32, #tpu.memory_space<vmem>> -> memref<8x128xf32, #tpu.memory_space<vmem>>
      %188 = tpu.memref_slice %arg14[%c0_i32_123, %c0_i32_124] : memref<2x2x!tpu.dma_semaphore, #tpu.memory_space<semaphore_mem>> -> memref<1x1x!tpu.dma_semaphore, #tpu.memory_space<semaphore_mem>>
      %189 = tpu.memref_squeeze %188 : memref<1x1x!tpu.dma_semaphore, #tpu.memory_space<semaphore_mem>> -> memref<!tpu.dma_semaphore, #tpu.memory_space<semaphore_mem>>
      tpu.wait_dma2 semaphore(%189 : memref<!tpu.dma_semaphore, #tpu.memory_space<semaphore_mem>>) src(%185 : memref<8x128xf32, #tpu.memory_space<any>>) dst(%187 : memref<8x128xf32, #tpu.memory_space<vmem>>)
      %c0_i32_129 = arith.constant 0 : i32
      %c1_i32_130 = arith.constant 1 : i32
      %c0_i32_131 = arith.constant 0 : i32
      %c0_i32_132 = arith.constant 0 : i32
      %c0_i32_133 = arith.constant 0 : i32
      %190 = tpu.memref_slice %arg8[%c0_i32_132, %c0_i32_133] : memref<8x128xf32, #tpu.memory_space<any>> -> memref<8x128xf32, #tpu.memory_space<any>>
      %c0_i32_134 = arith.constant 0 : i32
      %c0_i32_135 = arith.constant 0 : i32
      %191 = tpu.memref_slice %arg13[%c0_i32_129, %c0_i32_134, %c0_i32_135] : memref<2x8x128xf32, #tpu.memory_space<vmem>> -> memref<1x8x128xf32, #tpu.memory_space<vmem>>
      %192 = tpu.memref_squeeze %191 : memref<1x8x128xf32, #tpu.memory_space<vmem>> -> memref<8x128xf32, #tpu.memory_space<vmem>>
      %193 = tpu.memref_slice %arg14[%c1_i32_130, %c0_i32_131] : memref<2x2x!tpu.dma_semaphore, #tpu.memory_space<semaphore_mem>> -> memref<1x1x!tpu.dma_semaphore, #tpu.memory_space<semaphore_mem>>
      %194 = tpu.memref_squeeze %193 : memref<1x1x!tpu.dma_semaphore, #tpu.memory_space<semaphore_mem>> -> memref<!tpu.dma_semaphore, #tpu.memory_space<semaphore_mem>>
      tpu.wait_dma2 semaphore(%194 : memref<!tpu.dma_semaphore, #tpu.memory_space<semaphore_mem>>) src(%190 : memref<8x128xf32, #tpu.memory_space<any>>) dst(%192 : memref<8x128xf32, #tpu.memory_space<vmem>>)
      %c0_136 = arith.constant 0 : index
      %c0_137 = arith.constant 0 : index
      %c0_138 = arith.constant 0 : index
      %195 = vector.load %arg12[%c0_136, %c0_137, %c0_138] : memref<2x8x128xf32, #tpu.memory_space<vmem>>, vector<1x8x128xf32>
      %196 = vector.shape_cast %195 : vector<1x8x128xf32> to vector<8x128xf32>
      %c0_139 = arith.constant 0 : index
      %c0_140 = arith.constant 0 : index
      %c0_141 = arith.constant 0 : index
      %197 = vector.load %arg13[%c0_139, %c0_140, %c0_141] : memref<2x8x128xf32, #tpu.memory_space<vmem>>, vector<1x8x128xf32>
      %198 = vector.shape_cast %197 : vector<1x8x128xf32> to vector<8x128xf32>
      %199 = math.absf %196 : vector<8x128xf32>
      %cst_142 = arith.constant 0.000000e+00 : f32
      %200 = vector.broadcast %cst_142 : f32 to vector<8x128xf32>
      %201 = arith.subf %200, %199 : vector<8x128xf32>
      %202 = math.exp %201 : vector<8x128xf32>
      %cst_143 = arith.constant 1.000000e+00 : f32
      %203 = vector.broadcast %cst_143 : f32 to vector<8x128xf32>
      %204 = arith.addf %203, %202 : vector<8x128xf32>
      %205 = math.log %204 : vector<8x128xf32>
      %cst_144 = arith.constant 0.000000e+00 : f32
      %206 = vector.broadcast %cst_144 : f32 to vector<8x128xf32>
      %207 = arith.subf %206, %196 : vector<8x128xf32>
      %cst_145 = arith.constant 0.000000e+00 : f32
      %208 = vector.broadcast %cst_145 : f32 to vector<8x128xf32>
      %209 = arith.maximumf %207, %208 : vector<8x128xf32>
      %210 = arith.addf %205, %209 : vector<8x128xf32>
      %211 = vector.shape_cast %198 : vector<8x128xf32> to vector<1x8x128xf32>
      %cst_146 = arith.constant dense<0.000000e+00> : vector<1xf32>
      %212 = vector.multi_reduction <add>, %211, %cst_146 [1, 2] : vector<1x8x128xf32> to vector<1xf32>
      %213 = vector.shape_cast %212 : vector<1xf32> to vector<1x1x1xf32>
      %214 = vector.extract %213[0, 0, 0] : f32 from vector<1x1x1xf32>
      %cst_147 = arith.constant 1.000000e+00 : f32
      %215 = vector.broadcast %cst_147 : f32 to vector<8x128xf32>
      %216 = arith.subf %215, %198 : vector<8x128xf32>
      %217 = arith.mulf %216, %196 : vector<8x128xf32>
      %218 = arith.addf %217, %210 : vector<8x128xf32>
      %219 = vector.shape_cast %218 : vector<8x128xf32> to vector<1x8x128xf32>
      %cst_148 = arith.constant dense<0.000000e+00> : vector<1xf32>
      %220 = vector.multi_reduction <add>, %219, %cst_148 [1, 2] : vector<1x8x128xf32> to vector<1xf32>
      %221 = vector.shape_cast %220 : vector<1xf32> to vector<1x1x1xf32>
      %222 = vector.extract %221[0, 0, 0] : f32 from vector<1x1x1xf32>
      %223 = arith.mulf %198, %210 : vector<8x128xf32>
      %224 = vector.shape_cast %223 : vector<8x128xf32> to vector<1x8x128xf32>
      %cst_149 = arith.constant dense<0.000000e+00> : vector<1xf32>
      %225 = vector.multi_reduction <add>, %224, %cst_149 [1, 2] : vector<1x8x128xf32> to vector<1xf32>
      %226 = vector.shape_cast %225 : vector<1xf32> to vector<1x1x1xf32>
      %227 = vector.extract %226[0, 0, 0] : f32 from vector<1x1x1xf32>
      %cst_150 = arith.constant 0.000000e+00 : f32
      %228 = arith.addf %cst_150, %214 : f32
      %cst_151 = arith.constant 0.000000e+00 : f32
      %229 = arith.addf %cst_151, %222 : f32
      %cst_152 = arith.constant 0.000000e+00 : f32
      %230 = arith.addf %cst_152, %227 : f32
      %c2_i32_153 = arith.constant 2 : i32
      %231 = vector.broadcast %c2_i32_153 : i32 to vector<8x128xi32>
      %232 = arith.cmpi eq, %6, %231 : vector<8x128xi32>
      %c0_i32_154 = arith.constant 0 : i32
      %233 = vector.broadcast %c0_i32_154 : i32 to vector<8x128xi32>
      %234 = arith.cmpi eq, %7, %233 : vector<8x128xi32>
      %235 = arith.andi %232, %234 : vector<8x128xi1>
      %cst_155 = arith.constant 0.000000e+00 : f32
      %236 = vector.broadcast %228 : f32 to vector<8x128xf32>
      %237 = vector.broadcast %cst_155 : f32 to vector<8x128xf32>
      %238 = arith.select %235, %236, %237 : vector<8x128xi1>, vector<8x128xf32>
      %239 = arith.addf %174, %238 : vector<8x128xf32>
      %c2_i32_156 = arith.constant 2 : i32
      %240 = vector.broadcast %c2_i32_156 : i32 to vector<8x128xi32>
      %241 = arith.cmpi eq, %6, %240 : vector<8x128xi32>
      %c1_i32_157 = arith.constant 1 : i32
      %242 = vector.broadcast %c1_i32_157 : i32 to vector<8x128xi32>
      %243 = arith.cmpi eq, %7, %242 : vector<8x128xi32>
      %244 = arith.andi %241, %243 : vector<8x128xi1>
      %cst_158 = arith.constant 0.000000e+00 : f32
      %245 = vector.broadcast %229 : f32 to vector<8x128xf32>
      %246 = vector.broadcast %cst_158 : f32 to vector<8x128xf32>
      %247 = arith.select %244, %245, %246 : vector<8x128xi1>, vector<8x128xf32>
      %248 = arith.addf %239, %247 : vector<8x128xf32>
      %c2_i32_159 = arith.constant 2 : i32
      %249 = vector.broadcast %c2_i32_159 : i32 to vector<8x128xi32>
      %250 = arith.cmpi eq, %6, %249 : vector<8x128xi32>
      %c2_i32_160 = arith.constant 2 : i32
      %251 = vector.broadcast %c2_i32_160 : i32 to vector<8x128xi32>
      %252 = arith.cmpi eq, %7, %251 : vector<8x128xi32>
      %253 = arith.andi %250, %252 : vector<8x128xi1>
      %cst_161 = arith.constant 0.000000e+00 : f32
      %254 = vector.broadcast %230 : f32 to vector<8x128xf32>
      %255 = vector.broadcast %cst_161 : f32 to vector<8x128xf32>
      %256 = arith.select %253, %254, %255 : vector<8x128xi1>, vector<8x128xf32>
      %257 = arith.addf %248, %256 : vector<8x128xf32>
      %c0_i32_162 = arith.constant 0 : i32
      %c0_i32_163 = arith.constant 0 : i32
      %c0_i32_164 = arith.constant 0 : i32
      %c0_i32_165 = arith.constant 0 : i32
      %c0_i32_166 = arith.constant 0 : i32
      %258 = tpu.memref_slice %arg4[%c0_i32_165, %c0_i32_166] : memref<8x128xf32, #tpu.memory_space<any>> -> memref<8x128xf32, #tpu.memory_space<any>>
      %c0_i32_167 = arith.constant 0 : i32
      %c0_i32_168 = arith.constant 0 : i32
      %259 = tpu.memref_slice %arg12[%c0_i32_162, %c0_i32_167, %c0_i32_168] : memref<2x8x128xf32, #tpu.memory_space<vmem>> -> memref<1x8x128xf32, #tpu.memory_space<vmem>>
      %260 = tpu.memref_squeeze %259 : memref<1x8x128xf32, #tpu.memory_space<vmem>> -> memref<8x128xf32, #tpu.memory_space<vmem>>
      %261 = tpu.memref_slice %arg14[%c0_i32_163, %c0_i32_164] : memref<2x2x!tpu.dma_semaphore, #tpu.memory_space<semaphore_mem>> -> memref<1x1x!tpu.dma_semaphore, #tpu.memory_space<semaphore_mem>>
      %262 = tpu.memref_squeeze %261 : memref<1x1x!tpu.dma_semaphore, #tpu.memory_space<semaphore_mem>> -> memref<!tpu.dma_semaphore, #tpu.memory_space<semaphore_mem>>
      tpu.enqueue_dma source(%258 : memref<8x128xf32, #tpu.memory_space<any>>) target(%260 : memref<8x128xf32, #tpu.memory_space<vmem>>) target_semaphore(%262 : memref<!tpu.dma_semaphore, #tpu.memory_space<semaphore_mem>>)
      %c0_i32_169 = arith.constant 0 : i32
      %c1_i32_170 = arith.constant 1 : i32
      %c0_i32_171 = arith.constant 0 : i32
      %c0_i32_172 = arith.constant 0 : i32
      %c0_i32_173 = arith.constant 0 : i32
      %263 = tpu.memref_slice %arg9[%c0_i32_172, %c0_i32_173] : memref<8x128xf32, #tpu.memory_space<any>> -> memref<8x128xf32, #tpu.memory_space<any>>
      %c0_i32_174 = arith.constant 0 : i32
      %c0_i32_175 = arith.constant 0 : i32
      %264 = tpu.memref_slice %arg13[%c0_i32_169, %c0_i32_174, %c0_i32_175] : memref<2x8x128xf32, #tpu.memory_space<vmem>> -> memref<1x8x128xf32, #tpu.memory_space<vmem>>
      %265 = tpu.memref_squeeze %264 : memref<1x8x128xf32, #tpu.memory_space<vmem>> -> memref<8x128xf32, #tpu.memory_space<vmem>>
      %266 = tpu.memref_slice %arg14[%c1_i32_170, %c0_i32_171] : memref<2x2x!tpu.dma_semaphore, #tpu.memory_space<semaphore_mem>> -> memref<1x1x!tpu.dma_semaphore, #tpu.memory_space<semaphore_mem>>
      %267 = tpu.memref_squeeze %266 : memref<1x1x!tpu.dma_semaphore, #tpu.memory_space<semaphore_mem>> -> memref<!tpu.dma_semaphore, #tpu.memory_space<semaphore_mem>>
      tpu.enqueue_dma source(%263 : memref<8x128xf32, #tpu.memory_space<any>>) target(%265 : memref<8x128xf32, #tpu.memory_space<vmem>>) target_semaphore(%267 : memref<!tpu.dma_semaphore, #tpu.memory_space<semaphore_mem>>)
      %c0_i32_176 = arith.constant 0 : i32
      %c0_i32_177 = arith.constant 0 : i32
      %c0_i32_178 = arith.constant 0 : i32
      %c0_i32_179 = arith.constant 0 : i32
      %c0_i32_180 = arith.constant 0 : i32
      %268 = tpu.memref_slice %arg4[%c0_i32_179, %c0_i32_180] : memref<8x128xf32, #tpu.memory_space<any>> -> memref<8x128xf32, #tpu.memory_space<any>>
      %c0_i32_181 = arith.constant 0 : i32
      %c0_i32_182 = arith.constant 0 : i32
      %269 = tpu.memref_slice %arg12[%c0_i32_176, %c0_i32_181, %c0_i32_182] : memref<2x8x128xf32, #tpu.memory_space<vmem>> -> memref<1x8x128xf32, #tpu.memory_space<vmem>>
      %270 = tpu.memref_squeeze %269 : memref<1x8x128xf32, #tpu.memory_space<vmem>> -> memref<8x128xf32, #tpu.memory_space<vmem>>
      %271 = tpu.memref_slice %arg14[%c0_i32_177, %c0_i32_178] : memref<2x2x!tpu.dma_semaphore, #tpu.memory_space<semaphore_mem>> -> memref<1x1x!tpu.dma_semaphore, #tpu.memory_space<semaphore_mem>>
      %272 = tpu.memref_squeeze %271 : memref<1x1x!tpu.dma_semaphore, #tpu.memory_space<semaphore_mem>> -> memref<!tpu.dma_semaphore, #tpu.memory_space<semaphore_mem>>
      tpu.wait_dma2 semaphore(%272 : memref<!tpu.dma_semaphore, #tpu.memory_space<semaphore_mem>>) src(%268 : memref<8x128xf32, #tpu.memory_space<any>>) dst(%270 : memref<8x128xf32, #tpu.memory_space<vmem>>)
      %c0_i32_183 = arith.constant 0 : i32
      %c1_i32_184 = arith.constant 1 : i32
      %c0_i32_185 = arith.constant 0 : i32
      %c0_i32_186 = arith.constant 0 : i32
      %c0_i32_187 = arith.constant 0 : i32
      %273 = tpu.memref_slice %arg9[%c0_i32_186, %c0_i32_187] : memref<8x128xf32, #tpu.memory_space<any>> -> memref<8x128xf32, #tpu.memory_space<any>>
      %c0_i32_188 = arith.constant 0 : i32
      %c0_i32_189 = arith.constant 0 : i32
      %274 = tpu.memref_slice %arg13[%c0_i32_183, %c0_i32_188, %c0_i32_189] : memref<2x8x128xf32, #tpu.memory_space<vmem>> -> memref<1x8x128xf32, #tpu.memory_space<vmem>>
      %275 = tpu.memref_squeeze %274 : memref<1x8x128xf32, #tpu.memory_space<vmem>> -> memref<8x128xf32, #tpu.memory_space<vmem>>
      %276 = tpu.memref_slice %arg14[%c1_i32_184, %c0_i32_185] : memref<2x2x!tpu.dma_semaphore, #tpu.memory_space<semaphore_mem>> -> memref<1x1x!tpu.dma_semaphore, #tpu.memory_space<semaphore_mem>>
      %277 = tpu.memref_squeeze %276 : memref<1x1x!tpu.dma_semaphore, #tpu.memory_space<semaphore_mem>> -> memref<!tpu.dma_semaphore, #tpu.memory_space<semaphore_mem>>
      tpu.wait_dma2 semaphore(%277 : memref<!tpu.dma_semaphore, #tpu.memory_space<semaphore_mem>>) src(%273 : memref<8x128xf32, #tpu.memory_space<any>>) dst(%275 : memref<8x128xf32, #tpu.memory_space<vmem>>)
      %c0_190 = arith.constant 0 : index
      %c0_191 = arith.constant 0 : index
      %c0_192 = arith.constant 0 : index
      %278 = vector.load %arg12[%c0_190, %c0_191, %c0_192] : memref<2x8x128xf32, #tpu.memory_space<vmem>>, vector<1x8x128xf32>
      %279 = vector.shape_cast %278 : vector<1x8x128xf32> to vector<8x128xf32>
      %c0_193 = arith.constant 0 : index
      %c0_194 = arith.constant 0 : index
      %c0_195 = arith.constant 0 : index
      %280 = vector.load %arg13[%c0_193, %c0_194, %c0_195] : memref<2x8x128xf32, #tpu.memory_space<vmem>>, vector<1x8x128xf32>
      %281 = vector.shape_cast %280 : vector<1x8x128xf32> to vector<8x128xf32>
      %282 = math.absf %279 : vector<8x128xf32>
      %cst_196 = arith.constant 0.000000e+00 : f32
      %283 = vector.broadcast %cst_196 : f32 to vector<8x128xf32>
      %284 = arith.subf %283, %282 : vector<8x128xf32>
      %285 = math.exp %284 : vector<8x128xf32>
      %cst_197 = arith.constant 1.000000e+00 : f32
      %286 = vector.broadcast %cst_197 : f32 to vector<8x128xf32>
      %287 = arith.addf %286, %285 : vector<8x128xf32>
      %288 = math.log %287 : vector<8x128xf32>
      %cst_198 = arith.constant 0.000000e+00 : f32
      %289 = vector.broadcast %cst_198 : f32 to vector<8x128xf32>
      %290 = arith.subf %289, %279 : vector<8x128xf32>
      %cst_199 = arith.constant 0.000000e+00 : f32
      %291 = vector.broadcast %cst_199 : f32 to vector<8x128xf32>
      %292 = arith.maximumf %290, %291 : vector<8x128xf32>
      %293 = arith.addf %288, %292 : vector<8x128xf32>
      %294 = vector.shape_cast %281 : vector<8x128xf32> to vector<1x8x128xf32>
      %cst_200 = arith.constant dense<0.000000e+00> : vector<1xf32>
      %295 = vector.multi_reduction <add>, %294, %cst_200 [1, 2] : vector<1x8x128xf32> to vector<1xf32>
      %296 = vector.shape_cast %295 : vector<1xf32> to vector<1x1x1xf32>
      %297 = vector.extract %296[0, 0, 0] : f32 from vector<1x1x1xf32>
      %cst_201 = arith.constant 1.000000e+00 : f32
      %298 = vector.broadcast %cst_201 : f32 to vector<8x128xf32>
      %299 = arith.subf %298, %281 : vector<8x128xf32>
      %300 = arith.mulf %299, %279 : vector<8x128xf32>
      %301 = arith.addf %300, %293 : vector<8x128xf32>
      %302 = vector.shape_cast %301 : vector<8x128xf32> to vector<1x8x128xf32>
      %cst_202 = arith.constant dense<0.000000e+00> : vector<1xf32>
      %303 = vector.multi_reduction <add>, %302, %cst_202 [1, 2] : vector<1x8x128xf32> to vector<1xf32>
      %304 = vector.shape_cast %303 : vector<1xf32> to vector<1x1x1xf32>
      %305 = vector.extract %304[0, 0, 0] : f32 from vector<1x1x1xf32>
      %306 = arith.mulf %281, %293 : vector<8x128xf32>
      %307 = vector.shape_cast %306 : vector<8x128xf32> to vector<1x8x128xf32>
      %cst_203 = arith.constant dense<0.000000e+00> : vector<1xf32>
      %308 = vector.multi_reduction <add>, %307, %cst_203 [1, 2] : vector<1x8x128xf32> to vector<1xf32>
      %309 = vector.shape_cast %308 : vector<1xf32> to vector<1x1x1xf32>
      %310 = vector.extract %309[0, 0, 0] : f32 from vector<1x1x1xf32>
      %cst_204 = arith.constant 0.000000e+00 : f32
      %311 = arith.addf %cst_204, %297 : f32
      %cst_205 = arith.constant 0.000000e+00 : f32
      %312 = arith.addf %cst_205, %305 : f32
      %cst_206 = arith.constant 0.000000e+00 : f32
      %313 = arith.addf %cst_206, %310 : f32
      %c3_i32 = arith.constant 3 : i32
      %314 = vector.broadcast %c3_i32 : i32 to vector<8x128xi32>
      %315 = arith.cmpi eq, %6, %314 : vector<8x128xi32>
      %c0_i32_207 = arith.constant 0 : i32
      %316 = vector.broadcast %c0_i32_207 : i32 to vector<8x128xi32>
      %317 = arith.cmpi eq, %7, %316 : vector<8x128xi32>
      %318 = arith.andi %315, %317 : vector<8x128xi1>
      %cst_208 = arith.constant 0.000000e+00 : f32
      %319 = vector.broadcast %311 : f32 to vector<8x128xf32>
      %320 = vector.broadcast %cst_208 : f32 to vector<8x128xf32>
      %321 = arith.select %318, %319, %320 : vector<8x128xi1>, vector<8x128xf32>
      %322 = arith.addf %257, %321 : vector<8x128xf32>
      %c3_i32_209 = arith.constant 3 : i32
      %323 = vector.broadcast %c3_i32_209 : i32 to vector<8x128xi32>
      %324 = arith.cmpi eq, %6, %323 : vector<8x128xi32>
      %c1_i32_210 = arith.constant 1 : i32
      %325 = vector.broadcast %c1_i32_210 : i32 to vector<8x128xi32>
      %326 = arith.cmpi eq, %7, %325 : vector<8x128xi32>
      %327 = arith.andi %324, %326 : vector<8x128xi1>
      %cst_211 = arith.constant 0.000000e+00 : f32
      %328 = vector.broadcast %312 : f32 to vector<8x128xf32>
      %329 = vector.broadcast %cst_211 : f32 to vector<8x128xf32>
      %330 = arith.select %327, %328, %329 : vector<8x128xi1>, vector<8x128xf32>
      %331 = arith.addf %322, %330 : vector<8x128xf32>
      %c3_i32_212 = arith.constant 3 : i32
      %332 = vector.broadcast %c3_i32_212 : i32 to vector<8x128xi32>
      %333 = arith.cmpi eq, %6, %332 : vector<8x128xi32>
      %c2_i32_213 = arith.constant 2 : i32
      %334 = vector.broadcast %c2_i32_213 : i32 to vector<8x128xi32>
      %335 = arith.cmpi eq, %7, %334 : vector<8x128xi32>
      %336 = arith.andi %333, %335 : vector<8x128xi1>
      %cst_214 = arith.constant 0.000000e+00 : f32
      %337 = vector.broadcast %313 : f32 to vector<8x128xf32>
      %338 = vector.broadcast %cst_214 : f32 to vector<8x128xf32>
      %339 = arith.select %336, %337, %338 : vector<8x128xi1>, vector<8x128xf32>
      %340 = arith.addf %331, %339 : vector<8x128xf32>
      %c0_i32_215 = arith.constant 0 : i32
      %c0_i32_216 = arith.constant 0 : i32
      %c0_i32_217 = arith.constant 0 : i32
      %c0_i32_218 = arith.constant 0 : i32
      %c0_i32_219 = arith.constant 0 : i32
      %341 = tpu.memref_slice %arg5[%c0_i32_218, %c0_i32_219] : memref<8x128xf32, #tpu.memory_space<any>> -> memref<8x128xf32, #tpu.memory_space<any>>
      %c0_i32_220 = arith.constant 0 : i32
      %c0_i32_221 = arith.constant 0 : i32
      %342 = tpu.memref_slice %arg12[%c0_i32_215, %c0_i32_220, %c0_i32_221] : memref<2x8x128xf32, #tpu.memory_space<vmem>> -> memref<1x8x128xf32, #tpu.memory_space<vmem>>
      %343 = tpu.memref_squeeze %342 : memref<1x8x128xf32, #tpu.memory_space<vmem>> -> memref<8x128xf32, #tpu.memory_space<vmem>>
      %344 = tpu.memref_slice %arg14[%c0_i32_216, %c0_i32_217] : memref<2x2x!tpu.dma_semaphore, #tpu.memory_space<semaphore_mem>> -> memref<1x1x!tpu.dma_semaphore, #tpu.memory_space<semaphore_mem>>
      %345 = tpu.memref_squeeze %344 : memref<1x1x!tpu.dma_semaphore, #tpu.memory_space<semaphore_mem>> -> memref<!tpu.dma_semaphore, #tpu.memory_space<semaphore_mem>>
      tpu.enqueue_dma source(%341 : memref<8x128xf32, #tpu.memory_space<any>>) target(%343 : memref<8x128xf32, #tpu.memory_space<vmem>>) target_semaphore(%345 : memref<!tpu.dma_semaphore, #tpu.memory_space<semaphore_mem>>)
      %c0_i32_222 = arith.constant 0 : i32
      %c1_i32_223 = arith.constant 1 : i32
      %c0_i32_224 = arith.constant 0 : i32
      %c0_i32_225 = arith.constant 0 : i32
      %c0_i32_226 = arith.constant 0 : i32
      %346 = tpu.memref_slice %arg10[%c0_i32_225, %c0_i32_226] : memref<8x128xf32, #tpu.memory_space<any>> -> memref<8x128xf32, #tpu.memory_space<any>>
      %c0_i32_227 = arith.constant 0 : i32
      %c0_i32_228 = arith.constant 0 : i32
      %347 = tpu.memref_slice %arg13[%c0_i32_222, %c0_i32_227, %c0_i32_228] : memref<2x8x128xf32, #tpu.memory_space<vmem>> -> memref<1x8x128xf32, #tpu.memory_space<vmem>>
      %348 = tpu.memref_squeeze %347 : memref<1x8x128xf32, #tpu.memory_space<vmem>> -> memref<8x128xf32, #tpu.memory_space<vmem>>
      %349 = tpu.memref_slice %arg14[%c1_i32_223, %c0_i32_224] : memref<2x2x!tpu.dma_semaphore, #tpu.memory_space<semaphore_mem>> -> memref<1x1x!tpu.dma_semaphore, #tpu.memory_space<semaphore_mem>>
      %350 = tpu.memref_squeeze %349 : memref<1x1x!tpu.dma_semaphore, #tpu.memory_space<semaphore_mem>> -> memref<!tpu.dma_semaphore, #tpu.memory_space<semaphore_mem>>
      tpu.enqueue_dma source(%346 : memref<8x128xf32, #tpu.memory_space<any>>) target(%348 : memref<8x128xf32, #tpu.memory_space<vmem>>) target_semaphore(%350 : memref<!tpu.dma_semaphore, #tpu.memory_space<semaphore_mem>>)
      %c0_i32_229 = arith.constant 0 : i32
      %c0_i32_230 = arith.constant 0 : i32
      %c0_i32_231 = arith.constant 0 : i32
      %c0_i32_232 = arith.constant 0 : i32
      %c0_i32_233 = arith.constant 0 : i32
      %351 = tpu.memref_slice %arg5[%c0_i32_232, %c0_i32_233] : memref<8x128xf32, #tpu.memory_space<any>> -> memref<8x128xf32, #tpu.memory_space<any>>
      %c0_i32_234 = arith.constant 0 : i32
      %c0_i32_235 = arith.constant 0 : i32
      %352 = tpu.memref_slice %arg12[%c0_i32_229, %c0_i32_234, %c0_i32_235] : memref<2x8x128xf32, #tpu.memory_space<vmem>> -> memref<1x8x128xf32, #tpu.memory_space<vmem>>
      %353 = tpu.memref_squeeze %352 : memref<1x8x128xf32, #tpu.memory_space<vmem>> -> memref<8x128xf32, #tpu.memory_space<vmem>>
      %354 = tpu.memref_slice %arg14[%c0_i32_230, %c0_i32_231] : memref<2x2x!tpu.dma_semaphore, #tpu.memory_space<semaphore_mem>> -> memref<1x1x!tpu.dma_semaphore, #tpu.memory_space<semaphore_mem>>
      %355 = tpu.memref_squeeze %354 : memref<1x1x!tpu.dma_semaphore, #tpu.memory_space<semaphore_mem>> -> memref<!tpu.dma_semaphore, #tpu.memory_space<semaphore_mem>>
      tpu.wait_dma2 semaphore(%355 : memref<!tpu.dma_semaphore, #tpu.memory_space<semaphore_mem>>) src(%351 : memref<8x128xf32, #tpu.memory_space<any>>) dst(%353 : memref<8x128xf32, #tpu.memory_space<vmem>>)
      %c0_i32_236 = arith.constant 0 : i32
      %c1_i32_237 = arith.constant 1 : i32
      %c0_i32_238 = arith.constant 0 : i32
      %c0_i32_239 = arith.constant 0 : i32
      %c0_i32_240 = arith.constant 0 : i32
      %356 = tpu.memref_slice %arg10[%c0_i32_239, %c0_i32_240] : memref<8x128xf32, #tpu.memory_space<any>> -> memref<8x128xf32, #tpu.memory_space<any>>
      %c0_i32_241 = arith.constant 0 : i32
      %c0_i32_242 = arith.constant 0 : i32
      %357 = tpu.memref_slice %arg13[%c0_i32_236, %c0_i32_241, %c0_i32_242] : memref<2x8x128xf32, #tpu.memory_space<vmem>> -> memref<1x8x128xf32, #tpu.memory_space<vmem>>
      %358 = tpu.memref_squeeze %357 : memref<1x8x128xf32, #tpu.memory_space<vmem>> -> memref<8x128xf32, #tpu.memory_space<vmem>>
      %359 = tpu.memref_slice %arg14[%c1_i32_237, %c0_i32_238] : memref<2x2x!tpu.dma_semaphore, #tpu.memory_space<semaphore_mem>> -> memref<1x1x!tpu.dma_semaphore, #tpu.memory_space<semaphore_mem>>
      %360 = tpu.memref_squeeze %359 : memref<1x1x!tpu.dma_semaphore, #tpu.memory_space<semaphore_mem>> -> memref<!tpu.dma_semaphore, #tpu.memory_space<semaphore_mem>>
      tpu.wait_dma2 semaphore(%360 : memref<!tpu.dma_semaphore, #tpu.memory_space<semaphore_mem>>) src(%356 : memref<8x128xf32, #tpu.memory_space<any>>) dst(%358 : memref<8x128xf32, #tpu.memory_space<vmem>>)
      %c0_243 = arith.constant 0 : index
      %c0_244 = arith.constant 0 : index
      %c0_245 = arith.constant 0 : index
      %361 = vector.load %arg12[%c0_243, %c0_244, %c0_245] : memref<2x8x128xf32, #tpu.memory_space<vmem>>, vector<1x8x128xf32>
      %362 = vector.shape_cast %361 : vector<1x8x128xf32> to vector<8x128xf32>
      %c0_246 = arith.constant 0 : index
      %c0_247 = arith.constant 0 : index
      %c0_248 = arith.constant 0 : index
      %363 = vector.load %arg13[%c0_246, %c0_247, %c0_248] : memref<2x8x128xf32, #tpu.memory_space<vmem>>, vector<1x8x128xf32>
      %364 = vector.shape_cast %363 : vector<1x8x128xf32> to vector<8x128xf32>
      %365 = math.absf %362 : vector<8x128xf32>
      %cst_249 = arith.constant 0.000000e+00 : f32
      %366 = vector.broadcast %cst_249 : f32 to vector<8x128xf32>
      %367 = arith.subf %366, %365 : vector<8x128xf32>
      %368 = math.exp %367 : vector<8x128xf32>
      %cst_250 = arith.constant 1.000000e+00 : f32
      %369 = vector.broadcast %cst_250 : f32 to vector<8x128xf32>
      %370 = arith.addf %369, %368 : vector<8x128xf32>
      %371 = math.log %370 : vector<8x128xf32>
      %cst_251 = arith.constant 0.000000e+00 : f32
      %372 = vector.broadcast %cst_251 : f32 to vector<8x128xf32>
      %373 = arith.subf %372, %362 : vector<8x128xf32>
      %cst_252 = arith.constant 0.000000e+00 : f32
      %374 = vector.broadcast %cst_252 : f32 to vector<8x128xf32>
      %375 = arith.maximumf %373, %374 : vector<8x128xf32>
      %376 = arith.addf %371, %375 : vector<8x128xf32>
      %377 = vector.shape_cast %364 : vector<8x128xf32> to vector<1x8x128xf32>
      %cst_253 = arith.constant dense<0.000000e+00> : vector<1xf32>
      %378 = vector.multi_reduction <add>, %377, %cst_253 [1, 2] : vector<1x8x128xf32> to vector<1xf32>
      %379 = vector.shape_cast %378 : vector<1xf32> to vector<1x1x1xf32>
      %380 = vector.extract %379[0, 0, 0] : f32 from vector<1x1x1xf32>
      %cst_254 = arith.constant 1.000000e+00 : f32
      %381 = vector.broadcast %cst_254 : f32 to vector<8x128xf32>
      %382 = arith.subf %381, %364 : vector<8x128xf32>
      %383 = arith.mulf %382, %362 : vector<8x128xf32>
      %384 = arith.addf %383, %376 : vector<8x128xf32>
      %385 = vector.shape_cast %384 : vector<8x128xf32> to vector<1x8x128xf32>
      %cst_255 = arith.constant dense<0.000000e+00> : vector<1xf32>
      %386 = vector.multi_reduction <add>, %385, %cst_255 [1, 2] : vector<1x8x128xf32> to vector<1xf32>
      %387 = vector.shape_cast %386 : vector<1xf32> to vector<1x1x1xf32>
      %388 = vector.extract %387[0, 0, 0] : f32 from vector<1x1x1xf32>
      %389 = arith.mulf %364, %376 : vector<8x128xf32>
      %390 = vector.shape_cast %389 : vector<8x128xf32> to vector<1x8x128xf32>
      %cst_256 = arith.constant dense<0.000000e+00> : vector<1xf32>
      %391 = vector.multi_reduction <add>, %390, %cst_256 [1, 2] : vector<1x8x128xf32> to vector<1xf32>
      %392 = vector.shape_cast %391 : vector<1xf32> to vector<1x1x1xf32>
      %393 = vector.extract %392[0, 0, 0] : f32 from vector<1x1x1xf32>
      %cst_257 = arith.constant 0.000000e+00 : f32
      %394 = arith.addf %cst_257, %380 : f32
      %cst_258 = arith.constant 0.000000e+00 : f32
      %395 = arith.addf %cst_258, %388 : f32
      %cst_259 = arith.constant 0.000000e+00 : f32
      %396 = arith.addf %cst_259, %393 : f32
      %c4_i32 = arith.constant 4 : i32
      %397 = vector.broadcast %c4_i32 : i32 to vector<8x128xi32>
      %398 = arith.cmpi eq, %6, %397 : vector<8x128xi32>
      %c0_i32_260 = arith.constant 0 : i32
      %399 = vector.broadcast %c0_i32_260 : i32 to vector<8x128xi32>
      %400 = arith.cmpi eq, %7, %399 : vector<8x128xi32>
      %401 = arith.andi %398, %400 : vector<8x128xi1>
      %cst_261 = arith.constant 0.000000e+00 : f32
      %402 = vector.broadcast %394 : f32 to vector<8x128xf32>
      %403 = vector.broadcast %cst_261 : f32 to vector<8x128xf32>
      %404 = arith.select %401, %402, %403 : vector<8x128xi1>, vector<8x128xf32>
      %405 = arith.addf %340, %404 : vector<8x128xf32>
      %c4_i32_262 = arith.constant 4 : i32
      %406 = vector.broadcast %c4_i32_262 : i32 to vector<8x128xi32>
      %407 = arith.cmpi eq, %6, %406 : vector<8x128xi32>
      %c1_i32_263 = arith.constant 1 : i32
      %408 = vector.broadcast %c1_i32_263 : i32 to vector<8x128xi32>
      %409 = arith.cmpi eq, %7, %408 : vector<8x128xi32>
      %410 = arith.andi %407, %409 : vector<8x128xi1>
      %cst_264 = arith.constant 0.000000e+00 : f32
      %411 = vector.broadcast %395 : f32 to vector<8x128xf32>
      %412 = vector.broadcast %cst_264 : f32 to vector<8x128xf32>
      %413 = arith.select %410, %411, %412 : vector<8x128xi1>, vector<8x128xf32>
      %414 = arith.addf %405, %413 : vector<8x128xf32>
      %c4_i32_265 = arith.constant 4 : i32
      %415 = vector.broadcast %c4_i32_265 : i32 to vector<8x128xi32>
      %416 = arith.cmpi eq, %6, %415 : vector<8x128xi32>
      %c2_i32_266 = arith.constant 2 : i32
      %417 = vector.broadcast %c2_i32_266 : i32 to vector<8x128xi32>
      %418 = arith.cmpi eq, %7, %417 : vector<8x128xi32>
      %419 = arith.andi %416, %418 : vector<8x128xi1>
      %cst_267 = arith.constant 0.000000e+00 : f32
      %420 = vector.broadcast %396 : f32 to vector<8x128xf32>
      %421 = vector.broadcast %cst_267 : f32 to vector<8x128xf32>
      %422 = arith.select %419, %420, %421 : vector<8x128xi1>, vector<8x128xf32>
      %423 = arith.addf %414, %422 : vector<8x128xf32>
      %c0_268 = arith.constant 0 : index
      %c0_269 = arith.constant 0 : index
      %424 = vector.load %arg11[%c0_268, %c0_269] : memref<8x128xf32, #tpu.memory_space<vmem>>, vector<8x128xf32>
      tpu.vector_store %arg11[%c0_268, %c0_269], %423 {strides = array<i32>} : memref<8x128xf32, #tpu.memory_space<vmem>>, vector<8x128xf32>,
    } else {
    }
    %c1_i32 = arith.constant 1 : i32
    %3 = arith.cmpi eq, %arg0, %c1_i32 : i32
    %4 = arith.extui %3 : i1 to i32
    %c0_i32_1 = arith.constant 0 : i32
    %5 = arith.cmpi ne, %4, %c0_i32_1 : i32
    scf.if %5 {
      %6 = tpu.iota {dimensions = array<i32: 0>} : vector<8x128xi32>
      %7 = tpu.iota {dimensions = array<i32: 1>} : vector<8x128xi32>
      %cst = arith.constant 0.000000e+00 : f32
      %8 = vector.broadcast %cst : f32 to vector<8x128xf32>
      %c0_i32_2 = arith.constant 0 : i32
      %c0_i32_3 = arith.constant 0 : i32
      %c0_i32_4 = arith.constant 0 : i32
      %c8_i32 = arith.constant 8 : i32
      %c0_i32_5 = arith.constant 0 : i32
      %9 = tpu.memref_slice %arg1[%c8_i32, %c0_i32_5] : memref<16x128xf32, #tpu.memory_space<any>> -> memref<8x128xf32, #tpu.memory_space<any>>
      %c0_i32_6 = arith.constant 0 : i32
      %c0_i32_7 = arith.constant 0 : i32
      %10 = tpu.memref_slice %arg12[%c0_i32_2, %c0_i32_6, %c0_i32_7] : memref<2x8x128xf32, #tpu.memory_space<vmem>> -> memref<1x8x128xf32, #tpu.memory_space<vmem>>
      %11 = tpu.memref_squeeze %10 : memref<1x8x128xf32, #tpu.memory_space<vmem>> -> memref<8x128xf32, #tpu.memory_space<vmem>>
      %12 = tpu.memref_slice %arg14[%c0_i32_3, %c0_i32_4] : memref<2x2x!tpu.dma_semaphore, #tpu.memory_space<semaphore_mem>> -> memref<1x1x!tpu.dma_semaphore, #tpu.memory_space<semaphore_mem>>
      %13 = tpu.memref_squeeze %12 : memref<1x1x!tpu.dma_semaphore, #tpu.memory_space<semaphore_mem>> -> memref<!tpu.dma_semaphore, #tpu.memory_space<semaphore_mem>>
      tpu.enqueue_dma source(%9 : memref<8x128xf32, #tpu.memory_space<any>>) target(%11 : memref<8x128xf32, #tpu.memory_space<vmem>>) target_semaphore(%13 : memref<!tpu.dma_semaphore, #tpu.memory_space<semaphore_mem>>)
      %c0_i32_8 = arith.constant 0 : i32
      %c1_i32_9 = arith.constant 1 : i32
      %c0_i32_10 = arith.constant 0 : i32
      %c8_i32_11 = arith.constant 8 : i32
      %c0_i32_12 = arith.constant 0 : i32
      %14 = tpu.memref_slice %arg6[%c8_i32_11, %c0_i32_12] : memref<16x128xf32, #tpu.memory_space<any>> -> memref<8x128xf32, #tpu.memory_space<any>>
      %c0_i32_13 = arith.constant 0 : i32
      %c0_i32_14 = arith.constant 0 : i32
      %15 = tpu.memref_slice %arg13[%c0_i32_8, %c0_i32_13, %c0_i32_14] : memref<2x8x128xf32, #tpu.memory_space<vmem>> -> memref<1x8x128xf32, #tpu.memory_space<vmem>>
      %16 = tpu.memref_squeeze %15 : memref<1x8x128xf32, #tpu.memory_space<vmem>> -> memref<8x128xf32, #tpu.memory_space<vmem>>
      %17 = tpu.memref_slice %arg14[%c1_i32_9, %c0_i32_10] : memref<2x2x!tpu.dma_semaphore, #tpu.memory_space<semaphore_mem>> -> memref<1x1x!tpu.dma_semaphore, #tpu.memory_space<semaphore_mem>>
      %18 = tpu.memref_squeeze %17 : memref<1x1x!tpu.dma_semaphore, #tpu.memory_space<semaphore_mem>> -> memref<!tpu.dma_semaphore, #tpu.memory_space<semaphore_mem>>
      tpu.enqueue_dma source(%14 : memref<8x128xf32, #tpu.memory_space<any>>) target(%16 : memref<8x128xf32, #tpu.memory_space<vmem>>) target_semaphore(%18 : memref<!tpu.dma_semaphore, #tpu.memory_space<semaphore_mem>>)
      %c0_i32_15 = arith.constant 0 : i32
      %c0_i32_16 = arith.constant 0 : i32
      %c0_i32_17 = arith.constant 0 : i32
      %c0_i32_18 = arith.constant 0 : i32
      %c0_i32_19 = arith.constant 0 : i32
      %19 = tpu.memref_slice %arg1[%c0_i32_18, %c0_i32_19] : memref<16x128xf32, #tpu.memory_space<any>> -> memref<8x128xf32, #tpu.memory_space<any>>
      %c0_i32_20 = arith.constant 0 : i32
      %c0_i32_21 = arith.constant 0 : i32
      %20 = tpu.memref_slice %arg12[%c0_i32_15, %c0_i32_20, %c0_i32_21] : memref<2x8x128xf32, #tpu.memory_space<vmem>> -> memref<1x8x128xf32, #tpu.memory_space<vmem>>
      %21 = tpu.memref_squeeze %20 : memref<1x8x128xf32, #tpu.memory_space<vmem>> -> memref<8x128xf32, #tpu.memory_space<vmem>>
      %22 = tpu.memref_slice %arg14[%c0_i32_16, %c0_i32_17] : memref<2x2x!tpu.dma_semaphore, #tpu.memory_space<semaphore_mem>> -> memref<1x1x!tpu.dma_semaphore, #tpu.memory_space<semaphore_mem>>
      %23 = tpu.memref_squeeze %22 : memref<1x1x!tpu.dma_semaphore, #tpu.memory_space<semaphore_mem>> -> memref<!tpu.dma_semaphore, #tpu.memory_space<semaphore_mem>>
      tpu.wait_dma2 semaphore(%23 : memref<!tpu.dma_semaphore, #tpu.memory_space<semaphore_mem>>) src(%19 : memref<8x128xf32, #tpu.memory_space<any>>) dst(%21 : memref<8x128xf32, #tpu.memory_space<vmem>>)
      %c0_i32_22 = arith.constant 0 : i32
      %c1_i32_23 = arith.constant 1 : i32
      %c0_i32_24 = arith.constant 0 : i32
      %c0_i32_25 = arith.constant 0 : i32
      %c0_i32_26 = arith.constant 0 : i32
      %24 = tpu.memref_slice %arg6[%c0_i32_25, %c0_i32_26] : memref<16x128xf32, #tpu.memory_space<any>> -> memref<8x128xf32, #tpu.memory_space<any>>
      %c0_i32_27 = arith.constant 0 : i32
      %c0_i32_28 = arith.constant 0 : i32
      %25 = tpu.memref_slice %arg13[%c0_i32_22, %c0_i32_27, %c0_i32_28] : memref<2x8x128xf32, #tpu.memory_space<vmem>> -> memref<1x8x128xf32, #tpu.memory_space<vmem>>
      %26 = tpu.memref_squeeze %25 : memref<1x8x128xf32, #tpu.memory_space<vmem>> -> memref<8x128xf32, #tpu.memory_space<vmem>>
      %27 = tpu.memref_slice %arg14[%c1_i32_23, %c0_i32_24] : memref<2x2x!tpu.dma_semaphore, #tpu.memory_space<semaphore_mem>> -> memref<1x1x!tpu.dma_semaphore, #tpu.memory_space<semaphore_mem>>
      %28 = tpu.memref_squeeze %27 : memref<1x1x!tpu.dma_semaphore, #tpu.memory_space<semaphore_mem>> -> memref<!tpu.dma_semaphore, #tpu.memory_space<semaphore_mem>>
      tpu.wait_dma2 semaphore(%28 : memref<!tpu.dma_semaphore, #tpu.memory_space<semaphore_mem>>) src(%24 : memref<8x128xf32, #tpu.memory_space<any>>) dst(%26 : memref<8x128xf32, #tpu.memory_space<vmem>>)
      %c0 = arith.constant 0 : index
      %c0_29 = arith.constant 0 : index
      %c0_30 = arith.constant 0 : index
      %29 = vector.load %arg12[%c0, %c0_29, %c0_30] : memref<2x8x128xf32, #tpu.memory_space<vmem>>, vector<1x8x128xf32>
      %30 = vector.shape_cast %29 : vector<1x8x128xf32> to vector<8x128xf32>
      %c0_31 = arith.constant 0 : index
      %c0_32 = arith.constant 0 : index
      %c0_33 = arith.constant 0 : index
      %31 = vector.load %arg13[%c0_31, %c0_32, %c0_33] : memref<2x8x128xf32, #tpu.memory_space<vmem>>, vector<1x8x128xf32>
      %32 = vector.shape_cast %31 : vector<1x8x128xf32> to vector<8x128xf32>
      %33 = math.absf %30 : vector<8x128xf32>
      %cst_34 = arith.constant 0.000000e+00 : f32
      %34 = vector.broadcast %cst_34 : f32 to vector<8x128xf32>
      %35 = arith.subf %34, %33 : vector<8x128xf32>
      %36 = math.exp %35 : vector<8x128xf32>
      %cst_35 = arith.constant 1.000000e+00 : f32
      %37 = vector.broadcast %cst_35 : f32 to vector<8x128xf32>
      %38 = arith.addf %37, %36 : vector<8x128xf32>
      %39 = math.log %38 : vector<8x128xf32>
      %cst_36 = arith.constant 0.000000e+00 : f32
      %40 = vector.broadcast %cst_36 : f32 to vector<8x128xf32>
      %41 = arith.subf %40, %30 : vector<8x128xf32>
      %cst_37 = arith.constant 0.000000e+00 : f32
      %42 = vector.broadcast %cst_37 : f32 to vector<8x128xf32>
      %43 = arith.maximumf %41, %42 : vector<8x128xf32>
      %44 = arith.addf %39, %43 : vector<8x128xf32>
      %45 = vector.shape_cast %32 : vector<8x128xf32> to vector<1x8x128xf32>
      %cst_38 = arith.constant dense<0.000000e+00> : vector<1xf32>
      %46 = vector.multi_reduction <add>, %45, %cst_38 [1, 2] : vector<1x8x128xf32> to vector<1xf32>
      %47 = vector.shape_cast %46 : vector<1xf32> to vector<1x1x1xf32>
      %48 = vector.extract %47[0, 0, 0] : f32 from vector<1x1x1xf32>
      %cst_39 = arith.constant 1.000000e+00 : f32
      %49 = vector.broadcast %cst_39 : f32 to vector<8x128xf32>
      %50 = arith.subf %49, %32 : vector<8x128xf32>
      %51 = arith.mulf %50, %30 : vector<8x128xf32>
      %52 = arith.addf %51, %44 : vector<8x128xf32>
      %53 = vector.shape_cast %52 : vector<8x128xf32> to vector<1x8x128xf32>
      %cst_40 = arith.constant dense<0.000000e+00> : vector<1xf32>
      %54 = vector.multi_reduction <add>, %53, %cst_40 [1, 2] : vector<1x8x128xf32> to vector<1xf32>
      %55 = vector.shape_cast %54 : vector<1xf32> to vector<1x1x1xf32>
      %56 = vector.extract %55[0, 0, 0] : f32 from vector<1x1x1xf32>
      %57 = arith.mulf %32, %44 : vector<8x128xf32>
      %58 = vector.shape_cast %57 : vector<8x128xf32> to vector<1x8x128xf32>
      %cst_41 = arith.constant dense<0.000000e+00> : vector<1xf32>
      %59 = vector.multi_reduction <add>, %58, %cst_41 [1, 2] : vector<1x8x128xf32> to vector<1xf32>
      %60 = vector.shape_cast %59 : vector<1xf32> to vector<1x1x1xf32>
      %61 = vector.extract %60[0, 0, 0] : f32 from vector<1x1x1xf32>
      %cst_42 = arith.constant 0.000000e+00 : f32
      %62 = arith.addf %cst_42, %48 : f32
      %cst_43 = arith.constant 0.000000e+00 : f32
      %63 = arith.addf %cst_43, %56 : f32
      %cst_44 = arith.constant 0.000000e+00 : f32
      %64 = arith.addf %cst_44, %61 : f32
      %c0_i32_45 = arith.constant 0 : i32
      %65 = vector.broadcast %c0_i32_45 : i32 to vector<8x128xi32>
      %66 = arith.cmpi eq, %6, %65 : vector<8x128xi32>
      %c0_i32_46 = arith.constant 0 : i32
      %67 = vector.broadcast %c0_i32_46 : i32 to vector<8x128xi32>
      %68 = arith.cmpi eq, %7, %67 : vector<8x128xi32>
      %69 = arith.andi %66, %68 : vector<8x128xi1>
      %cst_47 = arith.constant 0.000000e+00 : f32
      %70 = vector.broadcast %62 : f32 to vector<8x128xf32>
      %71 = vector.broadcast %cst_47 : f32 to vector<8x128xf32>
      %72 = arith.select %69, %70, %71 : vector<8x128xi1>, vector<8x128xf32>
      %73 = arith.addf %8, %72 : vector<8x128xf32>
      %c0_i32_48 = arith.constant 0 : i32
      %74 = vector.broadcast %c0_i32_48 : i32 to vector<8x128xi32>
      %75 = arith.cmpi eq, %6, %74 : vector<8x128xi32>
      %c1_i32_49 = arith.constant 1 : i32
      %76 = vector.broadcast %c1_i32_49 : i32 to vector<8x128xi32>
      %77 = arith.cmpi eq, %7, %76 : vector<8x128xi32>
      %78 = arith.andi %75, %77 : vector<8x128xi1>
      %cst_50 = arith.constant 0.000000e+00 : f32
      %79 = vector.broadcast %63 : f32 to vector<8x128xf32>
      %80 = vector.broadcast %cst_50 : f32 to vector<8x128xf32>
      %81 = arith.select %78, %79, %80 : vector<8x128xi1>, vector<8x128xf32>
      %82 = arith.addf %73, %81 : vector<8x128xf32>
      %c0_i32_51 = arith.constant 0 : i32
      %83 = vector.broadcast %c0_i32_51 : i32 to vector<8x128xi32>
      %84 = arith.cmpi eq, %6, %83 : vector<8x128xi32>
      %c2_i32 = arith.constant 2 : i32
      %85 = vector.broadcast %c2_i32 : i32 to vector<8x128xi32>
      %86 = arith.cmpi eq, %7, %85 : vector<8x128xi32>
      %87 = arith.andi %84, %86 : vector<8x128xi1>
      %cst_52 = arith.constant 0.000000e+00 : f32
      %88 = vector.broadcast %64 : f32 to vector<8x128xf32>
      %89 = vector.broadcast %cst_52 : f32 to vector<8x128xf32>
      %90 = arith.select %87, %88, %89 : vector<8x128xi1>, vector<8x128xf32>
      %91 = arith.addf %82, %90 : vector<8x128xf32>
      %c0_i32_53 = arith.constant 0 : i32
      %c0_i32_54 = arith.constant 0 : i32
      %c0_i32_55 = arith.constant 0 : i32
      %c8_i32_56 = arith.constant 8 : i32
      %c0_i32_57 = arith.constant 0 : i32
      %92 = tpu.memref_slice %arg2[%c8_i32_56, %c0_i32_57] : memref<16x128xf32, #tpu.memory_space<any>> -> memref<8x128xf32, #tpu.memory_space<any>>
      %c0_i32_58 = arith.constant 0 : i32
      %c0_i32_59 = arith.constant 0 : i32
      %93 = tpu.memref_slice %arg12[%c0_i32_53, %c0_i32_58, %c0_i32_59] : memref<2x8x128xf32, #tpu.memory_space<vmem>> -> memref<1x8x128xf32, #tpu.memory_space<vmem>>
      %94 = tpu.memref_squeeze %93 : memref<1x8x128xf32, #tpu.memory_space<vmem>> -> memref<8x128xf32, #tpu.memory_space<vmem>>
      %95 = tpu.memref_slice %arg14[%c0_i32_54, %c0_i32_55] : memref<2x2x!tpu.dma_semaphore, #tpu.memory_space<semaphore_mem>> -> memref<1x1x!tpu.dma_semaphore, #tpu.memory_space<semaphore_mem>>
      %96 = tpu.memref_squeeze %95 : memref<1x1x!tpu.dma_semaphore, #tpu.memory_space<semaphore_mem>> -> memref<!tpu.dma_semaphore, #tpu.memory_space<semaphore_mem>>
      tpu.enqueue_dma source(%92 : memref<8x128xf32, #tpu.memory_space<any>>) target(%94 : memref<8x128xf32, #tpu.memory_space<vmem>>) target_semaphore(%96 : memref<!tpu.dma_semaphore, #tpu.memory_space<semaphore_mem>>)
      %c0_i32_60 = arith.constant 0 : i32
      %c1_i32_61 = arith.constant 1 : i32
      %c0_i32_62 = arith.constant 0 : i32
      %c8_i32_63 = arith.constant 8 : i32
      %c0_i32_64 = arith.constant 0 : i32
      %97 = tpu.memref_slice %arg7[%c8_i32_63, %c0_i32_64] : memref<16x128xf32, #tpu.memory_space<any>> -> memref<8x128xf32, #tpu.memory_space<any>>
      %c0_i32_65 = arith.constant 0 : i32
      %c0_i32_66 = arith.constant 0 : i32
      %98 = tpu.memref_slice %arg13[%c0_i32_60, %c0_i32_65, %c0_i32_66] : memref<2x8x128xf32, #tpu.memory_space<vmem>> -> memref<1x8x128xf32, #tpu.memory_space<vmem>>
      %99 = tpu.memref_squeeze %98 : memref<1x8x128xf32, #tpu.memory_space<vmem>> -> memref<8x128xf32, #tpu.memory_space<vmem>>
      %100 = tpu.memref_slice %arg14[%c1_i32_61, %c0_i32_62] : memref<2x2x!tpu.dma_semaphore, #tpu.memory_space<semaphore_mem>> -> memref<1x1x!tpu.dma_semaphore, #tpu.memory_space<semaphore_mem>>
      %101 = tpu.memref_squeeze %100 : memref<1x1x!tpu.dma_semaphore, #tpu.memory_space<semaphore_mem>> -> memref<!tpu.dma_semaphore, #tpu.memory_space<semaphore_mem>>
      tpu.enqueue_dma source(%97 : memref<8x128xf32, #tpu.memory_space<any>>) target(%99 : memref<8x128xf32, #tpu.memory_space<vmem>>) target_semaphore(%101 : memref<!tpu.dma_semaphore, #tpu.memory_space<semaphore_mem>>)
      %c0_i32_67 = arith.constant 0 : i32
      %c0_i32_68 = arith.constant 0 : i32
      %c0_i32_69 = arith.constant 0 : i32
      %c0_i32_70 = arith.constant 0 : i32
      %c0_i32_71 = arith.constant 0 : i32
      %102 = tpu.memref_slice %arg2[%c0_i32_70, %c0_i32_71] : memref<16x128xf32, #tpu.memory_space<any>> -> memref<8x128xf32, #tpu.memory_space<any>>
      %c0_i32_72 = arith.constant 0 : i32
      %c0_i32_73 = arith.constant 0 : i32
      %103 = tpu.memref_slice %arg12[%c0_i32_67, %c0_i32_72, %c0_i32_73] : memref<2x8x128xf32, #tpu.memory_space<vmem>> -> memref<1x8x128xf32, #tpu.memory_space<vmem>>
      %104 = tpu.memref_squeeze %103 : memref<1x8x128xf32, #tpu.memory_space<vmem>> -> memref<8x128xf32, #tpu.memory_space<vmem>>
      %105 = tpu.memref_slice %arg14[%c0_i32_68, %c0_i32_69] : memref<2x2x!tpu.dma_semaphore, #tpu.memory_space<semaphore_mem>> -> memref<1x1x!tpu.dma_semaphore, #tpu.memory_space<semaphore_mem>>
      %106 = tpu.memref_squeeze %105 : memref<1x1x!tpu.dma_semaphore, #tpu.memory_space<semaphore_mem>> -> memref<!tpu.dma_semaphore, #tpu.memory_space<semaphore_mem>>
      tpu.wait_dma2 semaphore(%106 : memref<!tpu.dma_semaphore, #tpu.memory_space<semaphore_mem>>) src(%102 : memref<8x128xf32, #tpu.memory_space<any>>) dst(%104 : memref<8x128xf32, #tpu.memory_space<vmem>>)
      %c0_i32_74 = arith.constant 0 : i32
      %c1_i32_75 = arith.constant 1 : i32
      %c0_i32_76 = arith.constant 0 : i32
      %c0_i32_77 = arith.constant 0 : i32
      %c0_i32_78 = arith.constant 0 : i32
      %107 = tpu.memref_slice %arg7[%c0_i32_77, %c0_i32_78] : memref<16x128xf32, #tpu.memory_space<any>> -> memref<8x128xf32, #tpu.memory_space<any>>
      %c0_i32_79 = arith.constant 0 : i32
      %c0_i32_80 = arith.constant 0 : i32
      %108 = tpu.memref_slice %arg13[%c0_i32_74, %c0_i32_79, %c0_i32_80] : memref<2x8x128xf32, #tpu.memory_space<vmem>> -> memref<1x8x128xf32, #tpu.memory_space<vmem>>
      %109 = tpu.memref_squeeze %108 : memref<1x8x128xf32, #tpu.memory_space<vmem>> -> memref<8x128xf32, #tpu.memory_space<vmem>>
      %110 = tpu.memref_slice %arg14[%c1_i32_75, %c0_i32_76] : memref<2x2x!tpu.dma_semaphore, #tpu.memory_space<semaphore_mem>> -> memref<1x1x!tpu.dma_semaphore, #tpu.memory_space<semaphore_mem>>
      %111 = tpu.memref_squeeze %110 : memref<1x1x!tpu.dma_semaphore, #tpu.memory_space<semaphore_mem>> -> memref<!tpu.dma_semaphore, #tpu.memory_space<semaphore_mem>>
      tpu.wait_dma2 semaphore(%111 : memref<!tpu.dma_semaphore, #tpu.memory_space<semaphore_mem>>) src(%107 : memref<8x128xf32, #tpu.memory_space<any>>) dst(%109 : memref<8x128xf32, #tpu.memory_space<vmem>>)
      %c0_81 = arith.constant 0 : index
      %c0_82 = arith.constant 0 : index
      %c0_83 = arith.constant 0 : index
      %112 = vector.load %arg12[%c0_81, %c0_82, %c0_83] : memref<2x8x128xf32, #tpu.memory_space<vmem>>, vector<1x8x128xf32>
      %113 = vector.shape_cast %112 : vector<1x8x128xf32> to vector<8x128xf32>
      %c0_84 = arith.constant 0 : index
      %c0_85 = arith.constant 0 : index
      %c0_86 = arith.constant 0 : index
      %114 = vector.load %arg13[%c0_84, %c0_85, %c0_86] : memref<2x8x128xf32, #tpu.memory_space<vmem>>, vector<1x8x128xf32>
      %115 = vector.shape_cast %114 : vector<1x8x128xf32> to vector<8x128xf32>
      %116 = math.absf %113 : vector<8x128xf32>
      %cst_87 = arith.constant 0.000000e+00 : f32
      %117 = vector.broadcast %cst_87 : f32 to vector<8x128xf32>
      %118 = arith.subf %117, %116 : vector<8x128xf32>
      %119 = math.exp %118 : vector<8x128xf32>
      %cst_88 = arith.constant 1.000000e+00 : f32
      %120 = vector.broadcast %cst_88 : f32 to vector<8x128xf32>
      %121 = arith.addf %120, %119 : vector<8x128xf32>
      %122 = math.log %121 : vector<8x128xf32>
      %cst_89 = arith.constant 0.000000e+00 : f32
      %123 = vector.broadcast %cst_89 : f32 to vector<8x128xf32>
      %124 = arith.subf %123, %113 : vector<8x128xf32>
      %cst_90 = arith.constant 0.000000e+00 : f32
      %125 = vector.broadcast %cst_90 : f32 to vector<8x128xf32>
      %126 = arith.maximumf %124, %125 : vector<8x128xf32>
      %127 = arith.addf %122, %126 : vector<8x128xf32>
      %128 = vector.shape_cast %115 : vector<8x128xf32> to vector<1x8x128xf32>
      %cst_91 = arith.constant dense<0.000000e+00> : vector<1xf32>
      %129 = vector.multi_reduction <add>, %128, %cst_91 [1, 2] : vector<1x8x128xf32> to vector<1xf32>
      %130 = vector.shape_cast %129 : vector<1xf32> to vector<1x1x1xf32>
      %131 = vector.extract %130[0, 0, 0] : f32 from vector<1x1x1xf32>
      %cst_92 = arith.constant 1.000000e+00 : f32
      %132 = vector.broadcast %cst_92 : f32 to vector<8x128xf32>
      %133 = arith.subf %132, %115 : vector<8x128xf32>
      %134 = arith.mulf %133, %113 : vector<8x128xf32>
      %135 = arith.addf %134, %127 : vector<8x128xf32>
      %136 = vector.shape_cast %135 : vector<8x128xf32> to vector<1x8x128xf32>
      %cst_93 = arith.constant dense<0.000000e+00> : vector<1xf32>
      %137 = vector.multi_reduction <add>, %136, %cst_93 [1, 2] : vector<1x8x128xf32> to vector<1xf32>
      %138 = vector.shape_cast %137 : vector<1xf32> to vector<1x1x1xf32>
      %139 = vector.extract %138[0, 0, 0] : f32 from vector<1x1x1xf32>
      %140 = arith.mulf %115, %127 : vector<8x128xf32>
      %141 = vector.shape_cast %140 : vector<8x128xf32> to vector<1x8x128xf32>
      %cst_94 = arith.constant dense<0.000000e+00> : vector<1xf32>
      %142 = vector.multi_reduction <add>, %141, %cst_94 [1, 2] : vector<1x8x128xf32> to vector<1xf32>
      %143 = vector.shape_cast %142 : vector<1xf32> to vector<1x1x1xf32>
      %144 = vector.extract %143[0, 0, 0] : f32 from vector<1x1x1xf32>
      %cst_95 = arith.constant 0.000000e+00 : f32
      %145 = arith.addf %cst_95, %131 : f32
      %cst_96 = arith.constant 0.000000e+00 : f32
      %146 = arith.addf %cst_96, %139 : f32
      %cst_97 = arith.constant 0.000000e+00 : f32
      %147 = arith.addf %cst_97, %144 : f32
      %c1_i32_98 = arith.constant 1 : i32
      %148 = vector.broadcast %c1_i32_98 : i32 to vector<8x128xi32>
      %149 = arith.cmpi eq, %6, %148 : vector<8x128xi32>
      %c0_i32_99 = arith.constant 0 : i32
      %150 = vector.broadcast %c0_i32_99 : i32 to vector<8x128xi32>
      %151 = arith.cmpi eq, %7, %150 : vector<8x128xi32>
      %152 = arith.andi %149, %151 : vector<8x128xi1>
      %cst_100 = arith.constant 0.000000e+00 : f32
      %153 = vector.broadcast %145 : f32 to vector<8x128xf32>
      %154 = vector.broadcast %cst_100 : f32 to vector<8x128xf32>
      %155 = arith.select %152, %153, %154 : vector<8x128xi1>, vector<8x128xf32>
      %156 = arith.addf %91, %155 : vector<8x128xf32>
      %c1_i32_101 = arith.constant 1 : i32
      %157 = vector.broadcast %c1_i32_101 : i32 to vector<8x128xi32>
      %158 = arith.cmpi eq, %6, %157 : vector<8x128xi32>
      %c1_i32_102 = arith.constant 1 : i32
      %159 = vector.broadcast %c1_i32_102 : i32 to vector<8x128xi32>
      %160 = arith.cmpi eq, %7, %159 : vector<8x128xi32>
      %161 = arith.andi %158, %160 : vector<8x128xi1>
      %cst_103 = arith.constant 0.000000e+00 : f32
      %162 = vector.broadcast %146 : f32 to vector<8x128xf32>
      %163 = vector.broadcast %cst_103 : f32 to vector<8x128xf32>
      %164 = arith.select %161, %162, %163 : vector<8x128xi1>, vector<8x128xf32>
      %165 = arith.addf %156, %164 : vector<8x128xf32>
      %c1_i32_104 = arith.constant 1 : i32
      %166 = vector.broadcast %c1_i32_104 : i32 to vector<8x128xi32>
      %167 = arith.cmpi eq, %6, %166 : vector<8x128xi32>
      %c2_i32_105 = arith.constant 2 : i32
      %168 = vector.broadcast %c2_i32_105 : i32 to vector<8x128xi32>
      %169 = arith.cmpi eq, %7, %168 : vector<8x128xi32>
      %170 = arith.andi %167, %169 : vector<8x128xi1>
      %cst_106 = arith.constant 0.000000e+00 : f32
      %171 = vector.broadcast %147 : f32 to vector<8x128xf32>
      %172 = vector.broadcast %cst_106 : f32 to vector<8x128xf32>
      %173 = arith.select %170, %171, %172 : vector<8x128xi1>, vector<8x128xf32>
      %174 = arith.addf %165, %173 : vector<8x128xf32>
      %c0_107 = arith.constant 0 : index
      %c0_108 = arith.constant 0 : index
      %175 = vector.load %arg11[%c0_107, %c0_108] : memref<8x128xf32, #tpu.memory_space<vmem>>, vector<8x128xf32>
      tpu.vector_store %arg11[%c0_107, %c0_108], %174 {strides = array<i32>} : memref<8x128xf32, #tpu.memory_space<vmem>>, vector<8x128xf32>,
    } else {
    }
    return
  }
  func.func @transform_10(%arg0: i32) -> (i32, i32) {
    %c0_i32 = arith.constant 0 : i32
    %c0_i32_0 = arith.constant 0 : i32
    return %arg0, %c0_i32 : i32, i32
  }
}

</mosaic_0001>

<llo_original>
// kernel: _aux_weight_loss5_fused.1
$region0: #{_aux_weight_loss5_fused.1}
  #allocation0 [shape = 'u32[]', space=smem, size = 0x4, offset = 0x4, fixed_abs, tag = 'smem constant byte address 0x4 - core index']
  #allocation1 [shape = 'u32[72,128]{1,0:T(1,128)}', space=vmem, size = 0x9000, scoped, tag = 'internal scratch']
  #allocation2 [shape = 'f32[2,8,128]{2,1,0:T(8,128)}', space=vmem, size = 0x2000, scoped, tag = 'scratch operand']
  #allocation3 [shape = 'f32[2,8,128]{2,1,0:T(8,128)}', space=vmem, size = 0x2000, scoped, tag = 'scratch operand']
  #allocation4 [shape = 's32[4]{0}', space=sflag, size = 0x10, scoped, tag = 'scratch operand']
  #allocation5 [shape = 's32[]', space=sflag, size = 0x4, offset = 0, fixed_abs, tag = 'sflag constant byte address 0x0 - dummy sync flag']
  #allocation6 [shape = 's32[]', space=sflag, size = 0x4, offset = 0, fixed_abs, tag = 'sflag constant byte address 0x0 - dummy sync flag']
  #allocation7 [shape = 's32[]', space=sflag, size = 0x4, offset = 0, fixed_abs, tag = 'sflag constant byte address 0x0 - dummy sync flag']
  #allocation8 [shape = 's32[]', space=sflag, size = 0x4, offset = 0, fixed_abs, tag = 'sflag constant byte address 0x0 - dummy sync flag']
  #allocation9 [shape = 's32[]', space=sflag, size = 0x4, offset = 0, fixed_abs, tag = 'sflag constant byte address 0x0 - dummy sync flag']
  #allocation10 [shape = 's32[]', space=sflag, size = 0x4, offset = 0, fixed_abs, tag = 'sflag constant byte address 0x0 - dummy sync flag']
  #allocation11 [shape = 's32[]', space=sflag, size = 0x4, offset = 0, fixed_abs, tag = 'sflag constant byte address 0x0 - dummy sync flag']
  #allocation12 [shape = 's32[]', space=sflag, size = 0x4, offset = 0, fixed_abs, tag = 'sflag constant byte address 0x0 - dummy sync flag']
  #allocation13 [shape = 's32[]', space=sflag, size = 0x4, offset = 0, fixed_abs, tag = 'sflag constant byte address 0x0 - dummy sync flag']
  #allocation14 [shape = 's32[]', space=sflag, size = 0x4, offset = 0, fixed_abs, tag = 'sflag constant byte address 0x0 - dummy sync flag']
  #allocation15 [shape = 's32[]', space=sflag, size = 0x4, offset = 0, fixed_abs, tag = 'sflag constant byte address 0x0 - dummy sync flag']
  #allocation16 [shape = 's32[]', space=sflag, size = 0x4, offset = 0, fixed_abs, tag = 'sflag constant byte address 0x0 - dummy sync flag']
  #allocation17 [shape = 's32[]', space=sflag, size = 0x4, offset = 0, fixed_abs, tag = 'sflag constant byte address 0x0 - dummy sync flag']
  #allocation18 [shape = 's32[]', space=sflag, size = 0x4, offset = 0, fixed_abs, tag = 'sflag constant byte address 0x0 - dummy sync flag']
  %s0 = inlined_call_operand.vmem [shape: f32[16,128], index: 0, kind: input, shape index: {}]
  %s1 = inlined_call_operand.vmem [shape: f32[16,128], index: 1, kind: input, shape index: {}]
  %s2 = inlined_call_operand.vmem [shape: f32[8,128], index: 2, kind: input, shape index: {}]
  %s3 = inlined_call_operand.vmem [shape: f32[8,128], index: 3, kind: input, shape index: {}]
  %s4 = inlined_call_operand.vmem [shape: f32[8,128], index: 4, kind: input, shape index: {}]
  %s5 = inlined_call_operand.vmem [shape: f32[16,128], index: 5, kind: input, shape index: {}]
  %s6 = inlined_call_operand.vmem [shape: f32[16,128], index: 6, kind: input, shape index: {}]
  %s7 = inlined_call_operand.vmem [shape: f32[8,128], index: 7, kind: input, shape index: {}]
  %s8 = inlined_call_operand.vmem [shape: f32[8,128], index: 8, kind: input, shape index: {}]
  %s9 = inlined_call_operand.vmem [shape: f32[8,128], index: 9, kind: input, shape index: {}]
  %s10 = inlined_call_operand.vmem [shape: f32[16,128], index: 10, kind: output, shape index: {}]
  %s11 = sld [smem:[#allocation0]]
  $region509: #{_aux_weight_loss5_fused.1} parent=0
    _
  %s13 = ssub.s32 1, %s11
  %s14 = scalar_select 0, %s13, %s11
  loop: start=0, step=1, limit=3
  $region2: #{_aux_weight_loss5_fused.1} parent=0 // loop_pre_header
    _
  $region3: #{_aux_weight_loss5_fused.1} parent=0 // loop_header
    %s16 = sphi 0, %s20
    %p17 = scmp.ge.s32.totalorder %s16, 3
    %s25 = sphi 0, %s27
    %s28 = sphi 0, %s25
    %s38 = sphi 0, %s28
  $region4: #{_aux_weight_loss5_fused.1} parent=0 // loop_header_branch
    %19 = sbr.rel (%p17) target = $region8
  $region5: #{_aux_weight_loss5_fused.1} parent=0 // loop_body
    %s21 = ssub.s32 %s16, 1
    %s22 = sadd.s32 %s16, 1
    %s23 = ssub.s32 %s16, %s22
    %p24 = scmp.eq.s32.totalorder %s23, 0
    %s26 = sadd.s32 %s25, 1
    %s27 = scalar_select %p24, %s25, %s26
    %p29 = pneg %p24
    %p30 = scmp.eq.s32.totalorder %s16, 1
    %p31 = por %p29, %p30
    %p32 = scmp.ne.s32.totalorder %s25, %s28
    %p33 = scmp.eq.s32.totalorder %s16, 0
    %p34 = por %p32, %p33
    %p35 = scmp.ne.s32.totalorder %s25, %s28
    %p36 = scmp.eq.s32.totalorder %s21, 1
    %p37 = por %p35, %p36
    %p39 = scmp.ne.s32.totalorder %s28, %s38
    %p40 = scmp.eq.s32.totalorder %s21, 0
    %p41 = por %p39, %p40
    %p42 = scmp.lt.s32.totalorder %s16, 2
    // Predicated region
    $region9: #{_aux_weight_loss5_fused.1} parent=5 // pred_check
      %p43 = pneg %p42
    $region10: #{_aux_weight_loss5_fused.1} parent=5 // pred_check_branch
      %45 = sbr.rel (%p43) target = $region12
    $region11: #{_aux_weight_loss5_fused.1} parent=5 // pred_region
      %p46 = pneg %p34
      %p47 = pneg %p31
      %p48 = scmp.lt.s32.totalorder %s16, 1
      %s49 = scalar_select %p48, %s16, 1
      %s50 = smul.addr %s49, 8
      %s51 = scalar_lea.vmem %s10, %s50
      %p52 = scmp.lt.s32.totalorder %s16, 1
      %s53 = scalar_select %p52, %s16, 1
      %s54 = smul.addr %s53, 8
      %s55 = scalar_lea.vmem %s10, %s54
      %p56 = scmp.eq.s32.totalorder %s16, 0
      // Predicated region
      $region13: #{_aux_weight_loss5_fused.1} parent=11 // pred_check
        %p57 = pneg %p56
      $region14: #{_aux_weight_loss5_fused.1} parent=11 // pred_check_branch
        %59 = sbr.rel (%p57) target = $region16
      $region15: #{_aux_weight_loss5_fused.1} parent=11 // pred_region
        %v60 = vlaneseq
        %v61 = vshrl.u32 %v60, 7
        %v62 = vlaneseq
        %v63 = vand.u32 %v62, 127
        // Predicated region
        $region17: #{_aux_weight_loss5_fused.1} parent=15 // pred_check
          _
        $region18: #{_aux_weight_loss5_fused.1} parent=15 // pred_check_branch
          %65 = sbr.rel (0) target = $region20
        $region19: #{_aux_weight_loss5_fused.1} parent=15 // pred_region
          // Predicated region
          $region32: #{_aux_weight_loss5_fused.1} parent=19 // pred_check
            _
          $region33: #{_aux_weight_loss5_fused.1} parent=19 // pred_check_branch
            %81 = sbr.rel (0) target = $region35
          $region34: #{_aux_weight_loss5_fused.1} parent=19 // pred_region
            loop: start=0, step=1, limit=1
            $region36: #{_aux_weight_loss5_fused.1} parent=34 // loop_pre_header
              _
            $region37: #{_aux_weight_loss5_fused.1} parent=34 // loop_header
              %s83 = sphi 0, %s87
              %p84 = scmp.ge.s32.totalorder %s83, 1
              %s88 = sphi %s0, %s0
              %s89 = sphi [#allocation2], [#allocation2]
            $region38: #{_aux_weight_loss5_fused.1} parent=34 // loop_header_branch
              %86 = sbr.rel (%p84) target = $region42
            $region39: #{_aux_weight_loss5_fused.1} parent=34 // loop_body
              %v90 = vld [vmem:[%s88] sm:$0xff]
              %91 = vst [vmem:[%s89] sm:$0xff] %v90
            $region40: #{_aux_weight_loss5_fused.1} parent=34 // loop_footer
              %s87 = sadd.s32 1, %s83
            $region41: #{_aux_weight_loss5_fused.1} parent=34 // loop_footer_branch
              %82 = sbr.rel target = $region37
            $region42: #{_aux_weight_loss5_fused.1} parent=34 // loop_exit
              _
          $region35: #{_aux_weight_loss5_fused.1} parent=19 // pred_fallthru
            _
          // Predicated region
          $region43: #{_aux_weight_loss5_fused.1} parent=19 // pred_check
            _
          $region44: #{_aux_weight_loss5_fused.1} parent=19 // pred_check_branch
            %93 = sbr.rel target = $region46
          $region45: #{_aux_weight_loss5_fused.1} parent=19 // pred_region
            _
          $region46: #{_aux_weight_loss5_fused.1} parent=19 // pred_fallthru
            _
        $region20: #{_aux_weight_loss5_fused.1} parent=15 // pred_fallthru
          _
        // Predicated region
        $region21: #{_aux_weight_loss5_fused.1} parent=15 // pred_check
          _
        $region22: #{_aux_weight_loss5_fused.1} parent=15 // pred_check_branch
          %67 = sbr.rel target = $region24
        $region23: #{_aux_weight_loss5_fused.1} parent=15 // pred_region
          %s69 = ssub.s32 256, 1
          loop: start=0, step=1, limit=1
          $region25: #{_aux_weight_loss5_fused.1} parent=23 // loop_pre_header
            _
          $region26: #{_aux_weight_loss5_fused.1} parent=23 // loop_header
            %s71 = sphi 0, %s75
            %p72 = scmp.ge.s32.totalorder %s71, 1
            %s76 = sphi %s0, %s0
            %s77 = sphi [#allocation2], [#allocation2]
          $region27: #{_aux_weight_loss5_fused.1} parent=23 // loop_header_branch
            %74 = sbr.rel (%p72) target = $region31
          $region28: #{_aux_weight_loss5_fused.1} parent=23 // loop_body
            %v78 = vld [vmem:[%s76] sm:%s69]
            %79 = vst [vmem:[%s77] sm:%s69] %v78
          $region29: #{_aux_weight_loss5_fused.1} parent=23 // loop_footer
            %s75 = sadd.s32 1, %s71
          $region30: #{_aux_weight_loss5_fused.1} parent=23 // loop_footer_branch
            %70 = sbr.rel target = $region26
          $region31: #{_aux_weight_loss5_fused.1} parent=23 // loop_exit
            _
        $region24: #{_aux_weight_loss5_fused.1} parent=15 // pred_fallthru
          _
        // Predicated region
        $region47: #{_aux_weight_loss5_fused.1} parent=15 // pred_check
          _
        $region48: #{_aux_weight_loss5_fused.1} parent=15 // pred_check_branch
          %96 = sbr.rel (0) target = $region50
        $region49: #{_aux_weight_loss5_fused.1} parent=15 // pred_region
          %97 = vsyncadd [#allocation4], 128
        $region50: #{_aux_weight_loss5_fused.1} parent=15 // pred_fallthru
          _
        %s98 = scalar_lea.sflag [#allocation4], 2
        // Predicated region
        $region51: #{_aux_weight_loss5_fused.1} parent=15 // pred_check
          _
        $region52: #{_aux_weight_loss5_fused.1} parent=15 // pred_check_branch
          %100 = sbr.rel (0) target = $region54
        $region53: #{_aux_weight_loss5_fused.1} parent=15 // pred_region
          // Predicated region
          $region66: #{_aux_weight_loss5_fused.1} parent=53 // pred_check
            _
          $region67: #{_aux_weight_loss5_fused.1} parent=53 // pred_check_branch
            %116 = sbr.rel (0) target = $region69
          $region68: #{_aux_weight_loss5_fused.1} parent=53 // pred_region
            loop: start=0, step=1, limit=1
            $region70: #{_aux_weight_loss5_fused.1} parent=68 // loop_pre_header
              _
            $region71: #{_aux_weight_loss5_fused.1} parent=68 // loop_header
              %s118 = sphi 0, %s122
              %p119 = scmp.ge.s32.totalorder %s118, 1
              %s123 = sphi %s5, %s5
              %s124 = sphi [#allocation3], [#allocation3]
            $region72: #{_aux_weight_loss5_fused.1} parent=68 // loop_header_branch
              %121 = sbr.rel (%p119) target = $region76
            $region73: #{_aux_weight_loss5_fused.1} parent=68 // loop_body
              %v125 = vld [vmem:[%s123] sm:$0xff]
              %126 = vst [vmem:[%s124] sm:$0xff] %v125
            $region74: #{_aux_weight_loss5_fused.1} parent=68 // loop_footer
              %s122 = sadd.s32 1, %s118
            $region75: #{_aux_weight_loss5_fused.1} parent=68 // loop_footer_branch
              %117 = sbr.rel target = $region71
            $region76: #{_aux_weight_loss5_fused.1} parent=68 // loop_exit
              _
          $region69: #{_aux_weight_loss5_fused.1} parent=53 // pred_fallthru
            _
          // Predicated region
          $region77: #{_aux_weight_loss5_fused.1} parent=53 // pred_check
            _
          $region78: #{_aux_weight_loss5_fused.1} parent=53 // pred_check_branch
            %128 = sbr.rel target = $region80
          $region79: #{_aux_weight_loss5_fused.1} parent=53 // pred_region
            _
          $region80: #{_aux_weight_loss5_fused.1} parent=53 // pred_fallthru
            _
        $region54: #{_aux_weight_loss5_fused.1} parent=15 // pred_fallthru
          _
        // Predicated region
        $region55: #{_aux_weight_loss5_fused.1} parent=15 // pred_check
          _
        $region56: #{_aux_weight_loss5_fused.1} parent=15 // pred_check_branch
          %102 = sbr.rel target = $region58
        $region57: #{_aux_weight_loss5_fused.1} parent=15 // pred_region
          %s104 = ssub.s32 256, 1
          loop: start=0, step=1, limit=1
          $region59: #{_aux_weight_loss5_fused.1} parent=57 // loop_pre_header
            _
          $region60: #{_aux_weight_loss5_fused.1} parent=57 // loop_header
            %s106 = sphi 0, %s110
            %p107 = scmp.ge.s32.totalorder %s106, 1
            %s111 = sphi %s5, %s5
            %s112 = sphi [#allocation3], [#allocation3]
          $region61: #{_aux_weight_loss5_fused.1} parent=57 // loop_header_branch
            %109 = sbr.rel (%p107) target = $region65
          $region62: #{_aux_weight_loss5_fused.1} parent=57 // loop_body
            %v113 = vld [vmem:[%s111] sm:%s104]
            %114 = vst [vmem:[%s112] sm:%s104] %v113
          $region63: #{_aux_weight_loss5_fused.1} parent=57 // loop_footer
            %s110 = sadd.s32 1, %s106
          $region64: #{_aux_weight_loss5_fused.1} parent=57 // loop_footer_branch
            %105 = sbr.rel target = $region60
          $region65: #{_aux_weight_loss5_fused.1} parent=57 // loop_exit
            _
        $region58: #{_aux_weight_loss5_fused.1} parent=15 // pred_fallthru
          _
        // Predicated region
        $region81: #{_aux_weight_loss5_fused.1} parent=15 // pred_check
          _
        $region82: #{_aux_weight_loss5_fused.1} parent=15 // pred_check_branch
          %131 = sbr.rel (0) target = $region84
        $region83: #{_aux_weight_loss5_fused.1} parent=15 // pred_region
          %132 = vsyncadd %s98, 128
        $region84: #{_aux_weight_loss5_fused.1} parent=15 // pred_fallthru
          _
        %s133 = smul.u32 8, 1
        %s134 = sshll.u32 %s133, 4
        %135 = dma.done [#allocation4], %s134
        %s136 = sshll.u32 %s133, 4
        %137 = dma.done %s98, %s136
        %v138 = vld [vmem:[#allocation2] sm:$0xff]
        %v139 = vld [vmem:[#allocation3] sm:$0xff]
        %v140 = vand.u32 2147483647, %v138
        %v141 = vsub.f32 0.0, %v140
        %v142 = vmul.f32 %v141, 1.442695
        %v143 = vpow.pop %v142
        %v144 = vadd.f32 %v143, 1.0
        %v145 = vlog2.pop %v144
        %v146 = vmul.f32 %v145, 0.6931472
        %v147 = vsub.f32 0.0, %v138
        %v148 = vmax.f32 %v147, 0.0
        %v149 = vadd.f32 %v146, %v148
        %150 = vadd.xlane.f32.xlu0 %v139
        %v151 = vpop.xlane.xlu0 %150
        %v152 = vrot.slane %v151, 4
        %v153 = vadd.f32 %v151, %v152
        %v154 = vrot.slane %v153, 2
        %v155 = vadd.f32 %v153, %v154
        %v156 = vrot.slane %v155, 1
        %v157 = vadd.f32 %v155, %v156
        %s158 = vtos %v157
        %v159 = vsub.f32 1.0, %v139
        %v160 = vmul.f32 %v159, %v138
        %v161 = vadd.f32 %v160, %v149
        %162 = vadd.xlane.f32.xlu0 %v161
        %v163 = vpop.xlane.xlu0 %162
        %v164 = vrot.slane %v163, 4
        %v165 = vadd.f32 %v163, %v164
        %v166 = vrot.slane %v165, 2
        %v167 = vadd.f32 %v165, %v166
        %v168 = vrot.slane %v167, 1
        %v169 = vadd.f32 %v167, %v168
        %s170 = vtos %v169
        %v171 = vmul.f32 %v139, %v149
        %172 = vadd.xlane.f32.xlu0 %v171
        %v173 = vpop.xlane.xlu0 %172
        %v174 = vrot.slane %v173, 4
        %v175 = vadd.f32 %v173, %v174
        %v176 = vrot.slane %v175, 2
        %v177 = vadd.f32 %v175, %v176
        %v178 = vrot.slane %v177, 1
        %v179 = vadd.f32 %v177, %v178
        %s180 = vtos %v179
        %s181 = sadd.f32 %s158, 0.0
        %s182 = sadd.f32 %s170, 0.0
        %s183 = sadd.f32 %s180, 0.0
        %vm184 = vcmp.eq.s32.totalorder %v61, 0
        %vm185 = vcmp.eq.s32.totalorder %v63, 0
        %vm186 = vmand %vm184, %vm185
        %v187 = vstv %s181
        %v188 = vsel %vm186, %v187, 0.0
        %v189 = vadd.f32 %v188, 0.0
        %vm190 = vcmp.eq.s32.totalorder %v63, 1
        %vm191 = vmand %vm184, %vm190
        %v192 = vstv %s182
        %v193 = vsel %vm191, %v192, 0.0
        %v194 = vadd.f32 %v189, %v193
        %vm195 = vcmp.eq.s32.totalorder %v63, 2
        %vm196 = vmand %vm184, %vm195
        %v197 = vstv %s183
        %v198 = vsel %vm196, %v197, 0.0
        %v199 = vadd.f32 %v194, %v198
        // Predicated region
        $region85: #{_aux_weight_loss5_fused.1} parent=15 // pred_check
          _
        $region86: #{_aux_weight_loss5_fused.1} parent=15 // pred_check_branch
          %201 = sbr.rel (0) target = $region88
        $region87: #{_aux_weight_loss5_fused.1} parent=15 // pred_region
          // Predicated region
          $region100: #{_aux_weight_loss5_fused.1} parent=87 // pred_check
            _
          $region101: #{_aux_weight_loss5_fused.1} parent=87 // pred_check_branch
            %217 = sbr.rel (0) target = $region103
          $region102: #{_aux_weight_loss5_fused.1} parent=87 // pred_region
            loop: start=0, step=1, limit=1
            $region104: #{_aux_weight_loss5_fused.1} parent=102 // loop_pre_header
              _
            $region105: #{_aux_weight_loss5_fused.1} parent=102 // loop_header
              %s219 = sphi 0, %s223
              %p220 = scmp.ge.s32.totalorder %s219, 1
              %s224 = sphi %s1, %s1
              %s225 = sphi [#allocation2], [#allocation2]
            $region106: #{_aux_weight_loss5_fused.1} parent=102 // loop_header_branch
              %222 = sbr.rel (%p220) target = $region110
            $region107: #{_aux_weight_loss5_fused.1} parent=102 // loop_body
              %v226 = vld [vmem:[%s224] sm:$0xff]
              %227 = vst [vmem:[%s225] sm:$0xff] %v226
            $region108: #{_aux_weight_loss5_fused.1} parent=102 // loop_footer
              %s223 = sadd.s32 1, %s219
            $region109: #{_aux_weight_loss5_fused.1} parent=102 // loop_footer_branch
              %218 = sbr.rel target = $region105
            $region110: #{_aux_weight_loss5_fused.1} parent=102 // loop_exit
              _
          $region103: #{_aux_weight_loss5_fused.1} parent=87 // pred_fallthru
            _
          // Predicated region
          $region111: #{_aux_weight_loss5_fused.1} parent=87 // pred_check
            _
          $region112: #{_aux_weight_loss5_fused.1} parent=87 // pred_check_branch
            %229 = sbr.rel target = $region114
          $region113: #{_aux_weight_loss5_fused.1} parent=87 // pred_region
            _
          $region114: #{_aux_weight_loss5_fused.1} parent=87 // pred_fallthru
            _
        $region88: #{_aux_weight_loss5_fused.1} parent=15 // pred_fallthru
          _
        // Predicated region
        $region89: #{_aux_weight_loss5_fused.1} parent=15 // pred_check
          _
        $region90: #{_aux_weight_loss5_fused.1} parent=15 // pred_check_branch
          %203 = sbr.rel target = $region92
        $region91: #{_aux_weight_loss5_fused.1} parent=15 // pred_region
          %s205 = ssub.s32 256, 1
          loop: start=0, step=1, limit=1
          $region93: #{_aux_weight_loss5_fused.1} parent=91 // loop_pre_header
            _
          $region94: #{_aux_weight_loss5_fused.1} parent=91 // loop_header
            %s207 = sphi 0, %s211
            %p208 = scmp.ge.s32.totalorder %s207, 1
            %s212 = sphi %s1, %s1
            %s213 = sphi [#allocation2], [#allocation2]
          $region95: #{_aux_weight_loss5_fused.1} parent=91 // loop_header_branch
            %210 = sbr.rel (%p208) target = $region99
          $region96: #{_aux_weight_loss5_fused.1} parent=91 // loop_body
            %v214 = vld [vmem:[%s212] sm:%s205]
            %215 = vst [vmem:[%s213] sm:%s205] %v214
          $region97: #{_aux_weight_loss5_fused.1} parent=91 // loop_footer
            %s211 = sadd.s32 1, %s207
          $region98: #{_aux_weight_loss5_fused.1} parent=91 // loop_footer_branch
            %206 = sbr.rel target = $region94
          $region99: #{_aux_weight_loss5_fused.1} parent=91 // loop_exit
            _
        $region92: #{_aux_weight_loss5_fused.1} parent=15 // pred_fallthru
          _
        // Predicated region
        $region115: #{_aux_weight_loss5_fused.1} parent=15 // pred_check
          _
        $region116: #{_aux_weight_loss5_fused.1} parent=15 // pred_check_branch
          %232 = sbr.rel (0) target = $region118
        $region117: #{_aux_weight_loss5_fused.1} parent=15 // pred_region
          %233 = vsyncadd [#allocation4], 128
        $region118: #{_aux_weight_loss5_fused.1} parent=15 // pred_fallthru
          _
        // Predicated region
        $region119: #{_aux_weight_loss5_fused.1} parent=15 // pred_check
          _
        $region120: #{_aux_weight_loss5_fused.1} parent=15 // pred_check_branch
          %235 = sbr.rel (0) target = $region122
        $region121: #{_aux_weight_loss5_fused.1} parent=15 // pred_region
          // Predicated region
          $region134: #{_aux_weight_loss5_fused.1} parent=121 // pred_check
            _
          $region135: #{_aux_weight_loss5_fused.1} parent=121 // pred_check_branch
            %251 = sbr.rel (0) target = $region137
          $region136: #{_aux_weight_loss5_fused.1} parent=121 // pred_region
            loop: start=0, step=1, limit=1
            $region138: #{_aux_weight_loss5_fused.1} parent=136 // loop_pre_header
              _
            $region139: #{_aux_weight_loss5_fused.1} parent=136 // loop_header
              %s253 = sphi 0, %s257
              %p254 = scmp.ge.s32.totalorder %s253, 1
              %s258 = sphi %s6, %s6
              %s259 = sphi [#allocation3], [#allocation3]
            $region140: #{_aux_weight_loss5_fused.1} parent=136 // loop_header_branch
              %256 = sbr.rel (%p254) target = $region144
            $region141: #{_aux_weight_loss5_fused.1} parent=136 // loop_body
              %v260 = vld [vmem:[%s258] sm:$0xff]
              %261 = vst [vmem:[%s259] sm:$0xff] %v260
            $region142: #{_aux_weight_loss5_fused.1} parent=136 // loop_footer
              %s257 = sadd.s32 1, %s253
            $region143: #{_aux_weight_loss5_fused.1} parent=136 // loop_footer_branch
              %252 = sbr.rel target = $region139
            $region144: #{_aux_weight_loss5_fused.1} parent=136 // loop_exit
              _
          $region137: #{_aux_weight_loss5_fused.1} parent=121 // pred_fallthru
            _
          // Predicated region
          $region145: #{_aux_weight_loss5_fused.1} parent=121 // pred_check
            _
          $region146: #{_aux_weight_loss5_fused.1} parent=121 // pred_check_branch
            %263 = sbr.rel target = $region148
          $region147: #{_aux_weight_loss5_fused.1} parent=121 // pred_region
            _
          $region148: #{_aux_weight_loss5_fused.1} parent=121 // pred_fallthru
            _
        $region122: #{_aux_weight_loss5_fused.1} parent=15 // pred_fallthru
          _
        // Predicated region
        $region123: #{_aux_weight_loss5_fused.1} parent=15 // pred_check
          _
        $region124: #{_aux_weight_loss5_fused.1} parent=15 // pred_check_branch
          %237 = sbr.rel target = $region126
        $region125: #{_aux_weight_loss5_fused.1} parent=15 // pred_region
          %s239 = ssub.s32 256, 1
          loop: start=0, step=1, limit=1
          $region127: #{_aux_weight_loss5_fused.1} parent=125 // loop_pre_header
            _
          $region128: #{_aux_weight_loss5_fused.1} parent=125 // loop_header
            %s241 = sphi 0, %s245
            %p242 = scmp.ge.s32.totalorder %s241, 1
            %s246 = sphi %s6, %s6
            %s247 = sphi [#allocation3], [#allocation3]
          $region129: #{_aux_weight_loss5_fused.1} parent=125 // loop_header_branch
            %244 = sbr.rel (%p242) target = $region133
          $region130: #{_aux_weight_loss5_fused.1} parent=125 // loop_body
            %v248 = vld [vmem:[%s246] sm:%s239]
            %249 = vst [vmem:[%s247] sm:%s239] %v248
          $region131: #{_aux_weight_loss5_fused.1} parent=125 // loop_footer
            %s245 = sadd.s32 1, %s241
          $region132: #{_aux_weight_loss5_fused.1} parent=125 // loop_footer_branch
            %240 = sbr.rel target = $region128
          $region133: #{_aux_weight_loss5_fused.1} parent=125 // loop_exit
            _
        $region126: #{_aux_weight_loss5_fused.1} parent=15 // pred_fallthru
          _
        // Predicated region
        $region149: #{_aux_weight_loss5_fused.1} parent=15 // pred_check
          _
        $region150: #{_aux_weight_loss5_fused.1} parent=15 // pred_check_branch
          %266 = sbr.rel (0) target = $region152
        $region151: #{_aux_weight_loss5_fused.1} parent=15 // pred_region
          %267 = vsyncadd %s98, 128
        $region152: #{_aux_weight_loss5_fused.1} parent=15 // pred_fallthru
          _
        %s268 = sshll.u32 %s133, 4
        %269 = dma.done [#allocation4], %s268
        %s270 = sshll.u32 %s133, 4
        %271 = dma.done %s98, %s270
        %v272 = vld [vmem:[#allocation2] sm:$0xff]
        %v273 = vld [vmem:[#allocation3] sm:$0xff]
        %v274 = vand.u32 2147483647, %v272
        %v275 = vsub.f32 0.0, %v274
        %v276 = vmul.f32 %v275, 1.442695
        %v277 = vpow.pop %v276
        %v278 = vadd.f32 %v277, 1.0
        %v279 = vlog2.pop %v278
        %v280 = vmul.f32 %v279, 0.6931472
        %v281 = vsub.f32 0.0, %v272
        %v282 = vmax.f32 %v281, 0.0
        %v283 = vadd.f32 %v280, %v282
        %284 = vadd.xlane.f32.xlu0 %v273
        %v285 = vpop.xlane.xlu0 %284
        %v286 = vrot.slane %v285, 4
        %v287 = vadd.f32 %v285, %v286
        %v288 = vrot.slane %v287, 2
        %v289 = vadd.f32 %v287, %v288
        %v290 = vrot.slane %v289, 1
        %v291 = vadd.f32 %v289, %v290
        %s292 = vtos %v291
        %v293 = vsub.f32 1.0, %v273
        %v294 = vmul.f32 %v293, %v272
        %v295 = vadd.f32 %v294, %v283
        %296 = vadd.xlane.f32.xlu0 %v295
        %v297 = vpop.xlane.xlu0 %296
        %v298 = vrot.slane %v297, 4
        %v299 = vadd.f32 %v297, %v298
        %v300 = vrot.slane %v299, 2
        %v301 = vadd.f32 %v299, %v300
        %v302 = vrot.slane %v301, 1
        %v303 = vadd.f32 %v301, %v302
        %s304 = vtos %v303
        %v305 = vmul.f32 %v273, %v283
        %306 = vadd.xlane.f32.xlu0 %v305
        %v307 = vpop.xlane.xlu0 %306
        %v308 = vrot.slane %v307, 4
        %v309 = vadd.f32 %v307, %v308
        %v310 = vrot.slane %v309, 2
        %v311 = vadd.f32 %v309, %v310
        %v312 = vrot.slane %v311, 1
        %v313 = vadd.f32 %v311, %v312
        %s314 = vtos %v313
        %s315 = sadd.f32 %s292, 0.0
        %s316 = sadd.f32 %s304, 0.0
        %s317 = sadd.f32 %s314, 0.0
        %vm318 = vcmp.eq.s32.totalorder %v61, 1
        %vm319 = vmand %vm318, %vm185
        %v320 = vstv %s315
        %v321 = vsel %vm319, %v320, 0.0
        %v322 = vadd.f32 %v199, %v321
        %vm323 = vmand %vm318, %vm190
        %v324 = vstv %s316
        %v325 = vsel %vm323, %v324, 0.0
        %v326 = vadd.f32 %v322, %v325
        %vm327 = vmand %vm318, %vm195
        %v328 = vstv %s317
        %v329 = vsel %vm327, %v328, 0.0
        %v330 = vadd.f32 %v326, %v329
        // Predicated region
        $region153: #{_aux_weight_loss5_fused.1} parent=15 // pred_check
          _
        $region154: #{_aux_weight_loss5_fused.1} parent=15 // pred_check_branch
          %332 = sbr.rel (0) target = $region156
        $region155: #{_aux_weight_loss5_fused.1} parent=15 // pred_region
          // Predicated region
          $region168: #{_aux_weight_loss5_fused.1} parent=155 // pred_check
            _
          $region169: #{_aux_weight_loss5_fused.1} parent=155 // pred_check_branch
            %348 = sbr.rel (0) target = $region171
          $region170: #{_aux_weight_loss5_fused.1} parent=155 // pred_region
            loop: start=0, step=1, limit=1
            $region172: #{_aux_weight_loss5_fused.1} parent=170 // loop_pre_header
              _
            $region173: #{_aux_weight_loss5_fused.1} parent=170 // loop_header
              %s350 = sphi 0, %s354
              %p351 = scmp.ge.s32.totalorder %s350, 1
              %s355 = sphi %s2, %s2
              %s356 = sphi [#allocation2], [#allocation2]
            $region174: #{_aux_weight_loss5_fused.1} parent=170 // loop_header_branch
              %353 = sbr.rel (%p351) target = $region178
            $region175: #{_aux_weight_loss5_fused.1} parent=170 // loop_body
              %v357 = vld [vmem:[%s355] sm:$0xff]
              %358 = vst [vmem:[%s356] sm:$0xff] %v357
            $region176: #{_aux_weight_loss5_fused.1} parent=170 // loop_footer
              %s354 = sadd.s32 1, %s350
            $region177: #{_aux_weight_loss5_fused.1} parent=170 // loop_footer_branch
              %349 = sbr.rel target = $region173
            $region178: #{_aux_weight_loss5_fused.1} parent=170 // loop_exit
              _
          $region171: #{_aux_weight_loss5_fused.1} parent=155 // pred_fallthru
            _
          // Predicated region
          $region179: #{_aux_weight_loss5_fused.1} parent=155 // pred_check
            _
          $region180: #{_aux_weight_loss5_fused.1} parent=155 // pred_check_branch
            %360 = sbr.rel target = $region182
          $region181: #{_aux_weight_loss5_fused.1} parent=155 // pred_region
            _
          $region182: #{_aux_weight_loss5_fused.1} parent=155 // pred_fallthru
            _
        $region156: #{_aux_weight_loss5_fused.1} parent=15 // pred_fallthru
          _
        // Predicated region
        $region157: #{_aux_weight_loss5_fused.1} parent=15 // pred_check
          _
        $region158: #{_aux_weight_loss5_fused.1} parent=15 // pred_check_branch
          %334 = sbr.rel target = $region160
        $region159: #{_aux_weight_loss5_fused.1} parent=15 // pred_region
          %s336 = ssub.s32 256, 1
          loop: start=0, step=1, limit=1
          $region161: #{_aux_weight_loss5_fused.1} parent=159 // loop_pre_header
            _
          $region162: #{_aux_weight_loss5_fused.1} parent=159 // loop_header
            %s338 = sphi 0, %s342
            %p339 = scmp.ge.s32.totalorder %s338, 1
            %s343 = sphi %s2, %s2
            %s344 = sphi [#allocation2], [#allocation2]
          $region163: #{_aux_weight_loss5_fused.1} parent=159 // loop_header_branch
            %341 = sbr.rel (%p339) target = $region167
          $region164: #{_aux_weight_loss5_fused.1} parent=159 // loop_body
            %v345 = vld [vmem:[%s343] sm:%s336]
            %346 = vst [vmem:[%s344] sm:%s336] %v345
          $region165: #{_aux_weight_loss5_fused.1} parent=159 // loop_footer
            %s342 = sadd.s32 1, %s338
          $region166: #{_aux_weight_loss5_fused.1} parent=159 // loop_footer_branch
            %337 = sbr.rel target = $region162
          $region167: #{_aux_weight_loss5_fused.1} parent=159 // loop_exit
            _
        $region160: #{_aux_weight_loss5_fused.1} parent=15 // pred_fallthru
          _
        // Predicated region
        $region183: #{_aux_weight_loss5_fused.1} parent=15 // pred_check
          _
        $region184: #{_aux_weight_loss5_fused.1} parent=15 // pred_check_branch
          %363 = sbr.rel (0) target = $region186
        $region185: #{_aux_weight_loss5_fused.1} parent=15 // pred_region
          %364 = vsyncadd [#allocation4], 128
        $region186: #{_aux_weight_loss5_fused.1} parent=15 // pred_fallthru
          _
        // Predicated region
        $region187: #{_aux_weight_loss5_fused.1} parent=15 // pred_check
          _
        $region188: #{_aux_weight_loss5_fused.1} parent=15 // pred_check_branch
          %366 = sbr.rel (0) target = $region190
        $region189: #{_aux_weight_loss5_fused.1} parent=15 // pred_region
          // Predicated region
          $region202: #{_aux_weight_loss5_fused.1} parent=189 // pred_check
            _
          $region203: #{_aux_weight_loss5_fused.1} parent=189 // pred_check_branch
            %382 = sbr.rel (0) target = $region205
          $region204: #{_aux_weight_loss5_fused.1} parent=189 // pred_region
            loop: start=0, step=1, limit=1
            $region206: #{_aux_weight_loss5_fused.1} parent=204 // loop_pre_header
              _
            $region207: #{_aux_weight_loss5_fused.1} parent=204 // loop_header
              %s384 = sphi 0, %s388
              %p385 = scmp.ge.s32.totalorder %s384, 1
              %s389 = sphi %s7, %s7
              %s390 = sphi [#allocation3], [#allocation3]
            $region208: #{_aux_weight_loss5_fused.1} parent=204 // loop_header_branch
              %387 = sbr.rel (%p385) target = $region212
            $region209: #{_aux_weight_loss5_fused.1} parent=204 // loop_body
              %v391 = vld [vmem:[%s389] sm:$0xff]
              %392 = vst [vmem:[%s390] sm:$0xff] %v391
            $region210: #{_aux_weight_loss5_fused.1} parent=204 // loop_footer
              %s388 = sadd.s32 1, %s384
            $region211: #{_aux_weight_loss5_fused.1} parent=204 // loop_footer_branch
              %383 = sbr.rel target = $region207
            $region212: #{_aux_weight_loss5_fused.1} parent=204 // loop_exit
              _
          $region205: #{_aux_weight_loss5_fused.1} parent=189 // pred_fallthru
            _
          // Predicated region
          $region213: #{_aux_weight_loss5_fused.1} parent=189 // pred_check
            _
          $region214: #{_aux_weight_loss5_fused.1} parent=189 // pred_check_branch
            %394 = sbr.rel target = $region216
          $region215: #{_aux_weight_loss5_fused.1} parent=189 // pred_region
            _
          $region216: #{_aux_weight_loss5_fused.1} parent=189 // pred_fallthru
            _
        $region190: #{_aux_weight_loss5_fused.1} parent=15 // pred_fallthru
          _
        // Predicated region
        $region191: #{_aux_weight_loss5_fused.1} parent=15 // pred_check
          _
        $region192: #{_aux_weight_loss5_fused.1} parent=15 // pred_check_branch
          %368 = sbr.rel target = $region194
        $region193: #{_aux_weight_loss5_fused.1} parent=15 // pred_region
          %s370 = ssub.s32 256, 1
          loop: start=0, step=1, limit=1
          $region195: #{_aux_weight_loss5_fused.1} parent=193 // loop_pre_header
            _
          $region196: #{_aux_weight_loss5_fused.1} parent=193 // loop_header
            %s372 = sphi 0, %s376
            %p373 = scmp.ge.s32.totalorder %s372, 1
            %s377 = sphi %s7, %s7
            %s378 = sphi [#allocation3], [#allocation3]
          $region197: #{_aux_weight_loss5_fused.1} parent=193 // loop_header_branch
            %375 = sbr.rel (%p373) target = $region201
          $region198: #{_aux_weight_loss5_fused.1} parent=193 // loop_body
            %v379 = vld [vmem:[%s377] sm:%s370]
            %380 = vst [vmem:[%s378] sm:%s370] %v379
          $region199: #{_aux_weight_loss5_fused.1} parent=193 // loop_footer
            %s376 = sadd.s32 1, %s372
          $region200: #{_aux_weight_loss5_fused.1} parent=193 // loop_footer_branch
            %371 = sbr.rel target = $region196
          $region201: #{_aux_weight_loss5_fused.1} parent=193 // loop_exit
            _
        $region194: #{_aux_weight_loss5_fused.1} parent=15 // pred_fallthru
          _
        // Predicated region
        $region217: #{_aux_weight_loss5_fused.1} parent=15 // pred_check
          _
        $region218: #{_aux_weight_loss5_fused.1} parent=15 // pred_check_branch
          %397 = sbr.rel (0) target = $region220
        $region219: #{_aux_weight_loss5_fused.1} parent=15 // pred_region
          %398 = vsyncadd %s98, 128
        $region220: #{_aux_weight_loss5_fused.1} parent=15 // pred_fallthru
          _
        %s399 = sshll.u32 %s133, 4
        %400 = dma.done [#allocation4], %s399
        %s401 = sshll.u32 %s133, 4
        %402 = dma.done %s98, %s401
        %v403 = vld [vmem:[#allocation2] sm:$0xff]
        %v404 = vld [vmem:[#allocation3] sm:$0xff]
        %v405 = vand.u32 2147483647, %v403
        %v406 = vsub.f32 0.0, %v405
        %v407 = vmul.f32 %v406, 1.442695
        %v408 = vpow.pop %v407
        %v409 = vadd.f32 %v408, 1.0
        %v410 = vlog2.pop %v409
        %v411 = vmul.f32 %v410, 0.6931472
        %v412 = vsub.f32 0.0, %v403
        %v413 = vmax.f32 %v412, 0.0
        %v414 = vadd.f32 %v411, %v413
        %415 = vadd.xlane.f32.xlu0 %v404
        %v416 = vpop.xlane.xlu0 %415
        %v417 = vrot.slane %v416, 4
        %v418 = vadd.f32 %v416, %v417
        %v419 = vrot.slane %v418, 2
        %v420 = vadd.f32 %v418, %v419
        %v421 = vrot.slane %v420, 1
        %v422 = vadd.f32 %v420, %v421
        %s423 = vtos %v422
        %v424 = vsub.f32 1.0, %v404
        %v425 = vmul.f32 %v424, %v403
        %v426 = vadd.f32 %v425, %v414
        %427 = vadd.xlane.f32.xlu0 %v426
        %v428 = vpop.xlane.xlu0 %427
        %v429 = vrot.slane %v428, 4
        %v430 = vadd.f32 %v428, %v429
        %v431 = vrot.slane %v430, 2
        %v432 = vadd.f32 %v430, %v431
        %v433 = vrot.slane %v432, 1
        %v434 = vadd.f32 %v432, %v433
        %s435 = vtos %v434
        %v436 = vmul.f32 %v404, %v414
        %437 = vadd.xlane.f32.xlu0 %v436
        %v438 = vpop.xlane.xlu0 %437
        %v439 = vrot.slane %v438, 4
        %v440 = vadd.f32 %v438, %v439
        %v441 = vrot.slane %v440, 2
        %v442 = vadd.f32 %v440, %v441
        %v443 = vrot.slane %v442, 1
        %v444 = vadd.f32 %v442, %v443
        %s445 = vtos %v444
        %s446 = sadd.f32 %s423, 0.0
        %s447 = sadd.f32 %s435, 0.0
        %s448 = sadd.f32 %s445, 0.0
        %vm449 = vcmp.eq.s32.totalorder %v61, 2
        %vm450 = vmand %vm449, %vm185
        %v451 = vstv %s446
        %v452 = vsel %vm450, %v451, 0.0
        %v453 = vadd.f32 %v330, %v452
        %vm454 = vmand %vm449, %vm190
        %v455 = vstv %s447
        %v456 = vsel %vm454, %v455, 0.0
        %v457 = vadd.f32 %v453, %v456
        %vm458 = vmand %vm449, %vm195
        %v459 = vstv %s448
        %v460 = vsel %vm458, %v459, 0.0
        %v461 = vadd.f32 %v457, %v460
        // Predicated region
        $region221: #{_aux_weight_loss5_fused.1} parent=15 // pred_check
          _
        $region222: #{_aux_weight_loss5_fused.1} parent=15 // pred_check_branch
          %463 = sbr.rel (0) target = $region224
        $region223: #{_aux_weight_loss5_fused.1} parent=15 // pred_region
          // Predicated region
          $region236: #{_aux_weight_loss5_fused.1} parent=223 // pred_check
            _
          $region237: #{_aux_weight_loss5_fused.1} parent=223 // pred_check_branch
            %479 = sbr.rel (0) target = $region239
          $region238: #{_aux_weight_loss5_fused.1} parent=223 // pred_region
            loop: start=0, step=1, limit=1
            $region240: #{_aux_weight_loss5_fused.1} parent=238 // loop_pre_header
              _
            $region241: #{_aux_weight_loss5_fused.1} parent=238 // loop_header
              %s481 = sphi 0, %s485
              %p482 = scmp.ge.s32.totalorder %s481, 1
              %s486 = sphi %s3, %s3
              %s487 = sphi [#allocation2], [#allocation2]
            $region242: #{_aux_weight_loss5_fused.1} parent=238 // loop_header_branch
              %484 = sbr.rel (%p482) target = $region246
            $region243: #{_aux_weight_loss5_fused.1} parent=238 // loop_body
              %v488 = vld [vmem:[%s486] sm:$0xff]
              %489 = vst [vmem:[%s487] sm:$0xff] %v488
            $region244: #{_aux_weight_loss5_fused.1} parent=238 // loop_footer
              %s485 = sadd.s32 1, %s481
            $region245: #{_aux_weight_loss5_fused.1} parent=238 // loop_footer_branch
              %480 = sbr.rel target = $region241
            $region246: #{_aux_weight_loss5_fused.1} parent=238 // loop_exit
              _
          $region239: #{_aux_weight_loss5_fused.1} parent=223 // pred_fallthru
            _
          // Predicated region
          $region247: #{_aux_weight_loss5_fused.1} parent=223 // pred_check
            _
          $region248: #{_aux_weight_loss5_fused.1} parent=223 // pred_check_branch
            %491 = sbr.rel target = $region250
          $region249: #{_aux_weight_loss5_fused.1} parent=223 // pred_region
            _
          $region250: #{_aux_weight_loss5_fused.1} parent=223 // pred_fallthru
            _
        $region224: #{_aux_weight_loss5_fused.1} parent=15 // pred_fallthru
          _
        // Predicated region
        $region225: #{_aux_weight_loss5_fused.1} parent=15 // pred_check
          _
        $region226: #{_aux_weight_loss5_fused.1} parent=15 // pred_check_branch
          %465 = sbr.rel target = $region228
        $region227: #{_aux_weight_loss5_fused.1} parent=15 // pred_region
          %s467 = ssub.s32 256, 1
          loop: start=0, step=1, limit=1
          $region229: #{_aux_weight_loss5_fused.1} parent=227 // loop_pre_header
            _
          $region230: #{_aux_weight_loss5_fused.1} parent=227 // loop_header
            %s469 = sphi 0, %s473
            %p470 = scmp.ge.s32.totalorder %s469, 1
            %s474 = sphi %s3, %s3
            %s475 = sphi [#allocation2], [#allocation2]
          $region231: #{_aux_weight_loss5_fused.1} parent=227 // loop_header_branch
            %472 = sbr.rel (%p470) target = $region235
          $region232: #{_aux_weight_loss5_fused.1} parent=227 // loop_body
            %v476 = vld [vmem:[%s474] sm:%s467]
            %477 = vst [vmem:[%s475] sm:%s467] %v476
          $region233: #{_aux_weight_loss5_fused.1} parent=227 // loop_footer
            %s473 = sadd.s32 1, %s469
          $region234: #{_aux_weight_loss5_fused.1} parent=227 // loop_footer_branch
            %468 = sbr.rel target = $region230
          $region235: #{_aux_weight_loss5_fused.1} parent=227 // loop_exit
            _
        $region228: #{_aux_weight_loss5_fused.1} parent=15 // pred_fallthru
          _
        // Predicated region
        $region251: #{_aux_weight_loss5_fused.1} parent=15 // pred_check
          _
        $region252: #{_aux_weight_loss5_fused.1} parent=15 // pred_check_branch
          %494 = sbr.rel (0) target = $region254
        $region253: #{_aux_weight_loss5_fused.1} parent=15 // pred_region
          %495 = vsyncadd [#allocation4], 128
        $region254: #{_aux_weight_loss5_fused.1} parent=15 // pred_fallthru
          _
        // Predicated region
        $region255: #{_aux_weight_loss5_fused.1} parent=15 // pred_check
          _
        $region256: #{_aux_weight_loss5_fused.1} parent=15 // pred_check_branch
          %497 = sbr.rel (0) target = $region258
        $region257: #{_aux_weight_loss5_fused.1} parent=15 // pred_region
          // Predicated region
          $region270: #{_aux_weight_loss5_fused.1} parent=257 // pred_check
            _
          $region271: #{_aux_weight_loss5_fused.1} parent=257 // pred_check_branch
            %513 = sbr.rel (0) target = $region273
          $region272: #{_aux_weight_loss5_fused.1} parent=257 // pred_region
            loop: start=0, step=1, limit=1
            $region274: #{_aux_weight_loss5_fused.1} parent=272 // loop_pre_header
              _
            $region275: #{_aux_weight_loss5_fused.1} parent=272 // loop_header
              %s515 = sphi 0, %s519
              %p516 = scmp.ge.s32.totalorder %s515, 1
              %s520 = sphi %s8, %s8
              %s521 = sphi [#allocation3], [#allocation3]
            $region276: #{_aux_weight_loss5_fused.1} parent=272 // loop_header_branch
              %518 = sbr.rel (%p516) target = $region280
            $region277: #{_aux_weight_loss5_fused.1} parent=272 // loop_body
              %v522 = vld [vmem:[%s520] sm:$0xff]
              %523 = vst [vmem:[%s521] sm:$0xff] %v522
            $region278: #{_aux_weight_loss5_fused.1} parent=272 // loop_footer
              %s519 = sadd.s32 1, %s515
            $region279: #{_aux_weight_loss5_fused.1} parent=272 // loop_footer_branch
              %514 = sbr.rel target = $region275
            $region280: #{_aux_weight_loss5_fused.1} parent=272 // loop_exit
              _
          $region273: #{_aux_weight_loss5_fused.1} parent=257 // pred_fallthru
            _
          // Predicated region
          $region281: #{_aux_weight_loss5_fused.1} parent=257 // pred_check
            _
          $region282: #{_aux_weight_loss5_fused.1} parent=257 // pred_check_branch
            %525 = sbr.rel target = $region284
          $region283: #{_aux_weight_loss5_fused.1} parent=257 // pred_region
            _
          $region284: #{_aux_weight_loss5_fused.1} parent=257 // pred_fallthru
            _
        $region258: #{_aux_weight_loss5_fused.1} parent=15 // pred_fallthru
          _
        // Predicated region
        $region259: #{_aux_weight_loss5_fused.1} parent=15 // pred_check
          _
        $region260: #{_aux_weight_loss5_fused.1} parent=15 // pred_check_branch
          %499 = sbr.rel target = $region262
        $region261: #{_aux_weight_loss5_fused.1} parent=15 // pred_region
          %s501 = ssub.s32 256, 1
          loop: start=0, step=1, limit=1
          $region263: #{_aux_weight_loss5_fused.1} parent=261 // loop_pre_header
            _
          $region264: #{_aux_weight_loss5_fused.1} parent=261 // loop_header
            %s503 = sphi 0, %s507
            %p504 = scmp.ge.s32.totalorder %s503, 1
            %s508 = sphi %s8, %s8
            %s509 = sphi [#allocation3], [#allocation3]
          $region265: #{_aux_weight_loss5_fused.1} parent=261 // loop_header_branch
            %506 = sbr.rel (%p504) target = $region269
          $region266: #{_aux_weight_loss5_fused.1} parent=261 // loop_body
            %v510 = vld [vmem:[%s508] sm:%s501]
            %511 = vst [vmem:[%s509] sm:%s501] %v510
          $region267: #{_aux_weight_loss5_fused.1} parent=261 // loop_footer
            %s507 = sadd.s32 1, %s503
          $region268: #{_aux_weight_loss5_fused.1} parent=261 // loop_footer_branch
            %502 = sbr.rel target = $region264
          $region269: #{_aux_weight_loss5_fused.1} parent=261 // loop_exit
            _
        $region262: #{_aux_weight_loss5_fused.1} parent=15 // pred_fallthru
          _
        // Predicated region
        $region285: #{_aux_weight_loss5_fused.1} parent=15 // pred_check
          _
        $region286: #{_aux_weight_loss5_fused.1} parent=15 // pred_check_branch
          %528 = sbr.rel (0) target = $region288
        $region287: #{_aux_weight_loss5_fused.1} parent=15 // pred_region
          %529 = vsyncadd %s98, 128
        $region288: #{_aux_weight_loss5_fused.1} parent=15 // pred_fallthru
          _
        %s530 = sshll.u32 %s133, 4
        %531 = dma.done [#allocation4], %s530
        %s532 = sshll.u32 %s133, 4
        %533 = dma.done %s98, %s532
        %v534 = vld [vmem:[#allocation2] sm:$0xff]
        %v535 = vld [vmem:[#allocation3] sm:$0xff]
        %v536 = vand.u32 2147483647, %v534
        %v537 = vsub.f32 0.0, %v536
        %v538 = vmul.f32 %v537, 1.442695
        %v539 = vpow.pop %v538
        %v540 = vadd.f32 %v539, 1.0
        %v541 = vlog2.pop %v540
        %v542 = vmul.f32 %v541, 0.6931472
        %v543 = vsub.f32 0.0, %v534
        %v544 = vmax.f32 %v543, 0.0
        %v545 = vadd.f32 %v542, %v544
        %546 = vadd.xlane.f32.xlu0 %v535
        %v547 = vpop.xlane.xlu0 %546
        %v548 = vrot.slane %v547, 4
        %v549 = vadd.f32 %v547, %v548
        %v550 = vrot.slane %v549, 2
        %v551 = vadd.f32 %v549, %v550
        %v552 = vrot.slane %v551, 1
        %v553 = vadd.f32 %v551, %v552
        %s554 = vtos %v553
        %v555 = vsub.f32 1.0, %v535
        %v556 = vmul.f32 %v555, %v534
        %v557 = vadd.f32 %v556, %v545
        %558 = vadd.xlane.f32.xlu0 %v557
        %v559 = vpop.xlane.xlu0 %558
        %v560 = vrot.slane %v559, 4
        %v561 = vadd.f32 %v559, %v560
        %v562 = vrot.slane %v561, 2
        %v563 = vadd.f32 %v561, %v562
        %v564 = vrot.slane %v563, 1
        %v565 = vadd.f32 %v563, %v564
        %s566 = vtos %v565
        %v567 = vmul.f32 %v535, %v545
        %568 = vadd.xlane.f32.xlu0 %v567
        %v569 = vpop.xlane.xlu0 %568
        %v570 = vrot.slane %v569, 4
        %v571 = vadd.f32 %v569, %v570
        %v572 = vrot.slane %v571, 2
        %v573 = vadd.f32 %v571, %v572
        %v574 = vrot.slane %v573, 1
        %v575 = vadd.f32 %v573, %v574
        %s576 = vtos %v575
        %s577 = sadd.f32 %s554, 0.0
        %s578 = sadd.f32 %s566, 0.0
        %s579 = sadd.f32 %s576, 0.0
        %vm580 = vcmp.eq.s32.totalorder %v61, 3
        %vm581 = vmand %vm580, %vm185
        %v582 = vstv %s577
        %v583 = vsel %vm581, %v582, 0.0
        %v584 = vadd.f32 %v461, %v583
        %vm585 = vmand %vm580, %vm190
        %v586 = vstv %s578
        %v587 = vsel %vm585, %v586, 0.0
        %v588 = vadd.f32 %v584, %v587
        %vm589 = vmand %vm580, %vm195
        %v590 = vstv %s579
        %v591 = vsel %vm589, %v590, 0.0
        %v592 = vadd.f32 %v588, %v591
        // Predicated region
        $region289: #{_aux_weight_loss5_fused.1} parent=15 // pred_check
          _
        $region290: #{_aux_weight_loss5_fused.1} parent=15 // pred_check_branch
          %594 = sbr.rel (0) target = $region292
        $region291: #{_aux_weight_loss5_fused.1} parent=15 // pred_region
          // Predicated region
          $region304: #{_aux_weight_loss5_fused.1} parent=291 // pred_check
            _
          $region305: #{_aux_weight_loss5_fused.1} parent=291 // pred_check_branch
            %610 = sbr.rel (0) target = $region307
          $region306: #{_aux_weight_loss5_fused.1} parent=291 // pred_region
            loop: start=0, step=1, limit=1
            $region308: #{_aux_weight_loss5_fused.1} parent=306 // loop_pre_header
              _
            $region309: #{_aux_weight_loss5_fused.1} parent=306 // loop_header
              %s612 = sphi 0, %s616
              %p613 = scmp.ge.s32.totalorder %s612, 1
              %s617 = sphi %s4, %s4
              %s618 = sphi [#allocation2], [#allocation2]
            $region310: #{_aux_weight_loss5_fused.1} parent=306 // loop_header_branch
              %615 = sbr.rel (%p613) target = $region314
            $region311: #{_aux_weight_loss5_fused.1} parent=306 // loop_body
              %v619 = vld [vmem:[%s617] sm:$0xff]
              %620 = vst [vmem:[%s618] sm:$0xff] %v619
            $region312: #{_aux_weight_loss5_fused.1} parent=306 // loop_footer
              %s616 = sadd.s32 1, %s612
            $region313: #{_aux_weight_loss5_fused.1} parent=306 // loop_footer_branch
              %611 = sbr.rel target = $region309
            $region314: #{_aux_weight_loss5_fused.1} parent=306 // loop_exit
              _
          $region307: #{_aux_weight_loss5_fused.1} parent=291 // pred_fallthru
            _
          // Predicated region
          $region315: #{_aux_weight_loss5_fused.1} parent=291 // pred_check
            _
          $region316: #{_aux_weight_loss5_fused.1} parent=291 // pred_check_branch
            %622 = sbr.rel target = $region318
          $region317: #{_aux_weight_loss5_fused.1} parent=291 // pred_region
            _
          $region318: #{_aux_weight_loss5_fused.1} parent=291 // pred_fallthru
            _
        $region292: #{_aux_weight_loss5_fused.1} parent=15 // pred_fallthru
          _
        // Predicated region
        $region293: #{_aux_weight_loss5_fused.1} parent=15 // pred_check
          _
        $region294: #{_aux_weight_loss5_fused.1} parent=15 // pred_check_branch
          %596 = sbr.rel target = $region296
        $region295: #{_aux_weight_loss5_fused.1} parent=15 // pred_region
          %s598 = ssub.s32 256, 1
          loop: start=0, step=1, limit=1
          $region297: #{_aux_weight_loss5_fused.1} parent=295 // loop_pre_header
            _
          $region298: #{_aux_weight_loss5_fused.1} parent=295 // loop_header
            %s600 = sphi 0, %s604
            %p601 = scmp.ge.s32.totalorder %s600, 1
            %s605 = sphi %s4, %s4
            %s606 = sphi [#allocation2], [#allocation2]
          $region299: #{_aux_weight_loss5_fused.1} parent=295 // loop_header_branch
            %603 = sbr.rel (%p601) target = $region303
          $region300: #{_aux_weight_loss5_fused.1} parent=295 // loop_body
            %v607 = vld [vmem:[%s605] sm:%s598]
            %608 = vst [vmem:[%s606] sm:%s598] %v607
          $region301: #{_aux_weight_loss5_fused.1} parent=295 // loop_footer
            %s604 = sadd.s32 1, %s600
          $region302: #{_aux_weight_loss5_fused.1} parent=295 // loop_footer_branch
            %599 = sbr.rel target = $region298
          $region303: #{_aux_weight_loss5_fused.1} parent=295 // loop_exit
            _
        $region296: #{_aux_weight_loss5_fused.1} parent=15 // pred_fallthru
          _
        // Predicated region
        $region319: #{_aux_weight_loss5_fused.1} parent=15 // pred_check
          _
        $region320: #{_aux_weight_loss5_fused.1} parent=15 // pred_check_branch
          %625 = sbr.rel (0) target = $region322
        $region321: #{_aux_weight_loss5_fused.1} parent=15 // pred_region
          %626 = vsyncadd [#allocation4], 128
        $region322: #{_aux_weight_loss5_fused.1} parent=15 // pred_fallthru
          _
        // Predicated region
        $region323: #{_aux_weight_loss5_fused.1} parent=15 // pred_check
          _
        $region324: #{_aux_weight_loss5_fused.1} parent=15 // pred_check_branch
          %628 = sbr.rel (0) target = $region326
        $region325: #{_aux_weight_loss5_fused.1} parent=15 // pred_region
          // Predicated region
          $region338: #{_aux_weight_loss5_fused.1} parent=325 // pred_check
            _
          $region339: #{_aux_weight_loss5_fused.1} parent=325 // pred_check_branch
            %644 = sbr.rel (0) target = $region341
          $region340: #{_aux_weight_loss5_fused.1} parent=325 // pred_region
            loop: start=0, step=1, limit=1
            $region342: #{_aux_weight_loss5_fused.1} parent=340 // loop_pre_header
              _
            $region343: #{_aux_weight_loss5_fused.1} parent=340 // loop_header
              %s646 = sphi 0, %s650
              %p647 = scmp.ge.s32.totalorder %s646, 1
              %s651 = sphi %s9, %s9
              %s652 = sphi [#allocation3], [#allocation3]
            $region344: #{_aux_weight_loss5_fused.1} parent=340 // loop_header_branch
              %649 = sbr.rel (%p647) target = $region348
            $region345: #{_aux_weight_loss5_fused.1} parent=340 // loop_body
              %v653 = vld [vmem:[%s651] sm:$0xff]
              %654 = vst [vmem:[%s652] sm:$0xff] %v653
            $region346: #{_aux_weight_loss5_fused.1} parent=340 // loop_footer
              %s650 = sadd.s32 1, %s646
            $region347: #{_aux_weight_loss5_fused.1} parent=340 // loop_footer_branch
              %645 = sbr.rel target = $region343
            $region348: #{_aux_weight_loss5_fused.1} parent=340 // loop_exit
              _
          $region341: #{_aux_weight_loss5_fused.1} parent=325 // pred_fallthru
            _
          // Predicated region
          $region349: #{_aux_weight_loss5_fused.1} parent=325 // pred_check
            _
          $region350: #{_aux_weight_loss5_fused.1} parent=325 // pred_check_branch
            %656 = sbr.rel target = $region352
          $region351: #{_aux_weight_loss5_fused.1} parent=325 // pred_region
            _
          $region352: #{_aux_weight_loss5_fused.1} parent=325 // pred_fallthru
            _
        $region326: #{_aux_weight_loss5_fused.1} parent=15 // pred_fallthru
          _
        // Predicated region
        $region327: #{_aux_weight_loss5_fused.1} parent=15 // pred_check
          _
        $region328: #{_aux_weight_loss5_fused.1} parent=15 // pred_check_branch
          %630 = sbr.rel target = $region330
        $region329: #{_aux_weight_loss5_fused.1} parent=15 // pred_region
          %s632 = ssub.s32 256, 1
          loop: start=0, step=1, limit=1
          $region331: #{_aux_weight_loss5_fused.1} parent=329 // loop_pre_header
            _
          $region332: #{_aux_weight_loss5_fused.1} parent=329 // loop_header
            %s634 = sphi 0, %s638
            %p635 = scmp.ge.s32.totalorder %s634, 1
            %s639 = sphi %s9, %s9
            %s640 = sphi [#allocation3], [#allocation3]
          $region333: #{_aux_weight_loss5_fused.1} parent=329 // loop_header_branch
            %637 = sbr.rel (%p635) target = $region337
          $region334: #{_aux_weight_loss5_fused.1} parent=329 // loop_body
            %v641 = vld [vmem:[%s639] sm:%s632]
            %642 = vst [vmem:[%s640] sm:%s632] %v641
          $region335: #{_aux_weight_loss5_fused.1} parent=329 // loop_footer
            %s638 = sadd.s32 1, %s634
          $region336: #{_aux_weight_loss5_fused.1} parent=329 // loop_footer_branch
            %633 = sbr.rel target = $region332
          $region337: #{_aux_weight_loss5_fused.1} parent=329 // loop_exit
            _
        $region330: #{_aux_weight_loss5_fused.1} parent=15 // pred_fallthru
          _
        // Predicated region
        $region353: #{_aux_weight_loss5_fused.1} parent=15 // pred_check
          _
        $region354: #{_aux_weight_loss5_fused.1} parent=15 // pred_check_branch
          %659 = sbr.rel (0) target = $region356
        $region355: #{_aux_weight_loss5_fused.1} parent=15 // pred_region
          %660 = vsyncadd %s98, 128
        $region356: #{_aux_weight_loss5_fused.1} parent=15 // pred_fallthru
          _
        %s661 = sshll.u32 %s133, 4
        %662 = dma.done [#allocation4], %s661
        %s663 = sshll.u32 %s133, 4
        %664 = dma.done %s98, %s663
        %v665 = vld [vmem:[#allocation2] sm:$0xff]
        %v666 = vld [vmem:[#allocation3] sm:$0xff]
        %v667 = vand.u32 2147483647, %v665
        %v668 = vsub.f32 0.0, %v667
        %v669 = vmul.f32 %v668, 1.442695
        %v670 = vpow.pop %v669
        %v671 = vadd.f32 %v670, 1.0
        %v672 = vlog2.pop %v671
        %v673 = vmul.f32 %v672, 0.6931472
        %v674 = vsub.f32 0.0, %v665
        %v675 = vmax.f32 %v674, 0.0
        %v676 = vadd.f32 %v673, %v675
        %677 = vadd.xlane.f32.xlu0 %v666
        %v678 = vpop.xlane.xlu0 %677
        %v679 = vrot.slane %v678, 4
        %v680 = vadd.f32 %v678, %v679
        %v681 = vrot.slane %v680, 2
        %v682 = vadd.f32 %v680, %v681
        %v683 = vrot.slane %v682, 1
        %v684 = vadd.f32 %v682, %v683
        %s685 = vtos %v684
        %v686 = vsub.f32 1.0, %v666
        %v687 = vmul.f32 %v686, %v665
        %v688 = vadd.f32 %v687, %v676
        %689 = vadd.xlane.f32.xlu0 %v688
        %v690 = vpop.xlane.xlu0 %689
        %v691 = vrot.slane %v690, 4
        %v692 = vadd.f32 %v690, %v691
        %v693 = vrot.slane %v692, 2
        %v694 = vadd.f32 %v692, %v693
        %v695 = vrot.slane %v694, 1
        %v696 = vadd.f32 %v694, %v695
        %s697 = vtos %v696
        %v698 = vmul.f32 %v666, %v676
        %699 = vadd.xlane.f32.xlu0 %v698
        %v700 = vpop.xlane.xlu0 %699
        %v701 = vrot.slane %v700, 4
        %v702 = vadd.f32 %v700, %v701
        %v703 = vrot.slane %v702, 2
        %v704 = vadd.f32 %v702, %v703
        %v705 = vrot.slane %v704, 1
        %v706 = vadd.f32 %v704, %v705
        %s707 = vtos %v706
        %s708 = sadd.f32 %s685, 0.0
        %s709 = sadd.f32 %s697, 0.0
        %s710 = sadd.f32 %s707, 0.0
        %vm711 = vcmp.eq.s32.totalorder %v61, 4
        %vm712 = vmand %vm711, %vm185
        %v713 = vstv %s708
        %v714 = vsel %vm712, %v713, 0.0
        %v715 = vadd.f32 %v592, %v714
        %vm716 = vmand %vm711, %vm190
        %v717 = vstv %s709
        %v718 = vsel %vm716, %v717, 0.0
        %v719 = vadd.f32 %v715, %v718
        %vm720 = vmand %vm711, %vm195
        %v721 = vstv %s710
        %v722 = vsel %vm720, %v721, 0.0
        %v723 = vadd.f32 %v719, %v722
        %724 = vst [vmem:[%s55] sm:$0xff] %v723
      $region16: #{_aux_weight_loss5_fused.1} parent=11 // pred_fallthru
        _
      %p725 = scmp.eq.s32.totalorder %s16, 1
      // Predicated region
      $region357: #{_aux_weight_loss5_fused.1} parent=11 // pred_check
        %p726 = pneg %p725
      $region358: #{_aux_weight_loss5_fused.1} parent=11 // pred_check_branch
        %728 = sbr.rel (%p726) target = $region360
      $region359: #{_aux_weight_loss5_fused.1} parent=11 // pred_region
        %v729 = vlaneseq
        %v730 = vshrl.u32 %v729, 7
        %v731 = vlaneseq
        %v732 = vand.u32 %v731, 127
        %s733 = scalar_lea.vmem %s0, 8
        // Predicated region
        $region361: #{_aux_weight_loss5_fused.1} parent=359 // pred_check
          _
        $region362: #{_aux_weight_loss5_fused.1} parent=359 // pred_check_branch
          %735 = sbr.rel (0) target = $region364
        $region363: #{_aux_weight_loss5_fused.1} parent=359 // pred_region
          // Predicated region
          $region376: #{_aux_weight_loss5_fused.1} parent=363 // pred_check
            _
          $region377: #{_aux_weight_loss5_fused.1} parent=363 // pred_check_branch
            %751 = sbr.rel (0) target = $region379
          $region378: #{_aux_weight_loss5_fused.1} parent=363 // pred_region
            loop: start=0, step=1, limit=1
            $region380: #{_aux_weight_loss5_fused.1} parent=378 // loop_pre_header
              _
            $region381: #{_aux_weight_loss5_fused.1} parent=378 // loop_header
              %s753 = sphi 0, %s757
              %p754 = scmp.ge.s32.totalorder %s753, 1
              %s758 = sphi %s733, %s733
              %s759 = sphi [#allocation2], [#allocation2]
            $region382: #{_aux_weight_loss5_fused.1} parent=378 // loop_header_branch
              %756 = sbr.rel (%p754) target = $region386
            $region383: #{_aux_weight_loss5_fused.1} parent=378 // loop_body
              %v760 = vld [vmem:[%s758] sm:$0xff]
              %761 = vst [vmem:[%s759] sm:$0xff] %v760
            $region384: #{_aux_weight_loss5_fused.1} parent=378 // loop_footer
              %s757 = sadd.s32 1, %s753
            $region385: #{_aux_weight_loss5_fused.1} parent=378 // loop_footer_branch
              %752 = sbr.rel target = $region381
            $region386: #{_aux_weight_loss5_fused.1} parent=378 // loop_exit
              _
          $region379: #{_aux_weight_loss5_fused.1} parent=363 // pred_fallthru
            _
          // Predicated region
          $region387: #{_aux_weight_loss5_fused.1} parent=363 // pred_check
            _
          $region388: #{_aux_weight_loss5_fused.1} parent=363 // pred_check_branch
            %763 = sbr.rel target = $region390
          $region389: #{_aux_weight_loss5_fused.1} parent=363 // pred_region
            _
          $region390: #{_aux_weight_loss5_fused.1} parent=363 // pred_fallthru
            _
        $region364: #{_aux_weight_loss5_fused.1} parent=359 // pred_fallthru
          _
        // Predicated region
        $region365: #{_aux_weight_loss5_fused.1} parent=359 // pred_check
          _
        $region366: #{_aux_weight_loss5_fused.1} parent=359 // pred_check_branch
          %737 = sbr.rel target = $region368
        $region367: #{_aux_weight_loss5_fused.1} parent=359 // pred_region
          %s739 = ssub.s32 256, 1
          loop: start=0, step=1, limit=1
          $region369: #{_aux_weight_loss5_fused.1} parent=367 // loop_pre_header
            _
          $region370: #{_aux_weight_loss5_fused.1} parent=367 // loop_header
            %s741 = sphi 0, %s745
            %p742 = scmp.ge.s32.totalorder %s741, 1
            %s746 = sphi %s733, %s733
            %s747 = sphi [#allocation2], [#allocation2]
          $region371: #{_aux_weight_loss5_fused.1} parent=367 // loop_header_branch
            %744 = sbr.rel (%p742) target = $region375
          $region372: #{_aux_weight_loss5_fused.1} parent=367 // loop_body
            %v748 = vld [vmem:[%s746] sm:%s739]
            %749 = vst [vmem:[%s747] sm:%s739] %v748
          $region373: #{_aux_weight_loss5_fused.1} parent=367 // loop_footer
            %s745 = sadd.s32 1, %s741
          $region374: #{_aux_weight_loss5_fused.1} parent=367 // loop_footer_branch
            %740 = sbr.rel target = $region370
          $region375: #{_aux_weight_loss5_fused.1} parent=367 // loop_exit
            _
        $region368: #{_aux_weight_loss5_fused.1} parent=359 // pred_fallthru
          _
        // Predicated region
        $region391: #{_aux_weight_loss5_fused.1} parent=359 // pred_check
          _
        $region392: #{_aux_weight_loss5_fused.1} parent=359 // pred_check_branch
          %766 = sbr.rel (0) target = $region394
        $region393: #{_aux_weight_loss5_fused.1} parent=359 // pred_region
          %767 = vsyncadd [#allocation4], 128
        $region394: #{_aux_weight_loss5_fused.1} parent=359 // pred_fallthru
          _
        %s768 = scalar_lea.vmem %s5, 8
        %s769 = scalar_lea.sflag [#allocation4], 2
        // Predicated region
        $region395: #{_aux_weight_loss5_fused.1} parent=359 // pred_check
          _
        $region396: #{_aux_weight_loss5_fused.1} parent=359 // pred_check_branch
          %771 = sbr.rel (0) target = $region398
        $region397: #{_aux_weight_loss5_fused.1} parent=359 // pred_region
          // Predicated region
          $region410: #{_aux_weight_loss5_fused.1} parent=397 // pred_check
            _
          $region411: #{_aux_weight_loss5_fused.1} parent=397 // pred_check_branch
            %787 = sbr.rel (0) target = $region413
          $region412: #{_aux_weight_loss5_fused.1} parent=397 // pred_region
            loop: start=0, step=1, limit=1
            $region414: #{_aux_weight_loss5_fused.1} parent=412 // loop_pre_header
              _
            $region415: #{_aux_weight_loss5_fused.1} parent=412 // loop_header
              %s789 = sphi 0, %s793
              %p790 = scmp.ge.s32.totalorder %s789, 1
              %s794 = sphi %s768, %s768
              %s795 = sphi [#allocation3], [#allocation3]
            $region416: #{_aux_weight_loss5_fused.1} parent=412 // loop_header_branch
              %792 = sbr.rel (%p790) target = $region420
            $region417: #{_aux_weight_loss5_fused.1} parent=412 // loop_body
              %v796 = vld [vmem:[%s794] sm:$0xff]
              %797 = vst [vmem:[%s795] sm:$0xff] %v796
            $region418: #{_aux_weight_loss5_fused.1} parent=412 // loop_footer
              %s793 = sadd.s32 1, %s789
            $region419: #{_aux_weight_loss5_fused.1} parent=412 // loop_footer_branch
              %788 = sbr.rel target = $region415
            $region420: #{_aux_weight_loss5_fused.1} parent=412 // loop_exit
              _
          $region413: #{_aux_weight_loss5_fused.1} parent=397 // pred_fallthru
            _
          // Predicated region
          $region421: #{_aux_weight_loss5_fused.1} parent=397 // pred_check
            _
          $region422: #{_aux_weight_loss5_fused.1} parent=397 // pred_check_branch
            %799 = sbr.rel target = $region424
          $region423: #{_aux_weight_loss5_fused.1} parent=397 // pred_region
            _
          $region424: #{_aux_weight_loss5_fused.1} parent=397 // pred_fallthru
            _
        $region398: #{_aux_weight_loss5_fused.1} parent=359 // pred_fallthru
          _
        // Predicated region
        $region399: #{_aux_weight_loss5_fused.1} parent=359 // pred_check
          _
        $region400: #{_aux_weight_loss5_fused.1} parent=359 // pred_check_branch
          %773 = sbr.rel target = $region402
        $region401: #{_aux_weight_loss5_fused.1} parent=359 // pred_region
          %s775 = ssub.s32 256, 1
          loop: start=0, step=1, limit=1
          $region403: #{_aux_weight_loss5_fused.1} parent=401 // loop_pre_header
            _
          $region404: #{_aux_weight_loss5_fused.1} parent=401 // loop_header
            %s777 = sphi 0, %s781
            %p778 = scmp.ge.s32.totalorder %s777, 1
            %s782 = sphi %s768, %s768
            %s783 = sphi [#allocation3], [#allocation3]
          $region405: #{_aux_weight_loss5_fused.1} parent=401 // loop_header_branch
            %780 = sbr.rel (%p778) target = $region409
          $region406: #{_aux_weight_loss5_fused.1} parent=401 // loop_body
            %v784 = vld [vmem:[%s782] sm:%s775]
            %785 = vst [vmem:[%s783] sm:%s775] %v784
          $region407: #{_aux_weight_loss5_fused.1} parent=401 // loop_footer
            %s781 = sadd.s32 1, %s777
          $region408: #{_aux_weight_loss5_fused.1} parent=401 // loop_footer_branch
            %776 = sbr.rel target = $region404
          $region409: #{_aux_weight_loss5_fused.1} parent=401 // loop_exit
            _
        $region402: #{_aux_weight_loss5_fused.1} parent=359 // pred_fallthru
          _
        // Predicated region
        $region425: #{_aux_weight_loss5_fused.1} parent=359 // pred_check
          _
        $region426: #{_aux_weight_loss5_fused.1} parent=359 // pred_check_branch
          %802 = sbr.rel (0) target = $region428
        $region427: #{_aux_weight_loss5_fused.1} parent=359 // pred_region
          %803 = vsyncadd %s769, 128
        $region428: #{_aux_weight_loss5_fused.1} parent=359 // pred_fallthru
          _
        %s804 = smul.u32 8, 1
        %s805 = sshll.u32 %s804, 4
        %806 = dma.done [#allocation4], %s805
        %s807 = sshll.u32 %s804, 4
        %808 = dma.done %s769, %s807
        %v809 = vld [vmem:[#allocation2] sm:$0xff]
        %v810 = vld [vmem:[#allocation3] sm:$0xff]
        %v811 = vand.u32 2147483647, %v809
        %v812 = vsub.f32 0.0, %v811
        %v813 = vmul.f32 %v812, 1.442695
        %v814 = vpow.pop %v813
        %v815 = vadd.f32 %v814, 1.0
        %v816 = vlog2.pop %v815
        %v817 = vmul.f32 %v816, 0.6931472
        %v818 = vsub.f32 0.0, %v809
        %v819 = vmax.f32 %v818, 0.0
        %v820 = vadd.f32 %v817, %v819
        %821 = vadd.xlane.f32.xlu0 %v810
        %v822 = vpop.xlane.xlu0 %821
        %v823 = vrot.slane %v822, 4
        %v824 = vadd.f32 %v822, %v823
        %v825 = vrot.slane %v824, 2
        %v826 = vadd.f32 %v824, %v825
        %v827 = vrot.slane %v826, 1
        %v828 = vadd.f32 %v826, %v827
        %s829 = vtos %v828
        %v830 = vsub.f32 1.0, %v810
        %v831 = vmul.f32 %v830, %v809
        %v832 = vadd.f32 %v831, %v820
        %833 = vadd.xlane.f32.xlu0 %v832
        %v834 = vpop.xlane.xlu0 %833
        %v835 = vrot.slane %v834, 4
        %v836 = vadd.f32 %v834, %v835
        %v837 = vrot.slane %v836, 2
        %v838 = vadd.f32 %v836, %v837
        %v839 = vrot.slane %v838, 1
        %v840 = vadd.f32 %v838, %v839
        %s841 = vtos %v840
        %v842 = vmul.f32 %v810, %v820
        %843 = vadd.xlane.f32.xlu0 %v842
        %v844 = vpop.xlane.xlu0 %843
        %v845 = vrot.slane %v844, 4
        %v846 = vadd.f32 %v844, %v845
        %v847 = vrot.slane %v846, 2
        %v848 = vadd.f32 %v846, %v847
        %v849 = vrot.slane %v848, 1
        %v850 = vadd.f32 %v848, %v849
        %s851 = vtos %v850
        %s852 = sadd.f32 %s829, 0.0
        %s853 = sadd.f32 %s841, 0.0
        %s854 = sadd.f32 %s851, 0.0
        %vm855 = vcmp.eq.s32.totalorder %v730, 0
        %vm856 = vcmp.eq.s32.totalorder %v732, 0
        %vm857 = vmand %vm855, %vm856
        %v858 = vstv %s852
        %v859 = vsel %vm857, %v858, 0.0
        %v860 = vadd.f32 %v859, 0.0
        %vm861 = vcmp.eq.s32.totalorder %v732, 1
        %vm862 = vmand %vm855, %vm861
        %v863 = vstv %s853
        %v864 = vsel %vm862, %v863, 0.0
        %v865 = vadd.f32 %v860, %v864
        %vm866 = vcmp.eq.s32.totalorder %v732, 2
        %vm867 = vmand %vm855, %vm866
        %v868 = vstv %s854
        %v869 = vsel %vm867, %v868, 0.0
        %v870 = vadd.f32 %v865, %v869
        %s871 = scalar_lea.vmem %s1, 8
        // Predicated region
        $region429: #{_aux_weight_loss5_fused.1} parent=359 // pred_check
          _
        $region430: #{_aux_weight_loss5_fused.1} parent=359 // pred_check_branch
          %873 = sbr.rel (0) target = $region432
        $region431: #{_aux_weight_loss5_fused.1} parent=359 // pred_region
          // Predicated region
          $region444: #{_aux_weight_loss5_fused.1} parent=431 // pred_check
            _
          $region445: #{_aux_weight_loss5_fused.1} parent=431 // pred_check_branch
            %889 = sbr.rel (0) target = $region447
          $region446: #{_aux_weight_loss5_fused.1} parent=431 // pred_region
            loop: start=0, step=1, limit=1
            $region448: #{_aux_weight_loss5_fused.1} parent=446 // loop_pre_header
              _
            $region449: #{_aux_weight_loss5_fused.1} parent=446 // loop_header
              %s891 = sphi 0, %s895
              %p892 = scmp.ge.s32.totalorder %s891, 1
              %s896 = sphi %s871, %s871
              %s897 = sphi [#allocation2], [#allocation2]
            $region450: #{_aux_weight_loss5_fused.1} parent=446 // loop_header_branch
              %894 = sbr.rel (%p892) target = $region454
            $region451: #{_aux_weight_loss5_fused.1} parent=446 // loop_body
              %v898 = vld [vmem:[%s896] sm:$0xff]
              %899 = vst [vmem:[%s897] sm:$0xff] %v898
            $region452: #{_aux_weight_loss5_fused.1} parent=446 // loop_footer
              %s895 = sadd.s32 1, %s891
            $region453: #{_aux_weight_loss5_fused.1} parent=446 // loop_footer_branch
              %890 = sbr.rel target = $region449
            $region454: #{_aux_weight_loss5_fused.1} parent=446 // loop_exit
              _
          $region447: #{_aux_weight_loss5_fused.1} parent=431 // pred_fallthru
            _
          // Predicated region
          $region455: #{_aux_weight_loss5_fused.1} parent=431 // pred_check
            _
          $region456: #{_aux_weight_loss5_fused.1} parent=431 // pred_check_branch
            %901 = sbr.rel target = $region458
          $region457: #{_aux_weight_loss5_fused.1} parent=431 // pred_region
            _
          $region458: #{_aux_weight_loss5_fused.1} parent=431 // pred_fallthru
            _
        $region432: #{_aux_weight_loss5_fused.1} parent=359 // pred_fallthru
          _
        // Predicated region
        $region433: #{_aux_weight_loss5_fused.1} parent=359 // pred_check
          _
        $region434: #{_aux_weight_loss5_fused.1} parent=359 // pred_check_branch
          %875 = sbr.rel target = $region436
        $region435: #{_aux_weight_loss5_fused.1} parent=359 // pred_region
          %s877 = ssub.s32 256, 1
          loop: start=0, step=1, limit=1
          $region437: #{_aux_weight_loss5_fused.1} parent=435 // loop_pre_header
            _
          $region438: #{_aux_weight_loss5_fused.1} parent=435 // loop_header
            %s879 = sphi 0, %s883
            %p880 = scmp.ge.s32.totalorder %s879, 1
            %s884 = sphi %s871, %s871
            %s885 = sphi [#allocation2], [#allocation2]
          $region439: #{_aux_weight_loss5_fused.1} parent=435 // loop_header_branch
            %882 = sbr.rel (%p880) target = $region443
          $region440: #{_aux_weight_loss5_fused.1} parent=435 // loop_body
            %v886 = vld [vmem:[%s884] sm:%s877]
            %887 = vst [vmem:[%s885] sm:%s877] %v886
          $region441: #{_aux_weight_loss5_fused.1} parent=435 // loop_footer
            %s883 = sadd.s32 1, %s879
          $region442: #{_aux_weight_loss5_fused.1} parent=435 // loop_footer_branch
            %878 = sbr.rel target = $region438
          $region443: #{_aux_weight_loss5_fused.1} parent=435 // loop_exit
            _
        $region436: #{_aux_weight_loss5_fused.1} parent=359 // pred_fallthru
          _
        // Predicated region
        $region459: #{_aux_weight_loss5_fused.1} parent=359 // pred_check
          _
        $region460: #{_aux_weight_loss5_fused.1} parent=359 // pred_check_branch
          %904 = sbr.rel (0) target = $region462
        $region461: #{_aux_weight_loss5_fused.1} parent=359 // pred_region
          %905 = vsyncadd [#allocation4], 128
        $region462: #{_aux_weight_loss5_fused.1} parent=359 // pred_fallthru
          _
        %s906 = scalar_lea.vmem %s6, 8
        // Predicated region
        $region463: #{_aux_weight_loss5_fused.1} parent=359 // pred_check
          _
        $region464: #{_aux_weight_loss5_fused.1} parent=359 // pred_check_branch
          %908 = sbr.rel (0) target = $region466
        $region465: #{_aux_weight_loss5_fused.1} parent=359 // pred_region
          // Predicated region
          $region478: #{_aux_weight_loss5_fused.1} parent=465 // pred_check
            _
          $region479: #{_aux_weight_loss5_fused.1} parent=465 // pred_check_branch
            %924 = sbr.rel (0) target = $region481
          $region480: #{_aux_weight_loss5_fused.1} parent=465 // pred_region
            loop: start=0, step=1, limit=1
            $region482: #{_aux_weight_loss5_fused.1} parent=480 // loop_pre_header
              _
            $region483: #{_aux_weight_loss5_fused.1} parent=480 // loop_header
              %s926 = sphi 0, %s930
              %p927 = scmp.ge.s32.totalorder %s926, 1
              %s931 = sphi %s906, %s906
              %s932 = sphi [#allocation3], [#allocation3]
            $region484: #{_aux_weight_loss5_fused.1} parent=480 // loop_header_branch
              %929 = sbr.rel (%p927) target = $region488
            $region485: #{_aux_weight_loss5_fused.1} parent=480 // loop_body
              %v933 = vld [vmem:[%s931] sm:$0xff]
              %934 = vst [vmem:[%s932] sm:$0xff] %v933
            $region486: #{_aux_weight_loss5_fused.1} parent=480 // loop_footer
              %s930 = sadd.s32 1, %s926
            $region487: #{_aux_weight_loss5_fused.1} parent=480 // loop_footer_branch
              %925 = sbr.rel target = $region483
            $region488: #{_aux_weight_loss5_fused.1} parent=480 // loop_exit
              _
          $region481: #{_aux_weight_loss5_fused.1} parent=465 // pred_fallthru
            _
          // Predicated region
          $region489: #{_aux_weight_loss5_fused.1} parent=465 // pred_check
            _
          $region490: #{_aux_weight_loss5_fused.1} parent=465 // pred_check_branch
            %936 = sbr.rel target = $region492
          $region491: #{_aux_weight_loss5_fused.1} parent=465 // pred_region
            _
          $region492: #{_aux_weight_loss5_fused.1} parent=465 // pred_fallthru
            _
        $region466: #{_aux_weight_loss5_fused.1} parent=359 // pred_fallthru
          _
        // Predicated region
        $region467: #{_aux_weight_loss5_fused.1} parent=359 // pred_check
          _
        $region468: #{_aux_weight_loss5_fused.1} parent=359 // pred_check_branch
          %910 = sbr.rel target = $region470
        $region469: #{_aux_weight_loss5_fused.1} parent=359 // pred_region
          %s912 = ssub.s32 256, 1
          loop: start=0, step=1, limit=1
          $region471: #{_aux_weight_loss5_fused.1} parent=469 // loop_pre_header
            _
          $region472: #{_aux_weight_loss5_fused.1} parent=469 // loop_header
            %s914 = sphi 0, %s918
            %p915 = scmp.ge.s32.totalorder %s914, 1
            %s919 = sphi %s906, %s906
            %s920 = sphi [#allocation3], [#allocation3]
          $region473: #{_aux_weight_loss5_fused.1} parent=469 // loop_header_branch
            %917 = sbr.rel (%p915) target = $region477
          $region474: #{_aux_weight_loss5_fused.1} parent=469 // loop_body
            %v921 = vld [vmem:[%s919] sm:%s912]
            %922 = vst [vmem:[%s920] sm:%s912] %v921
          $region475: #{_aux_weight_loss5_fused.1} parent=469 // loop_footer
            %s918 = sadd.s32 1, %s914
          $region476: #{_aux_weight_loss5_fused.1} parent=469 // loop_footer_branch
            %913 = sbr.rel target = $region472
          $region477: #{_aux_weight_loss5_fused.1} parent=469 // loop_exit
            _
        $region470: #{_aux_weight_loss5_fused.1} parent=359 // pred_fallthru
          _
        // Predicated region
        $region493: #{_aux_weight_loss5_fused.1} parent=359 // pred_check
          _
        $region494: #{_aux_weight_loss5_fused.1} parent=359 // pred_check_branch
          %939 = sbr.rel (0) target = $region496
        $region495: #{_aux_weight_loss5_fused.1} parent=359 // pred_region
          %940 = vsyncadd %s769, 128
        $region496: #{_aux_weight_loss5_fused.1} parent=359 // pred_fallthru
          _
        %s941 = sshll.u32 %s804, 4
        %942 = dma.done [#allocation4], %s941
        %s943 = sshll.u32 %s804, 4
        %944 = dma.done %s769, %s943
        %v945 = vld [vmem:[#allocation2] sm:$0xff]
        %v946 = vld [vmem:[#allocation3] sm:$0xff]
        %v947 = vand.u32 2147483647, %v945
        %v948 = vsub.f32 0.0, %v947
        %v949 = vmul.f32 %v948, 1.442695
        %v950 = vpow.pop %v949
        %v951 = vadd.f32 %v950, 1.0
        %v952 = vlog2.pop %v951
        %v953 = vmul.f32 %v952, 0.6931472
        %v954 = vsub.f32 0.0, %v945
        %v955 = vmax.f32 %v954, 0.0
        %v956 = vadd.f32 %v953, %v955
        %957 = vadd.xlane.f32.xlu0 %v946
        %v958 = vpop.xlane.xlu0 %957
        %v959 = vrot.slane %v958, 4
        %v960 = vadd.f32 %v958, %v959
        %v961 = vrot.slane %v960, 2
        %v962 = vadd.f32 %v960, %v961
        %v963 = vrot.slane %v962, 1
        %v964 = vadd.f32 %v962, %v963
        %s965 = vtos %v964
        %v966 = vsub.f32 1.0, %v946
        %v967 = vmul.f32 %v966, %v945
        %v968 = vadd.f32 %v967, %v956
        %969 = vadd.xlane.f32.xlu0 %v968
        %v970 = vpop.xlane.xlu0 %969
        %v971 = vrot.slane %v970, 4
        %v972 = vadd.f32 %v970, %v971
        %v973 = vrot.slane %v972, 2
        %v974 = vadd.f32 %v972, %v973
        %v975 = vrot.slane %v974, 1
        %v976 = vadd.f32 %v974, %v975
        %s977 = vtos %v976
        %v978 = vmul.f32 %v946, %v956
        %979 = vadd.xlane.f32.xlu0 %v978
        %v980 = vpop.xlane.xlu0 %979
        %v981 = vrot.slane %v980, 4
        %v982 = vadd.f32 %v980, %v981
        %v983 = vrot.slane %v982, 2
        %v984 = vadd.f32 %v982, %v983
        %v985 = vrot.slane %v984, 1
        %v986 = vadd.f32 %v984, %v985
        %s987 = vtos %v986
        %s988 = sadd.f32 %s965, 0.0
        %s989 = sadd.f32 %s977, 0.0
        %s990 = sadd.f32 %s987, 0.0
        %vm991 = vcmp.eq.s32.totalorder %v730, 1
        %vm992 = vmand %vm991, %vm856
        %v993 = vstv %s988
        %v994 = vsel %vm992, %v993, 0.0
        %v995 = vadd.f32 %v870, %v994
        %vm996 = vmand %vm991, %vm861
        %v997 = vstv %s989
        %v998 = vsel %vm996, %v997, 0.0
        %v999 = vadd.f32 %v995, %v998
        %vm1000 = vmand %vm991, %vm866
        %v1001 = vstv %s990
        %v1002 = vsel %vm1000, %v1001, 0.0
        %v1003 = vadd.f32 %v999, %v1002
        %1004 = vst [vmem:[%s55] sm:$0xff] %v1003
      $region360: #{_aux_weight_loss5_fused.1} parent=11 // pred_fallthru
        _
      %p1005 = scmp.lt.s32.totalorder %s16, 1
      %s1006 = scalar_select %p1005, %s16, 1
      %s1007 = smul.addr %s1006, 8
      %s1008 = scalar_lea.vmem %s10, %s1007
      // Predicated region
      $region497: #{_aux_weight_loss5_fused.1} parent=11 // pred_check
        %p1009 = pneg %p31
      $region498: #{_aux_weight_loss5_fused.1} parent=11 // pred_check_branch
        %1011 = sbr.rel (%p1009) target = $region500
      $region499: #{_aux_weight_loss5_fused.1} parent=11 // pred_region
        _
      $region500: #{_aux_weight_loss5_fused.1} parent=11 // pred_fallthru
        _
    $region12: #{_aux_weight_loss5_fused.1} parent=5 // pred_fallthru
      _
    %p1012 = scmp.le.s32.totalorder 1, %s16
    // Predicated region
    $region501: #{_aux_weight_loss5_fused.1} parent=5 // pred_check
      %p1013 = pneg %p1012
    $region502: #{_aux_weight_loss5_fused.1} parent=5 // pred_check_branch
      %1015 = sbr.rel (%p1013) target = $region504
    $region503: #{_aux_weight_loss5_fused.1} parent=5 // pred_region
      %s1016 = ssub.s32 %s16, 1
      // Predicated region
      $region505: #{_aux_weight_loss5_fused.1} parent=503 // pred_check
        %p1017 = pneg %p37
      $region506: #{_aux_weight_loss5_fused.1} parent=503 // pred_check_branch
        %1019 = sbr.rel (%p1017) target = $region508
      $region507: #{_aux_weight_loss5_fused.1} parent=503 // pred_region
        %p1020 = scmp.lt.s32.totalorder %s21, 1
        %s1021 = scalar_select %p1020, %s21, 1
        %s1022 = smul.addr %s1021, 8
        %s1023 = scalar_lea.vmem %s10, %s1022
      $region508: #{_aux_weight_loss5_fused.1} parent=503 // pred_fallthru
        _
    $region504: #{_aux_weight_loss5_fused.1} parent=5 // pred_fallthru
      _
  $region6: #{_aux_weight_loss5_fused.1} parent=0 // loop_footer
    %s20 = sadd.s32 1, %s16
  $region7: #{_aux_weight_loss5_fused.1} parent=0 // loop_footer_branch
    %15 = sbr.rel target = $region3
  $region8: #{_aux_weight_loss5_fused.1} parent=0 // loop_exit
    _
  %1024 = vsyncmov [#allocation4]
  %s1025 = vpop.sfrf %1024
  %p1026 = scmp.eq.s32.totalorder %s1025, 0
  %p1027 = pneg %p1026
  %1029 = shalt.err (%p1027)
  %s1030 = scalar_lea.sflag [#allocation4], 1
  %1031 = vsyncmov %s1030
  %s1032 = vpop.sfrf %1031
  %p1033 = scmp.eq.s32.totalorder %s1032, 0
  %p1034 = pneg %p1033
  %1036 = shalt.err (%p1034)
  %s1037 = scalar_lea.sflag [#allocation4], 2
  %1038 = vsyncmov %s1037
  %s1039 = vpop.sfrf %1038
  %p1040 = scmp.eq.s32.totalorder %s1039, 0
  %p1041 = pneg %p1040
  %1043 = shalt.err (%p1041)
  %s1044 = scalar_lea.sflag [#allocation4], 3
  %1045 = vsyncmov %s1044
  %s1046 = vpop.sfrf %1045
  %p1047 = scmp.eq.s32.totalorder %s1046, 0
  %p1048 = pneg %p1047
  %1050 = shalt.err (%p1048)

</llo_original>
